<compile_context>
chip_gen: v6e
topology: v6e:2x2x1
jax: 0.10.0
libtpu: 0.0.40
codegen_flags: <defaults>
</compile_context>

<pallas_src>
import math

import jax
import jax.numpy as jnp
from jax.experimental import pallas as pl
from jax.experimental.pallas import tpu as pltpu

# ---- model hyper-parameters (synthetic, small) --------------------------------------
NTOKEN = 50
D_MODEL = 32
NHEAD = 4
D_HID = 64
NLAYERS = 2
LN_EPS = 1e-5

_WEIGHT_KEYS = ("wqkv", "bqkv", "wo", "bo", "w1", "b1", "w2", "b2",
                "g1", "be1", "g2", "be2")


# ---- fused kernel ---------------------------------------------------------------------
def fused_transformer_kernel(emb_ref, pe_ref,
                             wqkv_ref, bqkv_ref, wo_ref, bo_ref,
                             w1_ref, b1_ref, w2_ref, b2_ref,
                             g1_ref, be1_ref, g2_ref, be2_ref,
                             o_ref):
    """Whole forward for one batch element, fully VMEM-resident.

    emb_ref: [1, S, D] (sqrt(d_model) already folded into the embedding table)
    pe_ref : [S, D]
    weights: stacked over layers on the leading axis, pre-transposed for x @ W,
             matmul weights pre-cast to bf16; biases / LayerNorm params in f32.
    o_ref  : [1, 1, D]  (max over the sequence axis)
    """
    S, D = pe_ref.shape
    H = NHEAD
    dh = D // H

    # embedding + positional encoding, 2D [S, D] activation layout throughout.
    x = emb_ref[0] + pe_ref[...]

    def layer_norm(z, g, b):
        mu = jnp.mean(z, axis=-1, keepdims=True)
        var = jnp.mean((z - mu) ** 2, axis=-1, keepdims=True)   # biased var (PyTorch LN)
        return (z - mu) * jax.lax.rsqrt(var + LN_EPS) * g + b

    for li in range(NLAYERS):                 # static unroll: NLAYERS is compile-time
        # ---- self-attention --------------------------------------------------------
        # fused QKV projection; 1/sqrt(dh) is pre-folded into the Q weights/bias.
        qkv = jnp.dot(x.astype(jnp.bfloat16), wqkv_ref[li],
                      preferred_element_type=jnp.float32) + bqkv_ref[li]       # [S, 3D]
        q = jnp.swapaxes(qkv[:, :D].reshape(S, H, dh), 0, 1)                   # [H, S, dh]
        k = jnp.swapaxes(qkv[:, D:2 * D].reshape(S, H, dh), 0, 1)              # [H, S, dh]
        v = jnp.swapaxes(qkv[:, 2 * D:].reshape(S, H, dh), 0, 1)               # [H, S, dh]

        # batched over heads: single einsum per contraction (no per-head loop / concat)
        s = jnp.einsum('hqd,hkd->hqk', q, k,
                       preferred_element_type=jnp.float32)                     # [H, S, S]
        s = s - jnp.max(s, axis=-1, keepdims=True)
        p = jnp.exp(s)
        p = p * pl.reciprocal(jnp.sum(p, axis=-1, keepdims=True), approx=True)
        ctx = jnp.einsum('hqk,hkd->hqd',
                         p.astype(jnp.bfloat16), v.astype(jnp.bfloat16),
                         preferred_element_type=jnp.float32)                   # [H, S, dh]
        attn = jnp.swapaxes(ctx, 0, 1).reshape(S, D)                           # [S, D]

        attn_out = jnp.dot(attn.astype(jnp.bfloat16), wo_ref[li],
                           preferred_element_type=jnp.float32) + bo_ref[li]

        # residual + norm1
        x = layer_norm(x + attn_out, g1_ref[li], be1_ref[li])

        # ---- feed-forward (ReLU), residual + norm2 -----------------------------------
        h1 = jnp.maximum(
            jnp.dot(x.astype(jnp.bfloat16), w1_ref[li],
                    preferred_element_type=jnp.float32) + b1_ref[li], 0.0)     # [S, d_hid]
        ff = jnp.dot(h1.astype(jnp.bfloat16), w2_ref[li],
                     preferred_element_type=jnp.float32) + b2_ref[li]          # [S, D]
        x = layer_norm(x + ff, g2_ref[li], be2_ref[li])

    # max-pool over the sequence axis (== PyTorch lang_feat.max(0)[0] on [S, B, D])
    o_ref[...] = jnp.max(x, axis=0, keepdims=True).reshape(1, 1, D)


# ---- parameter construction (deterministic, synthetic) -------------------------------
def make_params(key, max_seq_len):
    keys = jax.random.split(key, 2 + NLAYERS)

    embedding = 0.02 * jax.random.normal(keys[0], (NTOKEN, D_MODEL), jnp.float32)
    emb_scaled = embedding * math.sqrt(D_MODEL)        # fold * sqrt(d_model) into table

    pos = jnp.arange(max_seq_len, dtype=jnp.float32)[:, None]
    div = jnp.exp(jnp.arange(0, D_MODEL, 2, dtype=jnp.float32) *
                  (-math.log(10000.0) / D_MODEL))
    pe = jnp.zeros((max_seq_len, D_MODEL), jnp.float32)
    pe = pe.at[:, 0::2].set(jnp.sin(pos * div))
    pe = pe.at[:, 1::2].set(jnp.cos(pos * div))

    attn_scale = 1.0 / math.sqrt(D_MODEL // NHEAD)

    stacks = {k: [] for k in _WEIGHT_KEYS}
    for li in range(NLAYERS):
        lk = jax.random.split(keys[2 + li], 8)
        wqkv = 0.05 * jax.random.normal(lk[0], (3 * D_MODEL, D_MODEL), jnp.float32)
        bqkv = 0.01 * jax.random.normal(lk[1], (3 * D_MODEL,), jnp.float32)
        wo = 0.05 * jax.random.normal(lk[2], (D_MODEL, D_MODEL), jnp.float32)
        bo = 0.01 * jax.random.normal(lk[3], (D_MODEL,), jnp.float32)
        w1 = 0.05 * jax.random.normal(lk[4], (D_HID, D_MODEL), jnp.float32)
        b1 = 0.01 * jax.random.normal(lk[5], (D_HID,), jnp.float32)
        w2 = 0.05 * jax.random.normal(lk[6], (D_MODEL, D_HID), jnp.float32)
        b2 = 0.01 * jax.random.normal(lk[7], (D_MODEL,), jnp.float32)

        # fold the 1/sqrt(dh) attention scale into the Q projection (weight AND bias)
        wqkv = wqkv.at[:D_MODEL].multiply(attn_scale)
        bqkv = bqkv.at[:D_MODEL].multiply(attn_scale)

        # pre-transpose so the kernel does plain x @ W; pre-cast MXU weights to bf16
        stacks["wqkv"].append(wqkv.T.astype(jnp.bfloat16))
        stacks["bqkv"].append(bqkv.reshape(1, -1))
        stacks["wo"].append(wo.T.astype(jnp.bfloat16))
        stacks["bo"].append(bo.reshape(1, -1))
        stacks["w1"].append(w1.T.astype(jnp.bfloat16))
        stacks["b1"].append(b1.reshape(1, -1))
        stacks["w2"].append(w2.T.astype(jnp.bfloat16))
        stacks["b2"].append(b2.reshape(1, -1))
        stacks["g1"].append(jnp.ones((1, D_MODEL), jnp.float32))
        stacks["be1"].append(jnp.zeros((1, D_MODEL), jnp.float32))
        stacks["g2"].append(jnp.ones((1, D_MODEL), jnp.float32))
        stacks["be2"].append(jnp.zeros((1, D_MODEL), jnp.float32))

    params = {k: jnp.stack(v) for k, v in stacks.items()}   # leading axis = layer index
    params["emb_scaled"] = emb_scaled
    params["pe"] = pe
    return params


# ---- forward wrapper ------------------------------------------------------------------
def transformer_model_feature(tokens, params):
    B, S = tokens.shape
    # glue: embedding gather (table lookup) stays in plain JAX
    emb = jnp.take(params["emb_scaled"], tokens, axis=0)     # [B, S, D] f32
    pe = params["pe"][:S]                                    # [S, D]    f32

    weight_args = [params[k] for k in _WEIGHT_KEYS]

    in_specs = (
        [pl.BlockSpec((1, S, D_MODEL), lambda b: (b, 0, 0)),     # per-batch activation
         pl.BlockSpec((S, D_MODEL), lambda b: (0, 0))]           # PE, replicated
        + [pl.BlockSpec(w.shape, lambda b: (0, 0, 0))            # weights, replicated
           for w in weight_args]
    )

    out = pl.pallas_call(
        fused_transformer_kernel,
        out_shape=jax.ShapeDtypeStruct((B, 1, D_MODEL), jnp.float32),
        grid=(B,),
        in_specs=in_specs,
        out_specs=pl.BlockSpec((1, 1, D_MODEL), lambda b: (b, 0, 0)),
        compiler_params=pltpu.CompilerParams(
            dimension_semantics=("parallel",)),     # shards batch across v7x's 2 TCs
    )(emb, pe, *weight_args)

    return out.reshape(B, D_MODEL)


# ---- main ------------------------------------------------------------------------------
if __name__ == "__main__":
    key = jax.random.PRNGKey(0)
    k_tok, k_par = jax.random.split(key)

    B, S = 2, 8
    tokens = jax.random.randint(k_tok, (B, S), 0, NTOKEN, dtype=jnp.int32)
    params = make_params(k_par, max_seq_len=64)

    fwd = jax.jit(transformer_model_feature)

    # TODO(synk): dropout inside TransformerEncoderLayer is omitted (eval-mode identity).
    feat = jax.block_until_ready(fwd(tokens, params))
    assert feat.shape == (B, D_MODEL) and feat.dtype == jnp.float32
    print("KERNEL_OK")
</pallas_src>

<mosaic_0001>
module attributes {stable_mosaic.version = 11 : i64} {
  func.func @fused_transformer_kernel(%arg0: i32, %arg1: memref<1x8x32xf32, #tpu.memory_space<vmem>>, %arg2: memref<8x32xf32, #tpu.memory_space<vmem>>, %arg3: memref<2x32x96xbf16, #tpu.memory_space<vmem>>, %arg4: memref<2x1x96xf32, #tpu.memory_space<vmem>>, %arg5: memref<2x32x32xbf16, #tpu.memory_space<vmem>>, %arg6: memref<2x1x32xf32, #tpu.memory_space<vmem>>, %arg7: memref<2x32x64xbf16, #tpu.memory_space<vmem>>, %arg8: memref<2x1x64xf32, #tpu.memory_space<vmem>>, %arg9: memref<2x64x32xbf16, #tpu.memory_space<vmem>>, %arg10: memref<2x1x32xf32, #tpu.memory_space<vmem>>, %arg11: memref<2x1x32xf32, #tpu.memory_space<vmem>>, %arg12: memref<2x1x32xf32, #tpu.memory_space<vmem>>, %arg13: memref<2x1x32xf32, #tpu.memory_space<vmem>>, %arg14: memref<2x1x32xf32, #tpu.memory_space<vmem>>, %arg15: memref<1x1x32xf32, #tpu.memory_space<vmem>>) attributes {dimension_semantics = [#tpu.dimension_semantics<parallel>], iteration_bounds = array<i64: 2>, scalar_prefetch = 0 : i64, scratch_operands = 0 : i64, tpu.core_type = #tpu.core_type<tc>, window_params = [{transform_indices = @transform_0, window_bounds = array<i64: 1, 8, 32>}, {pipeline_mode = #tpu.pipeline_mode<synchronous>, transform_indices = @transform_1, window_bounds = array<i64: 8, 32>}, {pipeline_mode = #tpu.pipeline_mode<synchronous>, transform_indices = @transform_2, window_bounds = array<i64: 2, 32, 96>}, {pipeline_mode = #tpu.pipeline_mode<synchronous>, transform_indices = @transform_3, window_bounds = array<i64: 2, 1, 96>}, {pipeline_mode = #tpu.pipeline_mode<synchronous>, transform_indices = @transform_4, window_bounds = array<i64: 2, 32, 32>}, {pipeline_mode = #tpu.pipeline_mode<synchronous>, transform_indices = @transform_5, window_bounds = array<i64: 2, 1, 32>}, {pipeline_mode = #tpu.pipeline_mode<synchronous>, transform_indices = @transform_6, window_bounds = array<i64: 2, 32, 64>}, {pipeline_mode = #tpu.pipeline_mode<synchronous>, transform_indices = @transform_7, window_bounds = array<i64: 2, 1, 64>}, {pipeline_mode = #tpu.pipeline_mode<synchronous>, transform_indices = @transform_8, window_bounds = array<i64: 2, 64, 32>}, {pipeline_mode = #tpu.pipeline_mode<synchronous>, transform_indices = @transform_9, window_bounds = array<i64: 2, 1, 32>}, {pipeline_mode = #tpu.pipeline_mode<synchronous>, transform_indices = @transform_10, window_bounds = array<i64: 2, 1, 32>}, {pipeline_mode = #tpu.pipeline_mode<synchronous>, transform_indices = @transform_11, window_bounds = array<i64: 2, 1, 32>}, {pipeline_mode = #tpu.pipeline_mode<synchronous>, transform_indices = @transform_12, window_bounds = array<i64: 2, 1, 32>}, {pipeline_mode = #tpu.pipeline_mode<synchronous>, transform_indices = @transform_13, window_bounds = array<i64: 2, 1, 32>}, {transform_indices = @transform_14, window_bounds = array<i64: 1, 1, 32>}]} {
    %c0 = arith.constant 0 : index
    %c0_0 = arith.constant 0 : index
    %c0_1 = arith.constant 0 : index
    %0 = vector.load %arg1[%c0, %c0_0, %c0_1] : memref<1x8x32xf32, #tpu.memory_space<vmem>>, vector<1x8x32xf32>
    %1 = vector.shape_cast %0 : vector<1x8x32xf32> to vector<8x32xf32>
    %c0_2 = arith.constant 0 : index
    %c0_3 = arith.constant 0 : index
    %2 = vector.load %arg2[%c0_2, %c0_3] : memref<8x32xf32, #tpu.memory_space<vmem>>, vector<8x32xf32>
    %3 = arith.addf %1, %2 : vector<8x32xf32>
    %4 = arith.truncf %3 : vector<8x32xf32> to vector<8x32xbf16>
    %c0_4 = arith.constant 0 : index
    %c0_5 = arith.constant 0 : index
    %c0_6 = arith.constant 0 : index
    %5 = vector.load %arg3[%c0_4, %c0_5, %c0_6] : memref<2x32x96xbf16, #tpu.memory_space<vmem>>, vector<1x32x96xbf16>
    %6 = vector.shape_cast %5 : vector<1x32x96xbf16> to vector<32x96xbf16>
    %cst = arith.constant dense<0.000000e+00> : vector<8x96xf32>
    %7 = tpu.matmul %4, %6, %cst {dimension_numbers = #tpu.dot_dimension_numbers<[1], [0], [0], [1], [0, 0, 1, 1], [], []>} : vector<8x32xbf16>, vector<32x96xbf16>, vector<8x96xf32> -> vector<8x96xf32>
    %c0_7 = arith.constant 0 : index
    %c0_8 = arith.constant 0 : index
    %c0_9 = arith.constant 0 : index
    %8 = vector.load %arg4[%c0_7, %c0_8, %c0_9] : memref<2x1x96xf32, #tpu.memory_space<vmem>>, vector<1x1x96xf32>
    %9 = vector.shape_cast %8 : vector<1x1x96xf32> to vector<1x96xf32>
    %10 = vector.broadcast %9 : vector<1x96xf32> to vector<8x96xf32>
    %11 = arith.addf %7, %10 : vector<8x96xf32>
    %12 = vector.extract_strided_slice %11 {offsets = [0, 0], sizes = [8, 32], strides = [1, 1]} : vector<8x96xf32> to vector<8x32xf32>
    %13 = vector.shape_cast %12 : vector<8x32xf32> to vector<8x4x8xf32>
    %14 = tpu.transpose %13, [1, 0, 2] : vector<8x4x8xf32> -> vector<4x8x8xf32>
    %15 = vector.extract_strided_slice %11 {offsets = [0, 32], sizes = [8, 32], strides = [1, 1]} : vector<8x96xf32> to vector<8x32xf32>
    %16 = vector.shape_cast %15 : vector<8x32xf32> to vector<8x4x8xf32>
    %17 = tpu.transpose %16, [1, 0, 2] : vector<8x4x8xf32> -> vector<4x8x8xf32>
    %18 = vector.extract_strided_slice %11 {offsets = [0, 64], sizes = [8, 32], strides = [1, 1]} : vector<8x96xf32> to vector<8x32xf32>
    %19 = vector.shape_cast %18 : vector<8x32xf32> to vector<8x4x8xf32>
    %20 = tpu.transpose %19, [1, 0, 2] : vector<8x4x8xf32> -> vector<4x8x8xf32>
    "tpu.trace_start"() <{level = 10 : i32, message = "hqd,hkd->hqk"}> : () -> ()
    %cst_10 = arith.constant dense<0.000000e+00> : vector<4x8x8xf32>
    %21 = tpu.matmul %14, %17, %cst_10 {dimension_numbers = #tpu.dot_dimension_numbers<[2], [2], [1], [1], [0, 0, 0, 1, 1, 1], [0], [0]>} : vector<4x8x8xf32>, vector<4x8x8xf32>, vector<4x8x8xf32> -> vector<4x8x8xf32>
    "tpu.trace_stop"() : () -> ()
    %cst_11 = arith.constant dense<0xFF800000> : vector<4x8xf32>
    %22 = vector.multi_reduction <maximumf>, %21, %cst_11 [2] : vector<4x8x8xf32> to vector<4x8xf32>
    %23 = vector.shape_cast %22 : vector<4x8xf32> to vector<4x8x1xf32>
    %24 = vector.broadcast %23 : vector<4x8x1xf32> to vector<4x8x8xf32>
    %25 = arith.subf %21, %24 : vector<4x8x8xf32>
    %26 = math.exp %25 : vector<4x8x8xf32>
    %cst_12 = arith.constant dense<0.000000e+00> : vector<4x8xf32>
    %27 = vector.multi_reduction <add>, %26, %cst_12 [2] : vector<4x8x8xf32> to vector<4x8xf32>
    %28 = vector.shape_cast %27 : vector<4x8xf32> to vector<4x8x1xf32>
    %29 = tpu.reciprocal %28 {approx = true} : vector<4x8x1xf32> -> vector<4x8x1xf32>
    %30 = vector.broadcast %29 : vector<4x8x1xf32> to vector<4x8x8xf32>
    %31 = arith.mulf %26, %30 : vector<4x8x8xf32>
    %32 = arith.truncf %31 : vector<4x8x8xf32> to vector<4x8x8xbf16>
    %33 = arith.truncf %20 : vector<4x8x8xf32> to vector<4x8x8xbf16>
    "tpu.trace_start"() <{level = 10 : i32, message = "hqk,hkd->hqd"}> : () -> ()
    %cst_13 = arith.constant dense<0.000000e+00> : vector<4x8x8xf32>
    %34 = tpu.matmul %32, %33, %cst_13 {dimension_numbers = #tpu.dot_dimension_numbers<[2], [1], [1], [2], [0, 0, 0, 1, 1, 2], [0], [0]>} : vector<4x8x8xbf16>, vector<4x8x8xbf16>, vector<4x8x8xf32> -> vector<4x8x8xf32>
    "tpu.trace_stop"() : () -> ()
    %35 = tpu.transpose %34, [1, 0, 2] : vector<4x8x8xf32> -> vector<8x4x8xf32>
    %36 = vector.shape_cast %35 : vector<8x4x8xf32> to vector<8x32xf32>
    %37 = arith.truncf %36 : vector<8x32xf32> to vector<8x32xbf16>
    %c0_14 = arith.constant 0 : index
    %c0_15 = arith.constant 0 : index
    %c0_16 = arith.constant 0 : index
    %38 = vector.load %arg5[%c0_14, %c0_15, %c0_16] : memref<2x32x32xbf16, #tpu.memory_space<vmem>>, vector<1x32x32xbf16>
    %39 = vector.shape_cast %38 : vector<1x32x32xbf16> to vector<32x32xbf16>
    %cst_17 = arith.constant dense<0.000000e+00> : vector<8x32xf32>
    %40 = tpu.matmul %37, %39, %cst_17 {dimension_numbers = #tpu.dot_dimension_numbers<[1], [0], [0], [1], [0, 0, 1, 1], [], []>} : vector<8x32xbf16>, vector<32x32xbf16>, vector<8x32xf32> -> vector<8x32xf32>
    %c0_18 = arith.constant 0 : index
    %c0_19 = arith.constant 0 : index
    %c0_20 = arith.constant 0 : index
    %41 = vector.load %arg6[%c0_18, %c0_19, %c0_20] : memref<2x1x32xf32, #tpu.memory_space<vmem>>, vector<1x1x32xf32>
    %42 = vector.shape_cast %41 : vector<1x1x32xf32> to vector<1x32xf32>
    %43 = vector.broadcast %42 : vector<1x32xf32> to vector<8x32xf32>
    %44 = arith.addf %40, %43 : vector<8x32xf32>
    %45 = arith.addf %3, %44 : vector<8x32xf32>
    %c0_21 = arith.constant 0 : index
    %c0_22 = arith.constant 0 : index
    %c0_23 = arith.constant 0 : index
    %46 = vector.load %arg11[%c0_21, %c0_22, %c0_23] : memref<2x1x32xf32, #tpu.memory_space<vmem>>, vector<1x1x32xf32>
    %47 = vector.shape_cast %46 : vector<1x1x32xf32> to vector<1x32xf32>
    %c0_24 = arith.constant 0 : index
    %c0_25 = arith.constant 0 : index
    %c0_26 = arith.constant 0 : index
    %48 = vector.load %arg12[%c0_24, %c0_25, %c0_26] : memref<2x1x32xf32, #tpu.memory_space<vmem>>, vector<1x1x32xf32>
    %49 = vector.shape_cast %48 : vector<1x1x32xf32> to vector<1x32xf32>
    %cst_27 = arith.constant dense<0.000000e+00> : vector<8xf32>
    %50 = vector.multi_reduction <add>, %45, %cst_27 [1] : vector<8x32xf32> to vector<8xf32>
    %51 = vector.shape_cast %50 : vector<8xf32> to vector<8x1xf32>
    %cst_28 = arith.constant 3.200000e+01 : f32
    %52 = vector.broadcast %cst_28 : f32 to vector<8x1xf32>
    %53 = arith.divf %51, %52 : vector<8x1xf32>
    %54 = vector.broadcast %53 : vector<8x1xf32> to vector<8x32xf32>
    %55 = arith.subf %45, %54 : vector<8x32xf32>
    %56 = arith.mulf %55, %55 : vector<8x32xf32>
    %cst_29 = arith.constant dense<0.000000e+00> : vector<8xf32>
    %57 = vector.multi_reduction <add>, %56, %cst_29 [1] : vector<8x32xf32> to vector<8xf32>
    %58 = vector.shape_cast %57 : vector<8xf32> to vector<8x1xf32>
    %cst_30 = arith.constant 3.200000e+01 : f32
    %59 = vector.broadcast %cst_30 : f32 to vector<8x1xf32>
    %60 = arith.divf %58, %59 : vector<8x1xf32>
    %61 = vector.broadcast %53 : vector<8x1xf32> to vector<8x32xf32>
    %62 = arith.subf %45, %61 : vector<8x32xf32>
    %cst_31 = arith.constant 9.99999974E-6 : f32
    %63 = vector.broadcast %cst_31 : f32 to vector<8x1xf32>
    %64 = arith.addf %60, %63 : vector<8x1xf32>
    %65 = math.rsqrt %64 : vector<8x1xf32>
    %66 = vector.broadcast %65 : vector<8x1xf32> to vector<8x32xf32>
    %67 = arith.mulf %62, %66 : vector<8x32xf32>
    %68 = vector.broadcast %47 : vector<1x32xf32> to vector<8x32xf32>
    %69 = arith.mulf %67, %68 : vector<8x32xf32>
    %70 = vector.broadcast %49 : vector<1x32xf32> to vector<8x32xf32>
    %71 = arith.addf %69, %70 : vector<8x32xf32>
    %72 = arith.truncf %71 : vector<8x32xf32> to vector<8x32xbf16>
    %c0_32 = arith.constant 0 : index
    %c0_33 = arith.constant 0 : index
    %c0_34 = arith.constant 0 : index
    %73 = vector.load %arg7[%c0_32, %c0_33, %c0_34] : memref<2x32x64xbf16, #tpu.memory_space<vmem>>, vector<1x32x64xbf16>
    %74 = vector.shape_cast %73 : vector<1x32x64xbf16> to vector<32x64xbf16>
    %cst_35 = arith.constant dense<0.000000e+00> : vector<8x64xf32>
    %75 = tpu.matmul %72, %74, %cst_35 {dimension_numbers = #tpu.dot_dimension_numbers<[1], [0], [0], [1], [0, 0, 1, 1], [], []>} : vector<8x32xbf16>, vector<32x64xbf16>, vector<8x64xf32> -> vector<8x64xf32>
    %c0_36 = arith.constant 0 : index
    %c0_37 = arith.constant 0 : index
    %c0_38 = arith.constant 0 : index
    %76 = vector.load %arg8[%c0_36, %c0_37, %c0_38] : memref<2x1x64xf32, #tpu.memory_space<vmem>>, vector<1x1x64xf32>
    %77 = vector.shape_cast %76 : vector<1x1x64xf32> to vector<1x64xf32>
    %78 = vector.broadcast %77 : vector<1x64xf32> to vector<8x64xf32>
    %79 = arith.addf %75, %78 : vector<8x64xf32>
    %cst_39 = arith.constant 0.000000e+00 : f32
    %80 = vector.broadcast %cst_39 : f32 to vector<8x64xf32>
    %81 = arith.maximumf %79, %80 : vector<8x64xf32>
    %82 = arith.truncf %81 : vector<8x64xf32> to vector<8x64xbf16>
    %c0_40 = arith.constant 0 : index
    %c0_41 = arith.constant 0 : index
    %c0_42 = arith.constant 0 : index
    %83 = vector.load %arg9[%c0_40, %c0_41, %c0_42] : memref<2x64x32xbf16, #tpu.memory_space<vmem>>, vector<1x64x32xbf16>
    %84 = vector.shape_cast %83 : vector<1x64x32xbf16> to vector<64x32xbf16>
    %cst_43 = arith.constant dense<0.000000e+00> : vector<8x32xf32>
    %85 = tpu.matmul %82, %84, %cst_43 {dimension_numbers = #tpu.dot_dimension_numbers<[1], [0], [0], [1], [0, 0, 1, 1], [], []>} : vector<8x64xbf16>, vector<64x32xbf16>, vector<8x32xf32> -> vector<8x32xf32>
    %c0_44 = arith.constant 0 : index
    %c0_45 = arith.constant 0 : index
    %c0_46 = arith.constant 0 : index
    %86 = vector.load %arg10[%c0_44, %c0_45, %c0_46] : memref<2x1x32xf32, #tpu.memory_space<vmem>>, vector<1x1x32xf32>
    %87 = vector.shape_cast %86 : vector<1x1x32xf32> to vector<1x32xf32>
    %88 = vector.broadcast %87 : vector<1x32xf32> to vector<8x32xf32>
    %89 = arith.addf %85, %88 : vector<8x32xf32>
    %90 = arith.addf %71, %89 : vector<8x32xf32>
    %c0_47 = arith.constant 0 : index
    %c0_48 = arith.constant 0 : index
    %c0_49 = arith.constant 0 : index
    %91 = vector.load %arg13[%c0_47, %c0_48, %c0_49] : memref<2x1x32xf32, #tpu.memory_space<vmem>>, vector<1x1x32xf32>
    %92 = vector.shape_cast %91 : vector<1x1x32xf32> to vector<1x32xf32>
    %c0_50 = arith.constant 0 : index
    %c0_51 = arith.constant 0 : index
    %c0_52 = arith.constant 0 : index
    %93 = vector.load %arg14[%c0_50, %c0_51, %c0_52] : memref<2x1x32xf32, #tpu.memory_space<vmem>>, vector<1x1x32xf32>
    %94 = vector.shape_cast %93 : vector<1x1x32xf32> to vector<1x32xf32>
    %cst_53 = arith.constant dense<0.000000e+00> : vector<8xf32>
    %95 = vector.multi_reduction <add>, %90, %cst_53 [1] : vector<8x32xf32> to vector<8xf32>
    %96 = vector.shape_cast %95 : vector<8xf32> to vector<8x1xf32>
    %cst_54 = arith.constant 3.200000e+01 : f32
    %97 = vector.broadcast %cst_54 : f32 to vector<8x1xf32>
    %98 = arith.divf %96, %97 : vector<8x1xf32>
    %99 = vector.broadcast %98 : vector<8x1xf32> to vector<8x32xf32>
    %100 = arith.subf %90, %99 : vector<8x32xf32>
    %101 = arith.mulf %100, %100 : vector<8x32xf32>
    %cst_55 = arith.constant dense<0.000000e+00> : vector<8xf32>
    %102 = vector.multi_reduction <add>, %101, %cst_55 [1] : vector<8x32xf32> to vector<8xf32>
    %103 = vector.shape_cast %102 : vector<8xf32> to vector<8x1xf32>
    %cst_56 = arith.constant 3.200000e+01 : f32
    %104 = vector.broadcast %cst_56 : f32 to vector<8x1xf32>
    %105 = arith.divf %103, %104 : vector<8x1xf32>
    %106 = vector.broadcast %98 : vector<8x1xf32> to vector<8x32xf32>
    %107 = arith.subf %90, %106 : vector<8x32xf32>
    %cst_57 = arith.constant 9.99999974E-6 : f32
    %108 = vector.broadcast %cst_57 : f32 to vector<8x1xf32>
    %109 = arith.addf %105, %108 : vector<8x1xf32>
    %110 = math.rsqrt %109 : vector<8x1xf32>
    %111 = vector.broadcast %110 : vector<8x1xf32> to vector<8x32xf32>
    %112 = arith.mulf %107, %111 : vector<8x32xf32>
    %113 = vector.broadcast %92 : vector<1x32xf32> to vector<8x32xf32>
    %114 = arith.mulf %112, %113 : vector<8x32xf32>
    %115 = vector.broadcast %94 : vector<1x32xf32> to vector<8x32xf32>
    %116 = arith.addf %114, %115 : vector<8x32xf32>
    %117 = arith.truncf %116 : vector<8x32xf32> to vector<8x32xbf16>
    %c1 = arith.constant 1 : index
    %c0_58 = arith.constant 0 : index
    %c0_59 = arith.constant 0 : index
    %118 = vector.load %arg3[%c1, %c0_58, %c0_59] : memref<2x32x96xbf16, #tpu.memory_space<vmem>>, vector<1x32x96xbf16>
    %119 = vector.shape_cast %118 : vector<1x32x96xbf16> to vector<32x96xbf16>
    %cst_60 = arith.constant dense<0.000000e+00> : vector<8x96xf32>
    %120 = tpu.matmul %117, %119, %cst_60 {dimension_numbers = #tpu.dot_dimension_numbers<[1], [0], [0], [1], [0, 0, 1, 1], [], []>} : vector<8x32xbf16>, vector<32x96xbf16>, vector<8x96xf32> -> vector<8x96xf32>
    %c1_61 = arith.constant 1 : index
    %c0_62 = arith.constant 0 : index
    %c0_63 = arith.constant 0 : index
    %121 = vector.load %arg4[%c1_61, %c0_62, %c0_63] : memref<2x1x96xf32, #tpu.memory_space<vmem>>, vector<1x1x96xf32>
    %122 = vector.shape_cast %121 : vector<1x1x96xf32> to vector<1x96xf32>
    %123 = vector.broadcast %122 : vector<1x96xf32> to vector<8x96xf32>
    %124 = arith.addf %120, %123 : vector<8x96xf32>
    %125 = vector.extract_strided_slice %124 {offsets = [0, 0], sizes = [8, 32], strides = [1, 1]} : vector<8x96xf32> to vector<8x32xf32>
    %126 = vector.shape_cast %125 : vector<8x32xf32> to vector<8x4x8xf32>
    %127 = tpu.transpose %126, [1, 0, 2] : vector<8x4x8xf32> -> vector<4x8x8xf32>
    %128 = vector.extract_strided_slice %124 {offsets = [0, 32], sizes = [8, 32], strides = [1, 1]} : vector<8x96xf32> to vector<8x32xf32>
    %129 = vector.shape_cast %128 : vector<8x32xf32> to vector<8x4x8xf32>
    %130 = tpu.transpose %129, [1, 0, 2] : vector<8x4x8xf32> -> vector<4x8x8xf32>
    %131 = vector.extract_strided_slice %124 {offsets = [0, 64], sizes = [8, 32], strides = [1, 1]} : vector<8x96xf32> to vector<8x32xf32>
    %132 = vector.shape_cast %131 : vector<8x32xf32> to vector<8x4x8xf32>
    %133 = tpu.transpose %132, [1, 0, 2] : vector<8x4x8xf32> -> vector<4x8x8xf32>
    "tpu.trace_start"() <{level = 10 : i32, message = "hqd,hkd->hqk"}> : () -> ()
    %cst_64 = arith.constant dense<0.000000e+00> : vector<4x8x8xf32>
    %134 = tpu.matmul %127, %130, %cst_64 {dimension_numbers = #tpu.dot_dimension_numbers<[2], [2], [1], [1], [0, 0, 0, 1, 1, 1], [0], [0]>} : vector<4x8x8xf32>, vector<4x8x8xf32>, vector<4x8x8xf32> -> vector<4x8x8xf32>
    "tpu.trace_stop"() : () -> ()
    %cst_65 = arith.constant dense<0xFF800000> : vector<4x8xf32>
    %135 = vector.multi_reduction <maximumf>, %134, %cst_65 [2] : vector<4x8x8xf32> to vector<4x8xf32>
    %136 = vector.shape_cast %135 : vector<4x8xf32> to vector<4x8x1xf32>
    %137 = vector.broadcast %136 : vector<4x8x1xf32> to vector<4x8x8xf32>
    %138 = arith.subf %134, %137 : vector<4x8x8xf32>
    %139 = math.exp %138 : vector<4x8x8xf32>
    %cst_66 = arith.constant dense<0.000000e+00> : vector<4x8xf32>
    %140 = vector.multi_reduction <add>, %139, %cst_66 [2] : vector<4x8x8xf32> to vector<4x8xf32>
    %141 = vector.shape_cast %140 : vector<4x8xf32> to vector<4x8x1xf32>
    %142 = tpu.reciprocal %141 {approx = true} : vector<4x8x1xf32> -> vector<4x8x1xf32>
    %143 = vector.broadcast %142 : vector<4x8x1xf32> to vector<4x8x8xf32>
    %144 = arith.mulf %139, %143 : vector<4x8x8xf32>
    %145 = arith.truncf %144 : vector<4x8x8xf32> to vector<4x8x8xbf16>
    %146 = arith.truncf %133 : vector<4x8x8xf32> to vector<4x8x8xbf16>
    "tpu.trace_start"() <{level = 10 : i32, message = "hqk,hkd->hqd"}> : () -> ()
    %cst_67 = arith.constant dense<0.000000e+00> : vector<4x8x8xf32>
    %147 = tpu.matmul %145, %146, %cst_67 {dimension_numbers = #tpu.dot_dimension_numbers<[2], [1], [1], [2], [0, 0, 0, 1, 1, 2], [0], [0]>} : vector<4x8x8xbf16>, vector<4x8x8xbf16>, vector<4x8x8xf32> -> vector<4x8x8xf32>
    "tpu.trace_stop"() : () -> ()
    %148 = tpu.transpose %147, [1, 0, 2] : vector<4x8x8xf32> -> vector<8x4x8xf32>
    %149 = vector.shape_cast %148 : vector<8x4x8xf32> to vector<8x32xf32>
    %150 = arith.truncf %149 : vector<8x32xf32> to vector<8x32xbf16>
    %c1_68 = arith.constant 1 : index
    %c0_69 = arith.constant 0 : index
    %c0_70 = arith.constant 0 : index
    %151 = vector.load %arg5[%c1_68, %c0_69, %c0_70] : memref<2x32x32xbf16, #tpu.memory_space<vmem>>, vector<1x32x32xbf16>
    %152 = vector.shape_cast %151 : vector<1x32x32xbf16> to vector<32x32xbf16>
    %cst_71 = arith.constant dense<0.000000e+00> : vector<8x32xf32>
    %153 = tpu.matmul %150, %152, %cst_71 {dimension_numbers = #tpu.dot_dimension_numbers<[1], [0], [0], [1], [0, 0, 1, 1], [], []>} : vector<8x32xbf16>, vector<32x32xbf16>, vector<8x32xf32> -> vector<8x32xf32>
    %c1_72 = arith.constant 1 : index
    %c0_73 = arith.constant 0 : index
    %c0_74 = arith.constant 0 : index
    %154 = vector.load %arg6[%c1_72, %c0_73, %c0_74] : memref<2x1x32xf32, #tpu.memory_space<vmem>>, vector<1x1x32xf32>
    %155 = vector.shape_cast %154 : vector<1x1x32xf32> to vector<1x32xf32>
    %156 = vector.broadcast %155 : vector<1x32xf32> to vector<8x32xf32>
    %157 = arith.addf %153, %156 : vector<8x32xf32>
    %158 = arith.addf %116, %157 : vector<8x32xf32>
    %c1_75 = arith.constant 1 : index
    %c0_76 = arith.constant 0 : index
    %c0_77 = arith.constant 0 : index
    %159 = vector.load %arg11[%c1_75, %c0_76, %c0_77] : memref<2x1x32xf32, #tpu.memory_space<vmem>>, vector<1x1x32xf32>
    %160 = vector.shape_cast %159 : vector<1x1x32xf32> to vector<1x32xf32>
    %c1_78 = arith.constant 1 : index
    %c0_79 = arith.constant 0 : index
    %c0_80 = arith.constant 0 : index
    %161 = vector.load %arg12[%c1_78, %c0_79, %c0_80] : memref<2x1x32xf32, #tpu.memory_space<vmem>>, vector<1x1x32xf32>
    %162 = vector.shape_cast %161 : vector<1x1x32xf32> to vector<1x32xf32>
    %cst_81 = arith.constant dense<0.000000e+00> : vector<8xf32>
    %163 = vector.multi_reduction <add>, %158, %cst_81 [1] : vector<8x32xf32> to vector<8xf32>
    %164 = vector.shape_cast %163 : vector<8xf32> to vector<8x1xf32>
    %cst_82 = arith.constant 3.200000e+01 : f32
    %165 = vector.broadcast %cst_82 : f32 to vector<8x1xf32>
    %166 = arith.divf %164, %165 : vector<8x1xf32>
    %167 = vector.broadcast %166 : vector<8x1xf32> to vector<8x32xf32>
    %168 = arith.subf %158, %167 : vector<8x32xf32>
    %169 = arith.mulf %168, %168 : vector<8x32xf32>
    %cst_83 = arith.constant dense<0.000000e+00> : vector<8xf32>
    %170 = vector.multi_reduction <add>, %169, %cst_83 [1] : vector<8x32xf32> to vector<8xf32>
    %171 = vector.shape_cast %170 : vector<8xf32> to vector<8x1xf32>
    %cst_84 = arith.constant 3.200000e+01 : f32
    %172 = vector.broadcast %cst_84 : f32 to vector<8x1xf32>
    %173 = arith.divf %171, %172 : vector<8x1xf32>
    %174 = vector.broadcast %166 : vector<8x1xf32> to vector<8x32xf32>
    %175 = arith.subf %158, %174 : vector<8x32xf32>
    %cst_85 = arith.constant 9.99999974E-6 : f32
    %176 = vector.broadcast %cst_85 : f32 to vector<8x1xf32>
    %177 = arith.addf %173, %176 : vector<8x1xf32>
    %178 = math.rsqrt %177 : vector<8x1xf32>
    %179 = vector.broadcast %178 : vector<8x1xf32> to vector<8x32xf32>
    %180 = arith.mulf %175, %179 : vector<8x32xf32>
    %181 = vector.broadcast %160 : vector<1x32xf32> to vector<8x32xf32>
    %182 = arith.mulf %180, %181 : vector<8x32xf32>
    %183 = vector.broadcast %162 : vector<1x32xf32> to vector<8x32xf32>
    %184 = arith.addf %182, %183 : vector<8x32xf32>
    %185 = arith.truncf %184 : vector<8x32xf32> to vector<8x32xbf16>
    %c1_86 = arith.constant 1 : index
    %c0_87 = arith.constant 0 : index
    %c0_88 = arith.constant 0 : index
    %186 = vector.load %arg7[%c1_86, %c0_87, %c0_88] : memref<2x32x64xbf16, #tpu.memory_space<vmem>>, vector<1x32x64xbf16>
    %187 = vector.shape_cast %186 : vector<1x32x64xbf16> to vector<32x64xbf16>
    %cst_89 = arith.constant dense<0.000000e+00> : vector<8x64xf32>
    %188 = tpu.matmul %185, %187, %cst_89 {dimension_numbers = #tpu.dot_dimension_numbers<[1], [0], [0], [1], [0, 0, 1, 1], [], []>} : vector<8x32xbf16>, vector<32x64xbf16>, vector<8x64xf32> -> vector<8x64xf32>
    %c1_90 = arith.constant 1 : index
    %c0_91 = arith.constant 0 : index
    %c0_92 = arith.constant 0 : index
    %189 = vector.load %arg8[%c1_90, %c0_91, %c0_92] : memref<2x1x64xf32, #tpu.memory_space<vmem>>, vector<1x1x64xf32>
    %190 = vector.shape_cast %189 : vector<1x1x64xf32> to vector<1x64xf32>
    %191 = vector.broadcast %190 : vector<1x64xf32> to vector<8x64xf32>
    %192 = arith.addf %188, %191 : vector<8x64xf32>
    %cst_93 = arith.constant 0.000000e+00 : f32
    %193 = vector.broadcast %cst_93 : f32 to vector<8x64xf32>
    %194 = arith.maximumf %192, %193 : vector<8x64xf32>
    %195 = arith.truncf %194 : vector<8x64xf32> to vector<8x64xbf16>
    %c1_94 = arith.constant 1 : index
    %c0_95 = arith.constant 0 : index
    %c0_96 = arith.constant 0 : index
    %196 = vector.load %arg9[%c1_94, %c0_95, %c0_96] : memref<2x64x32xbf16, #tpu.memory_space<vmem>>, vector<1x64x32xbf16>
    %197 = vector.shape_cast %196 : vector<1x64x32xbf16> to vector<64x32xbf16>
    %cst_97 = arith.constant dense<0.000000e+00> : vector<8x32xf32>
    %198 = tpu.matmul %195, %197, %cst_97 {dimension_numbers = #tpu.dot_dimension_numbers<[1], [0], [0], [1], [0, 0, 1, 1], [], []>} : vector<8x64xbf16>, vector<64x32xbf16>, vector<8x32xf32> -> vector<8x32xf32>
    %c1_98 = arith.constant 1 : index
    %c0_99 = arith.constant 0 : index
    %c0_100 = arith.constant 0 : index
    %199 = vector.load %arg10[%c1_98, %c0_99, %c0_100] : memref<2x1x32xf32, #tpu.memory_space<vmem>>, vector<1x1x32xf32>
    %200 = vector.shape_cast %199 : vector<1x1x32xf32> to vector<1x32xf32>
    %201 = vector.broadcast %200 : vector<1x32xf32> to vector<8x32xf32>
    %202 = arith.addf %198, %201 : vector<8x32xf32>
    %203 = arith.addf %184, %202 : vector<8x32xf32>
    %c1_101 = arith.constant 1 : index
    %c0_102 = arith.constant 0 : index
    %c0_103 = arith.constant 0 : index
    %204 = vector.load %arg13[%c1_101, %c0_102, %c0_103] : memref<2x1x32xf32, #tpu.memory_space<vmem>>, vector<1x1x32xf32>
    %205 = vector.shape_cast %204 : vector<1x1x32xf32> to vector<1x32xf32>
    %c1_104 = arith.constant 1 : index
    %c0_105 = arith.constant 0 : index
    %c0_106 = arith.constant 0 : index
    %206 = vector.load %arg14[%c1_104, %c0_105, %c0_106] : memref<2x1x32xf32, #tpu.memory_space<vmem>>, vector<1x1x32xf32>
    %207 = vector.shape_cast %206 : vector<1x1x32xf32> to vector<1x32xf32>
    %cst_107 = arith.constant dense<0.000000e+00> : vector<8xf32>
    %208 = vector.multi_reduction <add>, %203, %cst_107 [1] : vector<8x32xf32> to vector<8xf32>
    %209 = vector.shape_cast %208 : vector<8xf32> to vector<8x1xf32>
    %cst_108 = arith.constant 3.200000e+01 : f32
    %210 = vector.broadcast %cst_108 : f32 to vector<8x1xf32>
    %211 = arith.divf %209, %210 : vector<8x1xf32>
    %212 = vector.broadcast %211 : vector<8x1xf32> to vector<8x32xf32>
    %213 = arith.subf %203, %212 : vector<8x32xf32>
    %214 = arith.mulf %213, %213 : vector<8x32xf32>
    %cst_109 = arith.constant dense<0.000000e+00> : vector<8xf32>
    %215 = vector.multi_reduction <add>, %214, %cst_109 [1] : vector<8x32xf32> to vector<8xf32>
    %216 = vector.shape_cast %215 : vector<8xf32> to vector<8x1xf32>
    %cst_110 = arith.constant 3.200000e+01 : f32
    %217 = vector.broadcast %cst_110 : f32 to vector<8x1xf32>
    %218 = arith.divf %216, %217 : vector<8x1xf32>
    %219 = vector.broadcast %211 : vector<8x1xf32> to vector<8x32xf32>
    %220 = arith.subf %203, %219 : vector<8x32xf32>
    %cst_111 = arith.constant 9.99999974E-6 : f32
    %221 = vector.broadcast %cst_111 : f32 to vector<8x1xf32>
    %222 = arith.addf %218, %221 : vector<8x1xf32>
    %223 = math.rsqrt %222 : vector<8x1xf32>
    %224 = vector.broadcast %223 : vector<8x1xf32> to vector<8x32xf32>
    %225 = arith.mulf %220, %224 : vector<8x32xf32>
    %226 = vector.broadcast %205 : vector<1x32xf32> to vector<8x32xf32>
    %227 = arith.mulf %225, %226 : vector<8x32xf32>
    %228 = vector.broadcast %207 : vector<1x32xf32> to vector<8x32xf32>
    %229 = arith.addf %227, %228 : vector<8x32xf32>
    %cst_112 = arith.constant dense<0xFF800000> : vector<32xf32>
    %230 = vector.multi_reduction <maximumf>, %229, %cst_112 [0] : vector<8x32xf32> to vector<32xf32>
    %231 = vector.shape_cast %230 : vector<32xf32> to vector<1x32xf32>
    %232 = vector.shape_cast %231 : vector<1x32xf32> to vector<1x1x32xf32>
    %c0_113 = arith.constant 0 : index
    %c0_114 = arith.constant 0 : index
    %c0_115 = arith.constant 0 : index
    %233 = vector.load %arg15[%c0_113, %c0_114, %c0_115] : memref<1x1x32xf32, #tpu.memory_space<vmem>>, vector<1x1x32xf32>
    tpu.vector_store %arg15[%c0_113, %c0_114, %c0_115], %232 {strides = array<i32>} : memref<1x1x32xf32, #tpu.memory_space<vmem>>, vector<1x1x32xf32>,
    return
  }
  func.func @transform_0(%arg0: i32) -> (i32, i32, i32) {
    %c0_i32 = arith.constant 0 : i32
    %c0_i32_0 = arith.constant 0 : i32
    %c0_i32_1 = arith.constant 0 : i32
    return %arg0, %c0_i32, %c0_i32_0 : i32, i32, i32
  }
  func.func @transform_1(%arg0: i32) -> (i32, i32) {
    %c0_i32 = arith.constant 0 : i32
    %c0_i32_0 = arith.constant 0 : i32
    %c0_i32_1 = arith.constant 0 : i32
    return %c0_i32, %c0_i32_0 : i32, i32
  }
  func.func @transform_2(%arg0: i32) -> (i32, i32, i32) {
    %c0_i32 = arith.constant 0 : i32
    %c0_i32_0 = arith.constant 0 : i32
    %c0_i32_1 = arith.constant 0 : i32
    %c0_i32_2 = arith.constant 0 : i32
    return %c0_i32, %c0_i32_0, %c0_i32_1 : i32, i32, i32
  }
  func.func @transform_3(%arg0: i32) -> (i32, i32, i32) {
    %c0_i32 = arith.constant 0 : i32
    %c0_i32_0 = arith.constant 0 : i32
    %c0_i32_1 = arith.constant 0 : i32
    %c0_i32_2 = arith.constant 0 : i32
    return %c0_i32, %c0_i32_0, %c0_i32_1 : i32, i32, i32
  }
  func.func @transform_4(%arg0: i32) -> (i32, i32, i32) {
    %c0_i32 = arith.constant 0 : i32
    %c0_i32_0 = arith.constant 0 : i32
    %c0_i32_1 = arith.constant 0 : i32
    %c0_i32_2 = arith.constant 0 : i32
    return %c0_i32, %c0_i32_0, %c0_i32_1 : i32, i32, i32
  }
  func.func @transform_5(%arg0: i32) -> (i32, i32, i32) {
    %c0_i32 = arith.constant 0 : i32
    %c0_i32_0 = arith.constant 0 : i32
    %c0_i32_1 = arith.constant 0 : i32
    %c0_i32_2 = arith.constant 0 : i32
    return %c0_i32, %c0_i32_0, %c0_i32_1 : i32, i32, i32
  }
  func.func @transform_6(%arg0: i32) -> (i32, i32, i32) {
    %c0_i32 = arith.constant 0 : i32
    %c0_i32_0 = arith.constant 0 : i32
    %c0_i32_1 = arith.constant 0 : i32
    %c0_i32_2 = arith.constant 0 : i32
    return %c0_i32, %c0_i32_0, %c0_i32_1 : i32, i32, i32
  }
  func.func @transform_7(%arg0: i32) -> (i32, i32, i32) {
    %c0_i32 = arith.constant 0 : i32
    %c0_i32_0 = arith.constant 0 : i32
    %c0_i32_1 = arith.constant 0 : i32
    %c0_i32_2 = arith.constant 0 : i32
    return %c0_i32, %c0_i32_0, %c0_i32_1 : i32, i32, i32
  }
  func.func @transform_8(%arg0: i32) -> (i32, i32, i32) {
    %c0_i32 = arith.constant 0 : i32
    %c0_i32_0 = arith.constant 0 : i32
    %c0_i32_1 = arith.constant 0 : i32
    %c0_i32_2 = arith.constant 0 : i32
    return %c0_i32, %c0_i32_0, %c0_i32_1 : i32, i32, i32
  }
  func.func @transform_9(%arg0: i32) -> (i32, i32, i32) {
    %c0_i32 = arith.constant 0 : i32
    %c0_i32_0 = arith.constant 0 : i32
    %c0_i32_1 = arith.constant 0 : i32
    %c0_i32_2 = arith.constant 0 : i32
    return %c0_i32, %c0_i32_0, %c0_i32_1 : i32, i32, i32
  }
  func.func @transform_10(%arg0: i32) -> (i32, i32, i32) {
    %c0_i32 = arith.constant 0 : i32
    %c0_i32_0 = arith.constant 0 : i32
    %c0_i32_1 = arith.constant 0 : i32
    %c0_i32_2 = arith.constant 0 : i32
    return %c0_i32, %c0_i32_0, %c0_i32_1 : i32, i32, i32
  }
  func.func @transform_11(%arg0: i32) -> (i32, i32, i32) {
    %c0_i32 = arith.constant 0 : i32
    %c0_i32_0 = arith.constant 0 : i32
    %c0_i32_1 = arith.constant 0 : i32
    %c0_i32_2 = arith.constant 0 : i32
    return %c0_i32, %c0_i32_0, %c0_i32_1 : i32, i32, i32
  }
  func.func @transform_12(%arg0: i32) -> (i32, i32, i32) {
    %c0_i32 = arith.constant 0 : i32
    %c0_i32_0 = arith.constant 0 : i32
    %c0_i32_1 = arith.constant 0 : i32
    %c0_i32_2 = arith.constant 0 : i32
    return %c0_i32, %c0_i32_0, %c0_i32_1 : i32, i32, i32
  }
  func.func @transform_13(%arg0: i32) -> (i32, i32, i32) {
    %c0_i32 = arith.constant 0 : i32
    %c0_i32_0 = arith.constant 0 : i32
    %c0_i32_1 = arith.constant 0 : i32
    %c0_i32_2 = arith.constant 0 : i32
    return %c0_i32, %c0_i32_0, %c0_i32_1 : i32, i32, i32
  }
  func.func @transform_14(%arg0: i32) -> (i32, i32, i32) {
    %c0_i32 = arith.constant 0 : i32
    %c0_i32_0 = arith.constant 0 : i32
    %c0_i32_1 = arith.constant 0 : i32
    return %arg0, %c0_i32, %c0_i32_0 : i32, i32, i32
  }
}

</mosaic_0001>

<llo_original>
// kernel: transformer_model_feature.1
$region0: #{transformer_model_feature.1}
  #allocation0 [shape = 'u32[]', space=smem, size = 0x4, offset = 0x4, fixed_abs, tag = 'smem constant byte address 0x4 - core index']
  #allocation1 [shape = 'u32[144,128]{1,0:T(1,128)}', space=vmem, size = 0x12000, scoped, tag = 'internal scratch']
  %s0 = inlined_call_operand.vmem [shape: f32[2,8,32], index: 0, kind: input, shape index: {}]
  %s1 = inlined_call_operand.vmem [shape: f32[8,32], index: 1, kind: input, shape index: {}]
  %s2 = inlined_call_operand.vmem [shape: bf16[2,32,96], index: 2, kind: input, shape index: {}]
  %s3 = inlined_call_operand.vmem [shape: f32[2,1,96], index: 3, kind: input, shape index: {}]
  %s4 = inlined_call_operand.vmem [shape: bf16[2,32,32], index: 4, kind: input, shape index: {}]
  %s5 = inlined_call_operand.vmem [shape: f32[2,1,32], index: 5, kind: input, shape index: {}]
  %s6 = inlined_call_operand.vmem [shape: bf16[2,32,64], index: 6, kind: input, shape index: {}]
  %s7 = inlined_call_operand.vmem [shape: f32[2,1,64], index: 7, kind: input, shape index: {}]
  %s8 = inlined_call_operand.vmem [shape: bf16[2,64,32], index: 8, kind: input, shape index: {}]
  %s9 = inlined_call_operand.vmem [shape: f32[2,1,32], index: 9, kind: input, shape index: {}]
  %s10 = inlined_call_operand.vmem [shape: f32[2,1,32], index: 10, kind: input, shape index: {}]
  %s11 = inlined_call_operand.vmem [shape: f32[2,1,32], index: 11, kind: input, shape index: {}]
  %s12 = inlined_call_operand.vmem [shape: f32[2,1,32], index: 12, kind: input, shape index: {}]
  %s13 = inlined_call_operand.vmem [shape: f32[2,1,32], index: 13, kind: input, shape index: {}]
  %s14 = inlined_call_operand.hbm [shape: f32[2,1,32], index: 14, kind: output, shape index: {}]
  %s15 = sld [smem:[#allocation0]]
  $region89: #{transformer_model_feature.1} parent=0
    _
  %s17 = ssub.s32 1, %s15
  %s18 = scalar_select 0, %s17, %s15
  $region1: #{transformer_model_feature.1} parent=0
    #allocation2 [shape = 'u8[1024]{0}', space=vmem, size = 0x400, scoped, tag = 'output window, operand 0']
    #allocation3 [shape = 's32[2]{0}', space=sflag, size = 0x8, scoped, tag = 'scoped memory for transformer_model_feature.1']
    %19 = vsyncpa [#allocation3], 0
    %s20 = scalar_lea.sflag [#allocation3], 1
    %21 = vsyncpa %s20, 0
    loop: start=0, step=1, limit=4
    $region2: #{transformer_model_feature.1} parent=1 // loop_pre_header
      _
    $region3: #{transformer_model_feature.1} parent=1 // loop_header
      %s23 = sphi 0, %s27
      %p24 = scmp.ge.s32.totalorder %s23, 4
      %s33 = sphi 0, %s35
      %s36 = sphi 0, %s33
      %s37 = sphi 0, %s36
      %s53 = sphi 0, %s37
      %s57 = sphi 0, %s57
      %s59 = sphi 0, %s57
      %s60 = sphi 0, %s59
      %s74 = sphi 0, %s60
      %s78 = sphi 0, %s78
      %s80 = sphi 0, %s78
      %s81 = sphi 0, %s80
      %s95 = sphi 0, %s81
      %s99 = sphi 0, %s99
      %s101 = sphi 0, %s99
      %s102 = sphi 0, %s101
      %s116 = sphi 0, %s102
      %s120 = sphi 0, %s120
      %s122 = sphi 0, %s120
      %s123 = sphi 0, %s122
      %s137 = sphi 0, %s123
      %s141 = sphi 0, %s141
      %s143 = sphi 0, %s141
      %s144 = sphi 0, %s143
      %s158 = sphi 0, %s144
      %s162 = sphi 0, %s162
      %s164 = sphi 0, %s162
      %s165 = sphi 0, %s164
      %s179 = sphi 0, %s165
      %s183 = sphi 0, %s183
      %s185 = sphi 0, %s183
      %s186 = sphi 0, %s185
      %s200 = sphi 0, %s186
      %s204 = sphi 0, %s204
      %s206 = sphi 0, %s204
      %s207 = sphi 0, %s206
      %s221 = sphi 0, %s207
      %s225 = sphi 0, %s225
      %s227 = sphi 0, %s225
      %s228 = sphi 0, %s227
      %s242 = sphi 0, %s228
      %s246 = sphi 0, %s246
      %s248 = sphi 0, %s246
      %s249 = sphi 0, %s248
      %s263 = sphi 0, %s249
      %s267 = sphi 0, %s267
      %s269 = sphi 0, %s267
      %s270 = sphi 0, %s269
      %s284 = sphi 0, %s270
      %s288 = sphi 0, %s288
      %s290 = sphi 0, %s288
      %s291 = sphi 0, %s290
      %s305 = sphi 0, %s291
      %s309 = sphi 0, %s309
      %s311 = sphi 0, %s309
      %s312 = sphi 0, %s311
      %s326 = sphi 0, %s312
      %s332 = sphi 0, %s334
      %s335 = sphi 0, %s332
      %s336 = sphi 0, %s335
      %s352 = sphi 0, %s336
    $region4: #{transformer_model_feature.1} parent=1 // loop_header_branch
      %26 = sbr.rel (%p24) target = $region8
    $region5: #{transformer_model_feature.1} parent=1 // loop_body
      %s28 = ssub.s32 %s23, 1
      %s29 = ssub.s32 %s23, 2
      %s30 = sadd.s32 %s23, 1
      %s31 = ssub.s32 %s23, %s30
      %p32 = scmp.eq.s32.totalorder %s31, 0
      %s34 = sadd.s32 %s33, 1
      %s35 = scalar_select %p32, %s33, %s34
      %p38 = pneg %p32
      %p39 = scmp.eq.s32.totalorder %s23, 1
      %p40 = por %p38, %p39
      %p41 = scmp.ne.s32.totalorder %s33, %s36
      %p42 = scmp.eq.s32.totalorder %s23, 0
      %p43 = por %p41, %p42
      %p44 = scmp.ne.s32.totalorder %s33, %s36
      %p45 = scmp.eq.s32.totalorder %s28, 1
      %p46 = por %p44, %p45
      %p47 = scmp.ne.s32.totalorder %s36, %s37
      %p48 = scmp.eq.s32.totalorder %s28, 0
      %p49 = por %p47, %p48
      %p50 = scmp.ne.s32.totalorder %s36, %s37
      %p51 = scmp.eq.s32.totalorder %s29, 1
      %p52 = por %p50, %p51
      %p54 = scmp.ne.s32.totalorder %s37, %s53
      %p55 = scmp.eq.s32.totalorder %s29, 0
      %p56 = por %p54, %p55
      %s58 = sadd.s32 %s57, 1
      %p61 = scmp.eq.s32.totalorder %s23, 1
      %p62 = scmp.ne.s32.totalorder %s57, %s59
      %p63 = scmp.eq.s32.totalorder %s23, 0
      %p64 = por %p62, %p63
      %p65 = scmp.ne.s32.totalorder %s57, %s59
      %p66 = scmp.eq.s32.totalorder %s28, 1
      %p67 = por %p65, %p66
      %p68 = scmp.ne.s32.totalorder %s59, %s60
      %p69 = scmp.eq.s32.totalorder %s28, 0
      %p70 = por %p68, %p69
      %p71 = scmp.ne.s32.totalorder %s59, %s60
      %p72 = scmp.eq.s32.totalorder %s29, 1
      %p73 = por %p71, %p72
      %p75 = scmp.ne.s32.totalorder %s60, %s74
      %p76 = scmp.eq.s32.totalorder %s29, 0
      %p77 = por %p75, %p76
      %s79 = sadd.s32 %s78, 1
      %p82 = scmp.eq.s32.totalorder %s23, 1
      %p83 = scmp.ne.s32.totalorder %s78, %s80
      %p84 = scmp.eq.s32.totalorder %s23, 0
      %p85 = por %p83, %p84
      %p86 = scmp.ne.s32.totalorder %s78, %s80
      %p87 = scmp.eq.s32.totalorder %s28, 1
      %p88 = por %p86, %p87
      %p89 = scmp.ne.s32.totalorder %s80, %s81
      %p90 = scmp.eq.s32.totalorder %s28, 0
      %p91 = por %p89, %p90
      %p92 = scmp.ne.s32.totalorder %s80, %s81
      %p93 = scmp.eq.s32.totalorder %s29, 1
      %p94 = por %p92, %p93
      %p96 = scmp.ne.s32.totalorder %s81, %s95
      %p97 = scmp.eq.s32.totalorder %s29, 0
      %p98 = por %p96, %p97
      %s100 = sadd.s32 %s99, 1
      %p103 = scmp.eq.s32.totalorder %s23, 1
      %p104 = scmp.ne.s32.totalorder %s99, %s101
      %p105 = scmp.eq.s32.totalorder %s23, 0
      %p106 = por %p104, %p105
      %p107 = scmp.ne.s32.totalorder %s99, %s101
      %p108 = scmp.eq.s32.totalorder %s28, 1
      %p109 = por %p107, %p108
      %p110 = scmp.ne.s32.totalorder %s101, %s102
      %p111 = scmp.eq.s32.totalorder %s28, 0
      %p112 = por %p110, %p111
      %p113 = scmp.ne.s32.totalorder %s101, %s102
      %p114 = scmp.eq.s32.totalorder %s29, 1
      %p115 = por %p113, %p114
      %p117 = scmp.ne.s32.totalorder %s102, %s116
      %p118 = scmp.eq.s32.totalorder %s29, 0
      %p119 = por %p117, %p118
      %s121 = sadd.s32 %s120, 1
      %p124 = scmp.eq.s32.totalorder %s23, 1
      %p125 = scmp.ne.s32.totalorder %s120, %s122
      %p126 = scmp.eq.s32.totalorder %s23, 0
      %p127 = por %p125, %p126
      %p128 = scmp.ne.s32.totalorder %s120, %s122
      %p129 = scmp.eq.s32.totalorder %s28, 1
      %p130 = por %p128, %p129
      %p131 = scmp.ne.s32.totalorder %s122, %s123
      %p132 = scmp.eq.s32.totalorder %s28, 0
      %p133 = por %p131, %p132
      %p134 = scmp.ne.s32.totalorder %s122, %s123
      %p135 = scmp.eq.s32.totalorder %s29, 1
      %p136 = por %p134, %p135
      %p138 = scmp.ne.s32.totalorder %s123, %s137
      %p139 = scmp.eq.s32.totalorder %s29, 0
      %p140 = por %p138, %p139
      %s142 = sadd.s32 %s141, 1
      %p145 = scmp.eq.s32.totalorder %s23, 1
      %p146 = scmp.ne.s32.totalorder %s141, %s143
      %p147 = scmp.eq.s32.totalorder %s23, 0
      %p148 = por %p146, %p147
      %p149 = scmp.ne.s32.totalorder %s141, %s143
      %p150 = scmp.eq.s32.totalorder %s28, 1
      %p151 = por %p149, %p150
      %p152 = scmp.ne.s32.totalorder %s143, %s144
      %p153 = scmp.eq.s32.totalorder %s28, 0
      %p154 = por %p152, %p153
      %p155 = scmp.ne.s32.totalorder %s143, %s144
      %p156 = scmp.eq.s32.totalorder %s29, 1
      %p157 = por %p155, %p156
      %p159 = scmp.ne.s32.totalorder %s144, %s158
      %p160 = scmp.eq.s32.totalorder %s29, 0
      %p161 = por %p159, %p160
      %s163 = sadd.s32 %s162, 1
      %p166 = scmp.eq.s32.totalorder %s23, 1
      %p167 = scmp.ne.s32.totalorder %s162, %s164
      %p168 = scmp.eq.s32.totalorder %s23, 0
      %p169 = por %p167, %p168
      %p170 = scmp.ne.s32.totalorder %s162, %s164
      %p171 = scmp.eq.s32.totalorder %s28, 1
      %p172 = por %p170, %p171
      %p173 = scmp.ne.s32.totalorder %s164, %s165
      %p174 = scmp.eq.s32.totalorder %s28, 0
      %p175 = por %p173, %p174
      %p176 = scmp.ne.s32.totalorder %s164, %s165
      %p177 = scmp.eq.s32.totalorder %s29, 1
      %p178 = por %p176, %p177
      %p180 = scmp.ne.s32.totalorder %s165, %s179
      %p181 = scmp.eq.s32.totalorder %s29, 0
      %p182 = por %p180, %p181
      %s184 = sadd.s32 %s183, 1
      %p187 = scmp.eq.s32.totalorder %s23, 1
      %p188 = scmp.ne.s32.totalorder %s183, %s185
      %p189 = scmp.eq.s32.totalorder %s23, 0
      %p190 = por %p188, %p189
      %p191 = scmp.ne.s32.totalorder %s183, %s185
      %p192 = scmp.eq.s32.totalorder %s28, 1
      %p193 = por %p191, %p192
      %p194 = scmp.ne.s32.totalorder %s185, %s186
      %p195 = scmp.eq.s32.totalorder %s28, 0
      %p196 = por %p194, %p195
      %p197 = scmp.ne.s32.totalorder %s185, %s186
      %p198 = scmp.eq.s32.totalorder %s29, 1
      %p199 = por %p197, %p198
      %p201 = scmp.ne.s32.totalorder %s186, %s200
      %p202 = scmp.eq.s32.totalorder %s29, 0
      %p203 = por %p201, %p202
      %s205 = sadd.s32 %s204, 1
      %p208 = scmp.eq.s32.totalorder %s23, 1
      %p209 = scmp.ne.s32.totalorder %s204, %s206
      %p210 = scmp.eq.s32.totalorder %s23, 0
      %p211 = por %p209, %p210
      %p212 = scmp.ne.s32.totalorder %s204, %s206
      %p213 = scmp.eq.s32.totalorder %s28, 1
      %p214 = por %p212, %p213
      %p215 = scmp.ne.s32.totalorder %s206, %s207
      %p216 = scmp.eq.s32.totalorder %s28, 0
      %p217 = por %p215, %p216
      %p218 = scmp.ne.s32.totalorder %s206, %s207
      %p219 = scmp.eq.s32.totalorder %s29, 1
      %p220 = por %p218, %p219
      %p222 = scmp.ne.s32.totalorder %s207, %s221
      %p223 = scmp.eq.s32.totalorder %s29, 0
      %p224 = por %p222, %p223
      %s226 = sadd.s32 %s225, 1
      %p229 = scmp.eq.s32.totalorder %s23, 1
      %p230 = scmp.ne.s32.totalorder %s225, %s227
      %p231 = scmp.eq.s32.totalorder %s23, 0
      %p232 = por %p230, %p231
      %p233 = scmp.ne.s32.totalorder %s225, %s227
      %p234 = scmp.eq.s32.totalorder %s28, 1
      %p235 = por %p233, %p234
      %p236 = scmp.ne.s32.totalorder %s227, %s228
      %p237 = scmp.eq.s32.totalorder %s28, 0
      %p238 = por %p236, %p237
      %p239 = scmp.ne.s32.totalorder %s227, %s228
      %p240 = scmp.eq.s32.totalorder %s29, 1
      %p241 = por %p239, %p240
      %p243 = scmp.ne.s32.totalorder %s228, %s242
      %p244 = scmp.eq.s32.totalorder %s29, 0
      %p245 = por %p243, %p244
      %s247 = sadd.s32 %s246, 1
      %p250 = scmp.eq.s32.totalorder %s23, 1
      %p251 = scmp.ne.s32.totalorder %s246, %s248
      %p252 = scmp.eq.s32.totalorder %s23, 0
      %p253 = por %p251, %p252
      %p254 = scmp.ne.s32.totalorder %s246, %s248
      %p255 = scmp.eq.s32.totalorder %s28, 1
      %p256 = por %p254, %p255
      %p257 = scmp.ne.s32.totalorder %s248, %s249
      %p258 = scmp.eq.s32.totalorder %s28, 0
      %p259 = por %p257, %p258
      %p260 = scmp.ne.s32.totalorder %s248, %s249
      %p261 = scmp.eq.s32.totalorder %s29, 1
      %p262 = por %p260, %p261
      %p264 = scmp.ne.s32.totalorder %s249, %s263
      %p265 = scmp.eq.s32.totalorder %s29, 0
      %p266 = por %p264, %p265
      %s268 = sadd.s32 %s267, 1
      %p271 = scmp.eq.s32.totalorder %s23, 1
      %p272 = scmp.ne.s32.totalorder %s267, %s269
      %p273 = scmp.eq.s32.totalorder %s23, 0
      %p274 = por %p272, %p273
      %p275 = scmp.ne.s32.totalorder %s267, %s269
      %p276 = scmp.eq.s32.totalorder %s28, 1
      %p277 = por %p275, %p276
      %p278 = scmp.ne.s32.totalorder %s269, %s270
      %p279 = scmp.eq.s32.totalorder %s28, 0
      %p280 = por %p278, %p279
      %p281 = scmp.ne.s32.totalorder %s269, %s270
      %p282 = scmp.eq.s32.totalorder %s29, 1
      %p283 = por %p281, %p282
      %p285 = scmp.ne.s32.totalorder %s270, %s284
      %p286 = scmp.eq.s32.totalorder %s29, 0
      %p287 = por %p285, %p286
      %s289 = sadd.s32 %s288, 1
      %p292 = scmp.eq.s32.totalorder %s23, 1
      %p293 = scmp.ne.s32.totalorder %s288, %s290
      %p294 = scmp.eq.s32.totalorder %s23, 0
      %p295 = por %p293, %p294
      %p296 = scmp.ne.s32.totalorder %s288, %s290
      %p297 = scmp.eq.s32.totalorder %s28, 1
      %p298 = por %p296, %p297
      %p299 = scmp.ne.s32.totalorder %s290, %s291
      %p300 = scmp.eq.s32.totalorder %s28, 0
      %p301 = por %p299, %p300
      %p302 = scmp.ne.s32.totalorder %s290, %s291
      %p303 = scmp.eq.s32.totalorder %s29, 1
      %p304 = por %p302, %p303
      %p306 = scmp.ne.s32.totalorder %s291, %s305
      %p307 = scmp.eq.s32.totalorder %s29, 0
      %p308 = por %p306, %p307
      %s310 = sadd.s32 %s309, 1
      %p313 = scmp.eq.s32.totalorder %s23, 1
      %p314 = scmp.ne.s32.totalorder %s309, %s311
      %p315 = scmp.eq.s32.totalorder %s23, 0
      %p316 = por %p314, %p315
      %p317 = scmp.ne.s32.totalorder %s309, %s311
      %p318 = scmp.eq.s32.totalorder %s28, 1
      %p319 = por %p317, %p318
      %p320 = scmp.ne.s32.totalorder %s311, %s312
      %p321 = scmp.eq.s32.totalorder %s28, 0
      %p322 = por %p320, %p321
      %p323 = scmp.ne.s32.totalorder %s311, %s312
      %p324 = scmp.eq.s32.totalorder %s29, 1
      %p325 = por %p323, %p324
      %p327 = scmp.ne.s32.totalorder %s312, %s326
      %p328 = scmp.eq.s32.totalorder %s29, 0
      %p329 = por %p327, %p328
      %s330 = ssub.s32 %s23, %s30
      %p331 = scmp.eq.s32.totalorder %s330, 0
      %s333 = sadd.s32 %s332, 1
      %s334 = scalar_select %p331, %s332, %s333
      %p337 = pneg %p331
      %p338 = scmp.eq.s32.totalorder %s23, 1
      %p339 = por %p337, %p338
      %p340 = scmp.ne.s32.totalorder %s332, %s335
      %p341 = scmp.eq.s32.totalorder %s23, 0
      %p342 = por %p340, %p341
      %p343 = scmp.ne.s32.totalorder %s332, %s335
      %p344 = scmp.eq.s32.totalorder %s28, 1
      %p345 = por %p343, %p344
      %p346 = scmp.ne.s32.totalorder %s335, %s336
      %p347 = scmp.eq.s32.totalorder %s28, 0
      %p348 = por %p346, %p347
      %p349 = scmp.ne.s32.totalorder %s335, %s336
      %p350 = scmp.eq.s32.totalorder %s29, 1
      %p351 = por %p349, %p350
      %p353 = scmp.ne.s32.totalorder %s336, %s352
      %p354 = scmp.eq.s32.totalorder %s29, 0
      %p355 = por %p353, %p354
      %p356 = scmp.le.s32.totalorder 1, %s23
      %p357 = scmp.lt.s32.totalorder %s23, 3
      %p358 = pnand %p356, %p357
      %p359 = pneg %p358
      // Predicated region
      $region9: #{transformer_model_feature.1} parent=5 // pred_check
        _
      $region10: #{transformer_model_feature.1} parent=5 // pred_check_branch
        %361 = sbr.rel (%p358) target = $region12
      $region11: #{transformer_model_feature.1} parent=5 // pred_region
        %s362 = ssub.s32 %s23, 1
        // Predicated region
        $region13: #{transformer_model_feature.1} parent=11 // pred_check
          %p363 = pneg %p70
        $region14: #{transformer_model_feature.1} parent=11 // pred_check_branch
          %365 = sbr.rel (%p363) target = $region16
        $region15: #{transformer_model_feature.1} parent=11 // pred_region
          _
        $region16: #{transformer_model_feature.1} parent=11 // pred_fallthru
          _
        // Predicated region
        $region17: #{transformer_model_feature.1} parent=11 // pred_check
          %p366 = pneg %p91
        $region18: #{transformer_model_feature.1} parent=11 // pred_check_branch
          %368 = sbr.rel (%p366) target = $region20
        $region19: #{transformer_model_feature.1} parent=11 // pred_region
          _
        $region20: #{transformer_model_feature.1} parent=11 // pred_fallthru
          _
        // Predicated region
        $region21: #{transformer_model_feature.1} parent=11 // pred_check
          %p369 = pneg %p112
        $region22: #{transformer_model_feature.1} parent=11 // pred_check_branch
          %371 = sbr.rel (%p369) target = $region24
        $region23: #{transformer_model_feature.1} parent=11 // pred_region
          _
        $region24: #{transformer_model_feature.1} parent=11 // pred_fallthru
          _
        // Predicated region
        $region25: #{transformer_model_feature.1} parent=11 // pred_check
          %p372 = pneg %p133
        $region26: #{transformer_model_feature.1} parent=11 // pred_check_branch
          %374 = sbr.rel (%p372) target = $region28
        $region27: #{transformer_model_feature.1} parent=11 // pred_region
          _
        $region28: #{transformer_model_feature.1} parent=11 // pred_fallthru
          _
        // Predicated region
        $region29: #{transformer_model_feature.1} parent=11 // pred_check
          %p375 = pneg %p154
        $region30: #{transformer_model_feature.1} parent=11 // pred_check_branch
          %377 = sbr.rel (%p375) target = $region32
        $region31: #{transformer_model_feature.1} parent=11 // pred_region
          _
        $region32: #{transformer_model_feature.1} parent=11 // pred_fallthru
          _
        // Predicated region
        $region33: #{transformer_model_feature.1} parent=11 // pred_check
          %p378 = pneg %p175
        $region34: #{transformer_model_feature.1} parent=11 // pred_check_branch
          %380 = sbr.rel (%p378) target = $region36
        $region35: #{transformer_model_feature.1} parent=11 // pred_region
          _
        $region36: #{transformer_model_feature.1} parent=11 // pred_fallthru
          _
        // Predicated region
        $region37: #{transformer_model_feature.1} parent=11 // pred_check
          %p381 = pneg %p196
        $region38: #{transformer_model_feature.1} parent=11 // pred_check_branch
          %383 = sbr.rel (%p381) target = $region40
        $region39: #{transformer_model_feature.1} parent=11 // pred_region
          _
        $region40: #{transformer_model_feature.1} parent=11 // pred_fallthru
          _
        // Predicated region
        $region41: #{transformer_model_feature.1} parent=11 // pred_check
          %p384 = pneg %p217
        $region42: #{transformer_model_feature.1} parent=11 // pred_check_branch
          %386 = sbr.rel (%p384) target = $region44
        $region43: #{transformer_model_feature.1} parent=11 // pred_region
          _
        $region44: #{transformer_model_feature.1} parent=11 // pred_fallthru
          _
        // Predicated region
        $region45: #{transformer_model_feature.1} parent=11 // pred_check
          %p387 = pneg %p238
        $region46: #{transformer_model_feature.1} parent=11 // pred_check_branch
          %389 = sbr.rel (%p387) target = $region48
        $region47: #{transformer_model_feature.1} parent=11 // pred_region
          _
        $region48: #{transformer_model_feature.1} parent=11 // pred_fallthru
          _
        // Predicated region
        $region49: #{transformer_model_feature.1} parent=11 // pred_check
          %p390 = pneg %p259
        $region50: #{transformer_model_feature.1} parent=11 // pred_check_branch
          %392 = sbr.rel (%p390) target = $region52
        $region51: #{transformer_model_feature.1} parent=11 // pred_region
          _
        $region52: #{transformer_model_feature.1} parent=11 // pred_fallthru
          _
        // Predicated region
        $region53: #{transformer_model_feature.1} parent=11 // pred_check
          %p393 = pneg %p280
        $region54: #{transformer_model_feature.1} parent=11 // pred_check_branch
          %395 = sbr.rel (%p393) target = $region56
        $region55: #{transformer_model_feature.1} parent=11 // pred_region
          _
        $region56: #{transformer_model_feature.1} parent=11 // pred_fallthru
          _
        // Predicated region
        $region57: #{transformer_model_feature.1} parent=11 // pred_check
          %p396 = pneg %p301
        $region58: #{transformer_model_feature.1} parent=11 // pred_check_branch
          %398 = sbr.rel (%p396) target = $region60
        $region59: #{transformer_model_feature.1} parent=11 // pred_region
          _
        $region60: #{transformer_model_feature.1} parent=11 // pred_fallthru
          _
        // Predicated region
        $region61: #{transformer_model_feature.1} parent=11 // pred_check
          %p399 = pneg %p322
        $region62: #{transformer_model_feature.1} parent=11 // pred_check_branch
          %401 = sbr.rel (%p399) target = $region64
        $region63: #{transformer_model_feature.1} parent=11 // pred_region
          _
        $region64: #{transformer_model_feature.1} parent=11 // pred_fallthru
          _
      $region12: #{transformer_model_feature.1} parent=5 // pred_fallthru
        _
      %p402 = scmp.lt.s32.totalorder %s23, 2
      // Predicated region
      $region65: #{transformer_model_feature.1} parent=5 // pred_check
        %p403 = pneg %p402
      $region66: #{transformer_model_feature.1} parent=5 // pred_check_branch
        %405 = sbr.rel (%p403) target = $region68
      $region67: #{transformer_model_feature.1} parent=5 // pred_region
        // Predicated region
        $region69: #{transformer_model_feature.1} parent=67 // pred_check
          %p406 = pneg %p43
        $region70: #{transformer_model_feature.1} parent=67 // pred_check_branch
          %408 = sbr.rel (%p406) target = $region72
        $region71: #{transformer_model_feature.1} parent=67 // pred_region
          %p409 = scmp.lt.s32.totalorder %s23, 1
          %s410 = scalar_select %p409, %s23, 1
          %s411 = smul.addr %s410, 8
          %s412 = scalar_lea.vmem %s0, %s411
        $region72: #{transformer_model_feature.1} parent=67 // pred_fallthru
          _
      $region68: #{transformer_model_feature.1} parent=5 // pred_fallthru
        _
      %p413 = scmp.le.s32.totalorder 1, %s23
      %p414 = scmp.lt.s32.totalorder %s23, 3
      %p415 = pnand %p413, %p414
      %p416 = pneg %p415
      // Predicated region
      $region73: #{transformer_model_feature.1} parent=5 // pred_check
        _
      $region74: #{transformer_model_feature.1} parent=5 // pred_check_branch
        %418 = sbr.rel (%p415) target = $region76
      $region75: #{transformer_model_feature.1} parent=5 // pred_region
        %s419 = ssub.s32 %s23, 1
        %p420 = scmp.lt.s32.totalorder %s28, 1
        %s421 = scalar_select %p420, %s28, 1
        %s422 = smul.addr %s421, 8
        %s423 = scalar_lea.vmem %s0, %s422
        %p424 = pneg %p49
        %p425 = pneg %p46
        %p426 = pneg %p70
        %p427 = pneg %p67
        %p428 = pneg %p91
        %p429 = pneg %p88
        %p430 = pneg %p112
        %p431 = pneg %p109
        %p432 = pneg %p133
        %p433 = pneg %p130
        %p434 = pneg %p154
        %p435 = pneg %p151
        %p436 = pneg %p175
        %p437 = pneg %p172
        %p438 = pneg %p196
        %p439 = pneg %p193
        %p440 = pneg %p217
        %p441 = pneg %p214
        %p442 = pneg %p238
        %p443 = pneg %p235
        %p444 = pneg %p259
        %p445 = pneg %p256
        %p446 = pneg %p280
        %p447 = pneg %p277
        %p448 = pneg %p301
        %p449 = pneg %p298
        %p450 = pneg %p322
        %p451 = pneg %p319
        %p452 = pneg %p348
        %p453 = pneg %p345
        %s454 = sand.u32 %s335, 1
        %s455 = scalar_lea.sflag [#allocation3], %s454
        %s456 = sand.u32 %s335, 1
        %s457 = scalar_lea.vmem [#allocation2], %s456
        %p458 = scmp.lt.s32.totalorder %s28, 1
        %s459 = scalar_select %p458, %s28, 1
        %s460 = smul.addr %s459, 8
        %s461 = scalar_lea.vmem %s0, %s460
        %v463 = vld [vmem:[%s461] sm:$0xff]
        %v464 = vld [vmem:[%s1] sm:$0xff]
        %v465 = vadd.f32 %v463, %v464
        %v466 = vpack.c.bf16 %v465, %v465
        %v467 = vld [vmem:[%s2] sm:$0xf]
        %v468 = vld [vmem:[%s2 + $0x4] sm:$0xf]
        %v469 = vld [vmem:[%s2 + $0x8] sm:$0xf]
        %v470 = vld [vmem:[%s2 + $0xc] sm:$0xf]
        %v471 = vld [vmem:[%s3] sm:$0x1]
        %v473 = vlaneseq
        %v474 = vshrl.u32 %v473, 7
        %v475 = vsub.s32 0, %v474
        %v476 = vrot.slane %v471, %v475
        %v482 = vunpack.c.l.b16 %v467
        %v483 = vunpack.c.l.b16 %v468
        %v484 = vunpack.c.l.b16 %v469
        %v485 = vunpack.c.l.b16 %v470
        %v486 = vpack.c.b16 %v483, %v482
        %v487 = vpack.c.b16 %v485, %v484
        %vm490 = vcmask 261120
        %v492 = vsel %vm490, %v466, 0
        %494 = vmatprep.subr.bf16.mxu0 0
        %495 = vmatpush1.bf16.msra.mxu0 0
        %496 = vmatprep.subr.bf16.mxu0 0
        %497 = vmatpush1.bf16.msra.mxu0 0
        %498 = vmatprep.subr.bf16.mxu0 0
        %499 = vmatpush1.bf16.msra.mxu0 0
        %500 = vmatprep.subr.bf16.mxu0 0
        %501 = vmatpush1.bf16.msra.mxu0 0
        %502 = vmatprep.subr.bf16.mxu0 0
        %503 = vmatpush1.bf16.msra.mxu0 0
        %504 = vmatprep.subr.bf16.mxu0 0
        %505 = vmatpush1.bf16.msra.mxu0 0
        %506 = vmatprep.subr.bf16.mxu0 0
        %507 = vmatpush1.bf16.msra.mxu0 %v487
        %508 = vmatprep.subr.bf16.mxu0 0
        %509 = vmatpush1.bf16.msra.mxu0 %v486
        %510 = vmatprep.subr.bf16.mxu0 0
        %511 = vmatpush2.bf16.msra.mxu0 0
        %512 = vmatprep.subr.bf16.mxu0 0
        %513 = vmatpush2.bf16.msra.mxu0 0
        %514 = vmatprep.subr.bf16.mxu0 0
        %515 = vmatpush2.bf16.msra.mxu0 0
        %516 = vmatprep.subr.bf16.mxu0 0
        %517 = vmatpush2.bf16.msra.mxu0 0
        %518 = vmatprep.subr.bf16.mxu0 0
        %519 = vmatpush2.bf16.msra.mxu0 0
        %520 = vmatprep.subr.bf16.mxu0 0
        %521 = vmatpush2.bf16.msra.mxu0 0
        %522 = vmatprep.subr.bf16.mxu0 0
        %523 = vmatpush2.bf16.msra.mxu0 0
        %524 = vmatprep.subr.bf16.mxu0 0
        %525 = vmatpush2.bf16.msra.mxu0 0
        %526 = vmatprep.mubr.bf16.mxu0 0
        %527 = vmatmul.mubr.bf16.gmra.mxu0 %v492
        %v528 = vpop.f32.mrf.mxu0
        %v529 = vadd.f32 %v476, %v528
        %v530 = vpop.f32.mrf.mxu0
        %v531 = vpop.f32.mrf.mxu0
        %v532 = vpop.f32.mrf.mxu0
        %533 = vdwg.mxu0
        %535 = vrot.lane.b32.xlu0 %v529, 120
        %v536 = vpop.permute.xlu0 %535
        %538 = vrot.lane.b32.xlu0 %v529, 112
        %v539 = vpop.permute.xlu0 %538
        %541 = vrot.lane.b32.xlu0 %v529, 104
        %v542 = vpop.permute.xlu0 %541
        %v544 = vcombine.low %v529, %v539
        %v545 = vcombine.high %v529, %v539
        %v547 = vunpack.c.l.s4 1983009808
        %v548 = vunpack.c.0.s8 %v547
        %v549 = vlaneseq
        %v550 = vshrl.u32 %v549, 7
        %v551 = vsub.s32 %v548, %v550
        %v552 = vrot.slane %v544, %v551
        %v554 = vunpack.c.l.s4 1983009808
        %v555 = vunpack.c.0.s8 %v554
        %v556 = vlaneseq
        %v557 = vshrl.u32 %v556, 7
        %v558 = vsub.s32 %v555, %v557
        %v559 = vrot.slane %v545, %v558
        %v560 = vcombine.low %v536, %v542
        %v561 = vcombine.high %v536, %v542
        %v563 = vunpack.c.l.s4 1983009808
        %v564 = vunpack.c.0.s8 %v563
        %v565 = vlaneseq
        %v566 = vshrl.u32 %v565, 7
        %v567 = vsub.s32 %v564, %v566
        %v568 = vrot.slane %v560, %v567
        %v570 = vunpack.c.l.s4 1983009808
        %v571 = vunpack.c.0.s8 %v570
        %v572 = vlaneseq
        %v573 = vshrl.u32 %v572, 7
        %v574 = vsub.s32 %v571, %v573
        %v575 = vrot.slane %v561, %v574
        %v576 = vcombine.low %v552, %v568
        %v577 = vcombine.high %v552, %v568
        %v579 = vunpack.c.l.s4 1934713408
        %v580 = vunpack.c.0.s8 %v579
        %v581 = vlaneseq
        %v582 = vshrl.u32 %v581, 7
        %v583 = vsub.s32 %v580, %v582
        %v584 = vrot.slane %v576, %v583
        %v586 = vunpack.c.l.s4 1934713408
        %v587 = vunpack.c.0.s8 %v586
        %v588 = vlaneseq
        %v589 = vshrl.u32 %v588, 7
        %v590 = vsub.s32 %v587, %v589
        %v591 = vrot.slane %v577, %v590
        %v592 = vcombine.low %v559, %v575
        %v593 = vcombine.high %v559, %v575
        %v595 = vunpack.c.l.s4 1934713408
        %v596 = vunpack.c.0.s8 %v595
        %v597 = vlaneseq
        %v598 = vshrl.u32 %v597, 7
        %v599 = vsub.s32 %v596, %v598
        %v600 = vrot.slane %v592, %v599
        %v602 = vunpack.c.l.s4 1934713408
        %v603 = vunpack.c.0.s8 %v602
        %v604 = vlaneseq
        %v605 = vshrl.u32 %v604, 7
        %v606 = vsub.s32 %v603, %v605
        %v607 = vrot.slane %v593, %v606
        %v608 = vcombine.high %v584, 0.0
        %v609 = vcombine.high %v591, 0.0
        %v610 = vcombine.high %v600, 0.0
        %v611 = vcombine.high %v607, 0.0
        %v612 = vcombine.low %v584, %v591
        %v614 = vunpack.c.l.s4 1983009808
        %v615 = vunpack.c.0.s8 %v614
        %v616 = vlaneseq
        %v617 = vshrl.u32 %v616, 7
        %v618 = vsub.s32 %v615, %v617
        %v619 = vrot.slane %v612, %v618
        %v620 = vcombine.low %v608, %v609
        %v622 = vunpack.c.l.s4 1983009808
        %v623 = vunpack.c.0.s8 %v622
        %v624 = vlaneseq
        %v625 = vshrl.u32 %v624, 7
        %v626 = vsub.s32 %v623, %v625
        %v627 = vrot.slane %v620, %v626
        %v628 = vcombine.low %v600, %v607
        %v630 = vunpack.c.l.s4 1983009808
        %v631 = vunpack.c.0.s8 %v630
        %v632 = vlaneseq
        %v633 = vshrl.u32 %v632, 7
        %v634 = vsub.s32 %v631, %v633
        %v635 = vrot.slane %v628, %v634
        %v636 = vcombine.low %v610, %v611
        %v638 = vunpack.c.l.s4 1983009808
        %v639 = vunpack.c.0.s8 %v638
        %v640 = vlaneseq
        %v641 = vshrl.u32 %v640, 7
        %v642 = vsub.s32 %v639, %v641
        %v643 = vrot.slane %v636, %v642
        %v644 = vcombine.low %v619, %v627
        %v645 = vcombine.high %v619, %v627
        %v647 = vunpack.c.l.s4 1934713408
        %v648 = vunpack.c.0.s8 %v647
        %v649 = vlaneseq
        %v650 = vshrl.u32 %v649, 7
        %v651 = vsub.s32 %v648, %v650
        %v652 = vrot.slane %v644, %v651
        %v654 = vunpack.c.l.s4 1934713408
        %v655 = vunpack.c.0.s8 %v654
        %v656 = vlaneseq
        %v657 = vshrl.u32 %v656, 7
        %v658 = vsub.s32 %v655, %v657
        %v659 = vrot.slane %v645, %v658
        %v660 = vcombine.low %v635, %v643
        %v661 = vcombine.high %v635, %v643
        %v663 = vunpack.c.l.s4 1934713408
        %v664 = vunpack.c.0.s8 %v663
        %v665 = vlaneseq
        %v666 = vshrl.u32 %v665, 7
        %v667 = vsub.s32 %v664, %v666
        %v668 = vrot.slane %v660, %v667
        %v670 = vunpack.c.l.s4 1934713408
        %v671 = vunpack.c.0.s8 %v670
        %v672 = vlaneseq
        %v673 = vshrl.u32 %v672, 7
        %v674 = vsub.s32 %v671, %v673
        %v675 = vrot.slane %v661, %v674
        %v676 = vcombine.low %v652, %v668
        %v677 = vcombine.high %v652, %v668
        %v678 = vcombine.low %v659, %v675
        %v679 = vcombine.high %v659, %v675
        %680 = vrot.lane.b32.xlu0 %v529, 96
        %v681 = vpop.permute.xlu0 %680
        %682 = vrot.lane.b32.xlu0 %v536, 96
        %v683 = vpop.permute.xlu0 %682
        %684 = vrot.lane.b32.xlu0 %v539, 96
        %v685 = vpop.permute.xlu0 %684
        %686 = vrot.lane.b32.xlu0 %v542, 96
        %v687 = vpop.permute.xlu0 %686
        %v692 = vcombine.low %v681, %v685
        %v693 = vcombine.high %v681, %v685
        %v695 = vunpack.c.l.s4 1983009808
        %v696 = vunpack.c.0.s8 %v695
        %v697 = vlaneseq
        %v698 = vshrl.u32 %v697, 7
        %v699 = vsub.s32 %v696, %v698
        %v700 = vrot.slane %v692, %v699
        %v702 = vunpack.c.l.s4 1983009808
        %v703 = vunpack.c.0.s8 %v702
        %v704 = vlaneseq
        %v705 = vshrl.u32 %v704, 7
        %v706 = vsub.s32 %v703, %v705
        %v707 = vrot.slane %v693, %v706
        %v708 = vcombine.low %v683, %v687
        %v709 = vcombine.high %v683, %v687
        %v711 = vunpack.c.l.s4 1983009808
        %v712 = vunpack.c.0.s8 %v711
        %v713 = vlaneseq
        %v714 = vshrl.u32 %v713, 7
        %v715 = vsub.s32 %v712, %v714
        %v716 = vrot.slane %v708, %v715
        %v718 = vunpack.c.l.s4 1983009808
        %v719 = vunpack.c.0.s8 %v718
        %v720 = vlaneseq
        %v721 = vshrl.u32 %v720, 7
        %v722 = vsub.s32 %v719, %v721
        %v723 = vrot.slane %v709, %v722
        %v724 = vcombine.low %v700, %v716
        %v725 = vcombine.high %v700, %v716
        %v727 = vunpack.c.l.s4 1934713408
        %v728 = vunpack.c.0.s8 %v727
        %v729 = vlaneseq
        %v730 = vshrl.u32 %v729, 7
        %v731 = vsub.s32 %v728, %v730
        %v732 = vrot.slane %v724, %v731
        %v734 = vunpack.c.l.s4 1934713408
        %v735 = vunpack.c.0.s8 %v734
        %v736 = vlaneseq
        %v737 = vshrl.u32 %v736, 7
        %v738 = vsub.s32 %v735, %v737
        %v739 = vrot.slane %v725, %v738
        %v740 = vcombine.low %v707, %v723
        %v741 = vcombine.high %v707, %v723
        %v743 = vunpack.c.l.s4 1934713408
        %v744 = vunpack.c.0.s8 %v743
        %v745 = vlaneseq
        %v746 = vshrl.u32 %v745, 7
        %v747 = vsub.s32 %v744, %v746
        %v748 = vrot.slane %v740, %v747
        %v750 = vunpack.c.l.s4 1934713408
        %v751 = vunpack.c.0.s8 %v750
        %v752 = vlaneseq
        %v753 = vshrl.u32 %v752, 7
        %v754 = vsub.s32 %v751, %v753
        %v755 = vrot.slane %v741, %v754
        %v756 = vcombine.high %v732, 0.0
        %v757 = vcombine.high %v739, 0.0
        %v758 = vcombine.high %v748, 0.0
        %v759 = vcombine.high %v755, 0.0
        %v760 = vcombine.low %v732, %v739
        %v762 = vunpack.c.l.s4 1983009808
        %v763 = vunpack.c.0.s8 %v762
        %v764 = vlaneseq
        %v765 = vshrl.u32 %v764, 7
        %v766 = vsub.s32 %v763, %v765
        %v767 = vrot.slane %v760, %v766
        %v768 = vcombine.low %v756, %v757
        %v770 = vunpack.c.l.s4 1983009808
        %v771 = vunpack.c.0.s8 %v770
        %v772 = vlaneseq
        %v773 = vshrl.u32 %v772, 7
        %v774 = vsub.s32 %v771, %v773
        %v775 = vrot.slane %v768, %v774
        %v776 = vcombine.low %v748, %v755
        %v778 = vunpack.c.l.s4 1983009808
        %v779 = vunpack.c.0.s8 %v778
        %v780 = vlaneseq
        %v781 = vshrl.u32 %v780, 7
        %v782 = vsub.s32 %v779, %v781
        %v783 = vrot.slane %v776, %v782
        %v784 = vcombine.low %v758, %v759
        %v786 = vunpack.c.l.s4 1983009808
        %v787 = vunpack.c.0.s8 %v786
        %v788 = vlaneseq
        %v789 = vshrl.u32 %v788, 7
        %v790 = vsub.s32 %v787, %v789
        %v791 = vrot.slane %v784, %v790
        %v792 = vcombine.low %v767, %v775
        %v793 = vcombine.high %v767, %v775
        %v795 = vunpack.c.l.s4 1934713408
        %v796 = vunpack.c.0.s8 %v795
        %v797 = vlaneseq
        %v798 = vshrl.u32 %v797, 7
        %v799 = vsub.s32 %v796, %v798
        %v800 = vrot.slane %v792, %v799
        %v802 = vunpack.c.l.s4 1934713408
        %v803 = vunpack.c.0.s8 %v802
        %v804 = vlaneseq
        %v805 = vshrl.u32 %v804, 7
        %v806 = vsub.s32 %v803, %v805
        %v807 = vrot.slane %v793, %v806
        %v808 = vcombine.low %v783, %v791
        %v809 = vcombine.high %v783, %v791
        %v811 = vunpack.c.l.s4 1934713408
        %v812 = vunpack.c.0.s8 %v811
        %v813 = vlaneseq
        %v814 = vshrl.u32 %v813, 7
        %v815 = vsub.s32 %v812, %v814
        %v816 = vrot.slane %v808, %v815
        %v818 = vunpack.c.l.s4 1934713408
        %v819 = vunpack.c.0.s8 %v818
        %v820 = vlaneseq
        %v821 = vshrl.u32 %v820, 7
        %v822 = vsub.s32 %v819, %v821
        %v823 = vrot.slane %v809, %v822
        %v824 = vcombine.low %v800, %v816
        %v825 = vcombine.high %v800, %v816
        %v826 = vcombine.low %v807, %v823
        %v827 = vcombine.high %v807, %v823
        %828 = vrot.lane.b32.xlu0 %v529, 64
        %v829 = vpop.permute.xlu0 %828
        %830 = vrot.lane.b32.xlu0 %v536, 64
        %v831 = vpop.permute.xlu0 %830
        %832 = vrot.lane.b32.xlu0 %v539, 64
        %v833 = vpop.permute.xlu0 %832
        %834 = vrot.lane.b32.xlu0 %v542, 64
        %v835 = vpop.permute.xlu0 %834
        %v840 = vcombine.low %v829, %v833
        %v841 = vcombine.high %v829, %v833
        %v843 = vunpack.c.l.s4 1983009808
        %v844 = vunpack.c.0.s8 %v843
        %v845 = vlaneseq
        %v846 = vshrl.u32 %v845, 7
        %v847 = vsub.s32 %v844, %v846
        %v848 = vrot.slane %v840, %v847
        %v850 = vunpack.c.l.s4 1983009808
        %v851 = vunpack.c.0.s8 %v850
        %v852 = vlaneseq
        %v853 = vshrl.u32 %v852, 7
        %v854 = vsub.s32 %v851, %v853
        %v855 = vrot.slane %v841, %v854
        %v856 = vcombine.low %v831, %v835
        %v857 = vcombine.high %v831, %v835
        %v859 = vunpack.c.l.s4 1983009808
        %v860 = vunpack.c.0.s8 %v859
        %v861 = vlaneseq
        %v862 = vshrl.u32 %v861, 7
        %v863 = vsub.s32 %v860, %v862
        %v864 = vrot.slane %v856, %v863
        %v866 = vunpack.c.l.s4 1983009808
        %v867 = vunpack.c.0.s8 %v866
        %v868 = vlaneseq
        %v869 = vshrl.u32 %v868, 7
        %v870 = vsub.s32 %v867, %v869
        %v871 = vrot.slane %v857, %v870
        %v872 = vcombine.low %v848, %v864
        %v873 = vcombine.high %v848, %v864
        %v875 = vunpack.c.l.s4 1934713408
        %v876 = vunpack.c.0.s8 %v875
        %v877 = vlaneseq
        %v878 = vshrl.u32 %v877, 7
        %v879 = vsub.s32 %v876, %v878
        %v880 = vrot.slane %v872, %v879
        %v882 = vunpack.c.l.s4 1934713408
        %v883 = vunpack.c.0.s8 %v882
        %v884 = vlaneseq
        %v885 = vshrl.u32 %v884, 7
        %v886 = vsub.s32 %v883, %v885
        %v887 = vrot.slane %v873, %v886
        %v888 = vcombine.low %v855, %v871
        %v889 = vcombine.high %v855, %v871
        %v891 = vunpack.c.l.s4 1934713408
        %v892 = vunpack.c.0.s8 %v891
        %v893 = vlaneseq
        %v894 = vshrl.u32 %v893, 7
        %v895 = vsub.s32 %v892, %v894
        %v896 = vrot.slane %v888, %v895
        %v898 = vunpack.c.l.s4 1934713408
        %v899 = vunpack.c.0.s8 %v898
        %v900 = vlaneseq
        %v901 = vshrl.u32 %v900, 7
        %v902 = vsub.s32 %v899, %v901
        %v903 = vrot.slane %v889, %v902
        %v904 = vcombine.high %v880, 0.0
        %v905 = vcombine.high %v887, 0.0
        %v906 = vcombine.high %v896, 0.0
        %v907 = vcombine.high %v903, 0.0
        %v908 = vcombine.low %v880, %v887
        %v910 = vunpack.c.l.s4 1983009808
        %v911 = vunpack.c.0.s8 %v910
        %v912 = vlaneseq
        %v913 = vshrl.u32 %v912, 7
        %v914 = vsub.s32 %v911, %v913
        %v915 = vrot.slane %v908, %v914
        %v916 = vcombine.low %v904, %v905
        %v918 = vunpack.c.l.s4 1983009808
        %v919 = vunpack.c.0.s8 %v918
        %v920 = vlaneseq
        %v921 = vshrl.u32 %v920, 7
        %v922 = vsub.s32 %v919, %v921
        %v923 = vrot.slane %v916, %v922
        %v924 = vcombine.low %v896, %v903
        %v926 = vunpack.c.l.s4 1983009808
        %v927 = vunpack.c.0.s8 %v926
        %v928 = vlaneseq
        %v929 = vshrl.u32 %v928, 7
        %v930 = vsub.s32 %v927, %v929
        %v931 = vrot.slane %v924, %v930
        %v932 = vcombine.low %v906, %v907
        %v934 = vunpack.c.l.s4 1983009808
        %v935 = vunpack.c.0.s8 %v934
        %v936 = vlaneseq
        %v937 = vshrl.u32 %v936, 7
        %v938 = vsub.s32 %v935, %v937
        %v939 = vrot.slane %v932, %v938
        %v940 = vcombine.low %v915, %v923
        %v941 = vcombine.high %v915, %v923
        %v943 = vunpack.c.l.s4 1934713408
        %v944 = vunpack.c.0.s8 %v943
        %v945 = vlaneseq
        %v946 = vshrl.u32 %v945, 7
        %v947 = vsub.s32 %v944, %v946
        %v948 = vrot.slane %v940, %v947
        %v950 = vunpack.c.l.s4 1934713408
        %v951 = vunpack.c.0.s8 %v950
        %v952 = vlaneseq
        %v953 = vshrl.u32 %v952, 7
        %v954 = vsub.s32 %v951, %v953
        %v955 = vrot.slane %v941, %v954
        %v956 = vcombine.low %v931, %v939
        %v957 = vcombine.high %v931, %v939
        %v959 = vunpack.c.l.s4 1934713408
        %v960 = vunpack.c.0.s8 %v959
        %v961 = vlaneseq
        %v962 = vshrl.u32 %v961, 7
        %v963 = vsub.s32 %v960, %v962
        %v964 = vrot.slane %v956, %v963
        %v966 = vunpack.c.l.s4 1934713408
        %v967 = vunpack.c.0.s8 %v966
        %v968 = vlaneseq
        %v969 = vshrl.u32 %v968, 7
        %v970 = vsub.s32 %v967, %v969
        %v971 = vrot.slane %v957, %v970
        %v972 = vcombine.low %v948, %v964
        %v973 = vcombine.high %v948, %v964
        %v974 = vcombine.low %v955, %v971
        %v975 = vcombine.high %v955, %v971
        %vm976 = vcmask 64512
        %v978 = vsel %vm976, %v676, 0
        %v981 = vsel %vm976, %v824, 0
        %983 = vmatprep.subr.mxu0 0.0
        %984 = vmatpush1.xpose.msra.mxu0 0.0
        %985 = vmatprep.subr.mxu0 0.0
        %986 = vmatpush1.xpose.msra.mxu0 0.0
        %987 = vmatprep.subr.mxu0 0.0
        %988 = vmatpush1.xpose.msra.mxu0 0.0
        %989 = vmatprep.subr.mxu0 0.0
        %990 = vmatpush1.xpose.msra.mxu0 0.0
        %991 = vmatprep.subr.mxu0 0.0
        %992 = vmatpush1.xpose.msra.mxu0 0.0
        %993 = vmatprep.subr.mxu0 0.0
        %994 = vmatpush1.xpose.msra.mxu0 0.0
        %995 = vmatprep.subr.mxu0 0.0
        %996 = vmatpush1.xpose.msra.mxu0 0.0
        %997 = vmatprep.subr.mxu0 0.0
        %998 = vmatpush1.xpose.msra.mxu0 0.0
        %999 = vmatprep.subr.mxu0 0.0
        %1000 = vmatpush1.xpose.msra.mxu0 0.0
        %1001 = vmatprep.subr.mxu0 0.0
        %1002 = vmatpush1.xpose.msra.mxu0 0.0
        %1003 = vmatprep.subr.mxu0 0.0
        %1004 = vmatpush1.xpose.msra.mxu0 0.0
        %1005 = vmatprep.subr.mxu0 0.0
        %1006 = vmatpush1.xpose.msra.mxu0 0.0
        %1007 = vmatprep.subr.mxu0 0.0
        %1008 = vmatpush1.xpose.msra.mxu0 0.0
        %1009 = vmatprep.subr.mxu0 0.0
        %1010 = vmatpush1.xpose.msra.mxu0 0.0
        %1011 = vmatprep.subr.mxu0 0.0
        %1012 = vmatpush1.xpose.msra.mxu0 0.0
        %1013 = vmatprep.subr.mxu0 0.0
        %1014 = vmatpush1.xpose.msra.mxu0 %v981
        %1015 = vmatprep.subr.mxu0 0.0
        %1016 = vmatpush2.xpose.msra.mxu0 0.0
        %1017 = vmatprep.subr.mxu0 0.0
        %1018 = vmatpush2.xpose.msra.mxu0 0.0
        %1019 = vmatprep.subr.mxu0 0.0
        %1020 = vmatpush2.xpose.msra.mxu0 0.0
        %1021 = vmatprep.subr.mxu0 0.0
        %1022 = vmatpush2.xpose.msra.mxu0 0.0
        %1023 = vmatprep.subr.mxu0 0.0
        %1024 = vmatpush2.xpose.msra.mxu0 0.0
        %1025 = vmatprep.subr.mxu0 0.0
        %1026 = vmatpush2.xpose.msra.mxu0 0.0
        %1027 = vmatprep.subr.mxu0 0.0
        %1028 = vmatpush2.xpose.msra.mxu0 0.0
        %1029 = vmatprep.subr.mxu0 0.0
        %1030 = vmatpush2.xpose.msra.mxu0 0.0
        %1031 = vmatprep.subr.mxu0 0.0
        %1032 = vmatpush2.xpose.msra.mxu0 0.0
        %1033 = vmatprep.subr.mxu0 0.0
        %1034 = vmatpush2.xpose.msra.mxu0 0.0
        %1035 = vmatprep.subr.mxu0 0.0
        %1036 = vmatpush2.xpose.msra.mxu0 0.0
        %1037 = vmatprep.subr.mxu0 0.0
        %1038 = vmatpush2.xpose.msra.mxu0 0.0
        %1039 = vmatprep.subr.mxu0 0.0
        %1040 = vmatpush2.xpose.msra.mxu0 0.0
        %1041 = vmatprep.subr.mxu0 0.0
        %1042 = vmatpush2.xpose.msra.mxu0 0.0
        %1043 = vmatprep.subr.mxu0 0.0
        %1044 = vmatpush2.xpose.msra.mxu0 0.0
        %1045 = vmatprep.subr.mxu0 0.0
        %1046 = vmatpush2.xpose.msra.mxu0 0.0
        %1047 = vmatprep.mubr.f32.mxu0 0.0
        %1048 = vmatmul.mubr.f32.gmra.mxu0 %v978
        %v1049 = vpop.f32.mrf.mxu0
        %v1050 = vadd.f32 0.0, %v1049
        %v1051 = vpop.f32.mrf.mxu0
        %1052 = vdwg.mxu0
        %v1054 = vsel %vm976, %v677, 0
        %v1057 = vsel %vm976, %v825, 0
        %1059 = vmatprep.subr.mxu0 0.0
        %1060 = vmatpush1.xpose.msra.mxu0 0.0
        %1061 = vmatprep.subr.mxu0 0.0
        %1062 = vmatpush1.xpose.msra.mxu0 0.0
        %1063 = vmatprep.subr.mxu0 0.0
        %1064 = vmatpush1.xpose.msra.mxu0 0.0
        %1065 = vmatprep.subr.mxu0 0.0
        %1066 = vmatpush1.xpose.msra.mxu0 0.0
        %1067 = vmatprep.subr.mxu0 0.0
        %1068 = vmatpush1.xpose.msra.mxu0 0.0
        %1069 = vmatprep.subr.mxu0 0.0
        %1070 = vmatpush1.xpose.msra.mxu0 0.0
        %1071 = vmatprep.subr.mxu0 0.0
        %1072 = vmatpush1.xpose.msra.mxu0 0.0
        %1073 = vmatprep.subr.mxu0 0.0
        %1074 = vmatpush1.xpose.msra.mxu0 0.0
        %1075 = vmatprep.subr.mxu0 0.0
        %1076 = vmatpush1.xpose.msra.mxu0 0.0
        %1077 = vmatprep.subr.mxu0 0.0
        %1078 = vmatpush1.xpose.msra.mxu0 0.0
        %1079 = vmatprep.subr.mxu0 0.0
        %1080 = vmatpush1.xpose.msra.mxu0 0.0
        %1081 = vmatprep.subr.mxu0 0.0
        %1082 = vmatpush1.xpose.msra.mxu0 0.0
        %1083 = vmatprep.subr.mxu0 0.0
        %1084 = vmatpush1.xpose.msra.mxu0 0.0
        %1085 = vmatprep.subr.mxu0 0.0
        %1086 = vmatpush1.xpose.msra.mxu0 0.0
        %1087 = vmatprep.subr.mxu0 0.0
        %1088 = vmatpush1.xpose.msra.mxu0 0.0
        %1089 = vmatprep.subr.mxu0 0.0
        %1090 = vmatpush1.xpose.msra.mxu0 %v1057
        %1091 = vmatprep.subr.mxu0 0.0
        %1092 = vmatpush2.xpose.msra.mxu0 0.0
        %1093 = vmatprep.subr.mxu0 0.0
        %1094 = vmatpush2.xpose.msra.mxu0 0.0
        %1095 = vmatprep.subr.mxu0 0.0
        %1096 = vmatpush2.xpose.msra.mxu0 0.0
        %1097 = vmatprep.subr.mxu0 0.0
        %1098 = vmatpush2.xpose.msra.mxu0 0.0
        %1099 = vmatprep.subr.mxu0 0.0
        %1100 = vmatpush2.xpose.msra.mxu0 0.0
        %1101 = vmatprep.subr.mxu0 0.0
        %1102 = vmatpush2.xpose.msra.mxu0 0.0
        %1103 = vmatprep.subr.mxu0 0.0
        %1104 = vmatpush2.xpose.msra.mxu0 0.0
        %1105 = vmatprep.subr.mxu0 0.0
        %1106 = vmatpush2.xpose.msra.mxu0 0.0
        %1107 = vmatprep.subr.mxu0 0.0
        %1108 = vmatpush2.xpose.msra.mxu0 0.0
        %1109 = vmatprep.subr.mxu0 0.0
        %1110 = vmatpush2.xpose.msra.mxu0 0.0
        %1111 = vmatprep.subr.mxu0 0.0
        %1112 = vmatpush2.xpose.msra.mxu0 0.0
        %1113 = vmatprep.subr.mxu0 0.0
        %1114 = vmatpush2.xpose.msra.mxu0 0.0
        %1115 = vmatprep.subr.mxu0 0.0
        %1116 = vmatpush2.xpose.msra.mxu0 0.0
        %1117 = vmatprep.subr.mxu0 0.0
        %1118 = vmatpush2.xpose.msra.mxu0 0.0
        %1119 = vmatprep.subr.mxu0 0.0
        %1120 = vmatpush2.xpose.msra.mxu0 0.0
        %1121 = vmatprep.subr.mxu0 0.0
        %1122 = vmatpush2.xpose.msra.mxu0 0.0
        %1123 = vmatprep.mubr.f32.mxu0 0.0
        %1124 = vmatmul.mubr.f32.gmra.mxu0 %v1054
        %v1125 = vpop.f32.mrf.mxu0
        %v1126 = vadd.f32 0.0, %v1125
        %v1127 = vpop.f32.mrf.mxu0
        %1128 = vdwg.mxu0
        %v1130 = vsel %vm976, %v678, 0
        %v1133 = vsel %vm976, %v826, 0
        %1135 = vmatprep.subr.mxu0 0.0
        %1136 = vmatpush1.xpose.msra.mxu0 0.0
        %1137 = vmatprep.subr.mxu0 0.0
        %1138 = vmatpush1.xpose.msra.mxu0 0.0
        %1139 = vmatprep.subr.mxu0 0.0
        %1140 = vmatpush1.xpose.msra.mxu0 0.0
        %1141 = vmatprep.subr.mxu0 0.0
        %1142 = vmatpush1.xpose.msra.mxu0 0.0
        %1143 = vmatprep.subr.mxu0 0.0
        %1144 = vmatpush1.xpose.msra.mxu0 0.0
        %1145 = vmatprep.subr.mxu0 0.0
        %1146 = vmatpush1.xpose.msra.mxu0 0.0
        %1147 = vmatprep.subr.mxu0 0.0
        %1148 = vmatpush1.xpose.msra.mxu0 0.0
        %1149 = vmatprep.subr.mxu0 0.0
        %1150 = vmatpush1.xpose.msra.mxu0 0.0
        %1151 = vmatprep.subr.mxu0 0.0
        %1152 = vmatpush1.xpose.msra.mxu0 0.0
        %1153 = vmatprep.subr.mxu0 0.0
        %1154 = vmatpush1.xpose.msra.mxu0 0.0
        %1155 = vmatprep.subr.mxu0 0.0
        %1156 = vmatpush1.xpose.msra.mxu0 0.0
        %1157 = vmatprep.subr.mxu0 0.0
        %1158 = vmatpush1.xpose.msra.mxu0 0.0
        %1159 = vmatprep.subr.mxu0 0.0
        %1160 = vmatpush1.xpose.msra.mxu0 0.0
        %1161 = vmatprep.subr.mxu0 0.0
        %1162 = vmatpush1.xpose.msra.mxu0 0.0
        %1163 = vmatprep.subr.mxu0 0.0
        %1164 = vmatpush1.xpose.msra.mxu0 0.0
        %1165 = vmatprep.subr.mxu0 0.0
        %1166 = vmatpush1.xpose.msra.mxu0 %v1133
        %1167 = vmatprep.subr.mxu0 0.0
        %1168 = vmatpush2.xpose.msra.mxu0 0.0
        %1169 = vmatprep.subr.mxu0 0.0
        %1170 = vmatpush2.xpose.msra.mxu0 0.0
        %1171 = vmatprep.subr.mxu0 0.0
        %1172 = vmatpush2.xpose.msra.mxu0 0.0
        %1173 = vmatprep.subr.mxu0 0.0
        %1174 = vmatpush2.xpose.msra.mxu0 0.0
        %1175 = vmatprep.subr.mxu0 0.0
        %1176 = vmatpush2.xpose.msra.mxu0 0.0
        %1177 = vmatprep.subr.mxu0 0.0
        %1178 = vmatpush2.xpose.msra.mxu0 0.0
        %1179 = vmatprep.subr.mxu0 0.0
        %1180 = vmatpush2.xpose.msra.mxu0 0.0
        %1181 = vmatprep.subr.mxu0 0.0
        %1182 = vmatpush2.xpose.msra.mxu0 0.0
        %1183 = vmatprep.subr.mxu0 0.0
        %1184 = vmatpush2.xpose.msra.mxu0 0.0
        %1185 = vmatprep.subr.mxu0 0.0
        %1186 = vmatpush2.xpose.msra.mxu0 0.0
        %1187 = vmatprep.subr.mxu0 0.0
        %1188 = vmatpush2.xpose.msra.mxu0 0.0
        %1189 = vmatprep.subr.mxu0 0.0
        %1190 = vmatpush2.xpose.msra.mxu0 0.0
        %1191 = vmatprep.subr.mxu0 0.0
        %1192 = vmatpush2.xpose.msra.mxu0 0.0
        %1193 = vmatprep.subr.mxu0 0.0
        %1194 = vmatpush2.xpose.msra.mxu0 0.0
        %1195 = vmatprep.subr.mxu0 0.0
        %1196 = vmatpush2.xpose.msra.mxu0 0.0
        %1197 = vmatprep.subr.mxu0 0.0
        %1198 = vmatpush2.xpose.msra.mxu0 0.0
        %1199 = vmatprep.mubr.f32.mxu0 0.0
        %1200 = vmatmul.mubr.f32.gmra.mxu0 %v1130
        %v1201 = vpop.f32.mrf.mxu0
        %v1202 = vadd.f32 0.0, %v1201
        %v1203 = vpop.f32.mrf.mxu0
        %1204 = vdwg.mxu0
        %v1206 = vsel %vm976, %v679, 0
        %v1209 = vsel %vm976, %v827, 0
        %1211 = vmatprep.subr.mxu0 0.0
        %1212 = vmatpush1.xpose.msra.mxu0 0.0
        %1213 = vmatprep.subr.mxu0 0.0
        %1214 = vmatpush1.xpose.msra.mxu0 0.0
        %1215 = vmatprep.subr.mxu0 0.0
        %1216 = vmatpush1.xpose.msra.mxu0 0.0
        %1217 = vmatprep.subr.mxu0 0.0
        %1218 = vmatpush1.xpose.msra.mxu0 0.0
        %1219 = vmatprep.subr.mxu0 0.0
        %1220 = vmatpush1.xpose.msra.mxu0 0.0
        %1221 = vmatprep.subr.mxu0 0.0
        %1222 = vmatpush1.xpose.msra.mxu0 0.0
        %1223 = vmatprep.subr.mxu0 0.0
        %1224 = vmatpush1.xpose.msra.mxu0 0.0
        %1225 = vmatprep.subr.mxu0 0.0
        %1226 = vmatpush1.xpose.msra.mxu0 0.0
        %1227 = vmatprep.subr.mxu0 0.0
        %1228 = vmatpush1.xpose.msra.mxu0 0.0
        %1229 = vmatprep.subr.mxu0 0.0
        %1230 = vmatpush1.xpose.msra.mxu0 0.0
        %1231 = vmatprep.subr.mxu0 0.0
        %1232 = vmatpush1.xpose.msra.mxu0 0.0
        %1233 = vmatprep.subr.mxu0 0.0
        %1234 = vmatpush1.xpose.msra.mxu0 0.0
        %1235 = vmatprep.subr.mxu0 0.0
        %1236 = vmatpush1.xpose.msra.mxu0 0.0
        %1237 = vmatprep.subr.mxu0 0.0
        %1238 = vmatpush1.xpose.msra.mxu0 0.0
        %1239 = vmatprep.subr.mxu0 0.0
        %1240 = vmatpush1.xpose.msra.mxu0 0.0
        %1241 = vmatprep.subr.mxu0 0.0
        %1242 = vmatpush1.xpose.msra.mxu0 %v1209
        %1243 = vmatprep.subr.mxu0 0.0
        %1244 = vmatpush2.xpose.msra.mxu0 0.0
        %1245 = vmatprep.subr.mxu0 0.0
        %1246 = vmatpush2.xpose.msra.mxu0 0.0
        %1247 = vmatprep.subr.mxu0 0.0
        %1248 = vmatpush2.xpose.msra.mxu0 0.0
        %1249 = vmatprep.subr.mxu0 0.0
        %1250 = vmatpush2.xpose.msra.mxu0 0.0
        %1251 = vmatprep.subr.mxu0 0.0
        %1252 = vmatpush2.xpose.msra.mxu0 0.0
        %1253 = vmatprep.subr.mxu0 0.0
        %1254 = vmatpush2.xpose.msra.mxu0 0.0
        %1255 = vmatprep.subr.mxu0 0.0
        %1256 = vmatpush2.xpose.msra.mxu0 0.0
        %1257 = vmatprep.subr.mxu0 0.0
        %1258 = vmatpush2.xpose.msra.mxu0 0.0
        %1259 = vmatprep.subr.mxu0 0.0
        %1260 = vmatpush2.xpose.msra.mxu0 0.0
        %1261 = vmatprep.subr.mxu0 0.0
        %1262 = vmatpush2.xpose.msra.mxu0 0.0
        %1263 = vmatprep.subr.mxu0 0.0
        %1264 = vmatpush2.xpose.msra.mxu0 0.0
        %1265 = vmatprep.subr.mxu0 0.0
        %1266 = vmatpush2.xpose.msra.mxu0 0.0
        %1267 = vmatprep.subr.mxu0 0.0
        %1268 = vmatpush2.xpose.msra.mxu0 0.0
        %1269 = vmatprep.subr.mxu0 0.0
        %1270 = vmatpush2.xpose.msra.mxu0 0.0
        %1271 = vmatprep.subr.mxu0 0.0
        %1272 = vmatpush2.xpose.msra.mxu0 0.0
        %1273 = vmatprep.subr.mxu0 0.0
        %1274 = vmatpush2.xpose.msra.mxu0 0.0
        %1275 = vmatprep.mubr.f32.mxu0 0.0
        %1276 = vmatmul.mubr.f32.gmra.mxu0 %v1206
        %v1277 = vpop.f32.mrf.mxu0
        %v1278 = vadd.f32 0.0, %v1277
        %v1279 = vpop.f32.mrf.mxu0
        %1280 = vdwg.mxu0
        %v1281 = vsel %vm976, %v1050, -inf
        %1282 = vmax.xlane.f32.xlu0 %v1281
        %v1283 = vpop.xlane.xlu0 %1282
        %v1284 = vsel %vm976, %v1126, -inf
        %1285 = vmax.xlane.f32.xlu0 %v1284
        %v1286 = vpop.xlane.xlu0 %1285
        %v1287 = vsel %vm976, %v1202, -inf
        %1288 = vmax.xlane.f32.xlu0 %v1287
        %v1289 = vpop.xlane.xlu0 %1288
        %v1290 = vsel %vm976, %v1278, -inf
        %1291 = vmax.xlane.f32.xlu0 %v1290
        %v1292 = vpop.xlane.xlu0 %1291
        %v1293 = vsub.f32 %v1050, %v1283
        %v1294 = vsub.f32 %v1126, %v1286
        %v1295 = vsub.f32 %v1202, %v1289
        %v1296 = vsub.f32 %v1278, %v1292
        %v1297 = vmul.f32 %v1293, 1.442695
        %v1298 = vpow.pop %v1297
        %v1299 = vmul.f32 %v1294, 1.442695
        %v1300 = vpow.pop %v1299
        %v1301 = vmul.f32 %v1295, 1.442695
        %v1302 = vpow.pop %v1301
        %v1303 = vmul.f32 %v1296, 1.442695
        %v1304 = vpow.pop %v1303
        %v1305 = vsel %vm976, %v1298, 0.0
        %1306 = vadd.xlane.f32.xlu0 %v1305
        %v1307 = vpop.xlane.xlu0 %1306
        %v1308 = vsel %vm976, %v1300, 0.0
        %1309 = vadd.xlane.f32.xlu0 %v1308
        %v1310 = vpop.xlane.xlu0 %1309
        %v1311 = vsel %vm976, %v1302, 0.0
        %1312 = vadd.xlane.f32.xlu0 %v1311
        %v1313 = vpop.xlane.xlu0 %1312
        %v1314 = vsel %vm976, %v1304, 0.0
        %1315 = vadd.xlane.f32.xlu0 %v1314
        %v1316 = vpop.xlane.xlu0 %1315
        %v1317 = vrcp.pop %v1307
        %v1318 = vrcp.pop %v1310
        %v1319 = vrcp.pop %v1313
        %v1320 = vrcp.pop %v1316
        %v1321 = vmul.f32 %v1298, %v1317
        %v1322 = vmul.f32 %v1300, %v1318
        %v1323 = vmul.f32 %v1302, %v1319
        %v1324 = vmul.f32 %v1304, %v1320
        %v1325 = vpack.c.bf16 %v1321, %v1321
        %v1326 = vpack.c.bf16 %v1322, %v1322
        %v1327 = vpack.c.bf16 %v1323, %v1323
        %v1328 = vpack.c.bf16 %v1324, %v1324
        %v1329 = vpack.c.bf16 %v972, %v972
        %v1330 = vpack.c.bf16 %v973, %v973
        %v1331 = vpack.c.bf16 %v974, %v974
        %v1332 = vpack.c.bf16 %v975, %v975
        %v1334 = vsel %vm976, %v1325, 0
        %vm1336 = vcmask 1043456
        %v1338 = vsel %vm1336, %v1329, 0
        %1340 = vmatprep.subr.bf16.mxu0 0
        %1341 = vmatpush1.bf16.msra.mxu0 0
        %1342 = vmatprep.subr.bf16.mxu0 0
        %1343 = vmatpush1.bf16.msra.mxu0 0
        %1344 = vmatprep.subr.bf16.mxu0 0
        %1345 = vmatpush1.bf16.msra.mxu0 0
        %1346 = vmatprep.subr.bf16.mxu0 0
        %1347 = vmatpush1.bf16.msra.mxu0 0
        %1348 = vmatprep.subr.bf16.mxu0 0
        %1349 = vmatpush1.bf16.msra.mxu0 0
        %1350 = vmatprep.subr.bf16.mxu0 0
        %1351 = vmatpush1.bf16.msra.mxu0 0
        %1352 = vmatprep.subr.bf16.mxu0 0
        %1353 = vmatpush1.bf16.msra.mxu0 0
        %1354 = vmatprep.subr.bf16.mxu0 0
        %1355 = vmatpush1.bf16.msra.mxu0 %v1338
        %1356 = vmatprep.subr.bf16.mxu0 0
        %1357 = vmatpush2.bf16.msra.mxu0 0
        %1358 = vmatprep.subr.bf16.mxu0 0
        %1359 = vmatpush2.bf16.msra.mxu0 0
        %1360 = vmatprep.subr.bf16.mxu0 0
        %1361 = vmatpush2.bf16.msra.mxu0 0
        %1362 = vmatprep.subr.bf16.mxu0 0
        %1363 = vmatpush2.bf16.msra.mxu0 0
        %1364 = vmatprep.subr.bf16.mxu0 0
        %1365 = vmatpush2.bf16.msra.mxu0 0
        %1366 = vmatprep.subr.bf16.mxu0 0
        %1367 = vmatpush2.bf16.msra.mxu0 0
        %1368 = vmatprep.subr.bf16.mxu0 0
        %1369 = vmatpush2.bf16.msra.mxu0 0
        %1370 = vmatprep.subr.bf16.mxu0 0
        %1371 = vmatpush2.bf16.msra.mxu0 0
        %1372 = vmatprep.mubr.bf16.mxu0 0
        %1373 = vmatmul.mubr.bf16.gmra.mxu0 %v1334
        %v1374 = vpop.f32.mrf.mxu0
        %v1375 = vadd.f32 0.0, %v1374
        %v1376 = vpop.f32.mrf.mxu0
        %v1377 = vpop.f32.mrf.mxu0
        %v1378 = vpop.f32.mrf.mxu0
        %1379 = vdwg.mxu0
        %v1381 = vsel %vm976, %v1326, 0
        %v1384 = vsel %vm1336, %v1330, 0
        %1386 = vmatprep.subr.bf16.mxu0 0
        %1387 = vmatpush1.bf16.msra.mxu0 0
        %1388 = vmatprep.subr.bf16.mxu0 0
        %1389 = vmatpush1.bf16.msra.mxu0 0
        %1390 = vmatprep.subr.bf16.mxu0 0
        %1391 = vmatpush1.bf16.msra.mxu0 0
        %1392 = vmatprep.subr.bf16.mxu0 0
        %1393 = vmatpush1.bf16.msra.mxu0 0
        %1394 = vmatprep.subr.bf16.mxu0 0
        %1395 = vmatpush1.bf16.msra.mxu0 0
        %1396 = vmatprep.subr.bf16.mxu0 0
        %1397 = vmatpush1.bf16.msra.mxu0 0
        %1398 = vmatprep.subr.bf16.mxu0 0
        %1399 = vmatpush1.bf16.msra.mxu0 0
        %1400 = vmatprep.subr.bf16.mxu0 0
        %1401 = vmatpush1.bf16.msra.mxu0 %v1384
        %1402 = vmatprep.subr.bf16.mxu0 0
        %1403 = vmatpush2.bf16.msra.mxu0 0
        %1404 = vmatprep.subr.bf16.mxu0 0
        %1405 = vmatpush2.bf16.msra.mxu0 0
        %1406 = vmatprep.subr.bf16.mxu0 0
        %1407 = vmatpush2.bf16.msra.mxu0 0
        %1408 = vmatprep.subr.bf16.mxu0 0
        %1409 = vmatpush2.bf16.msra.mxu0 0
        %1410 = vmatprep.subr.bf16.mxu0 0
        %1411 = vmatpush2.bf16.msra.mxu0 0
        %1412 = vmatprep.subr.bf16.mxu0 0
        %1413 = vmatpush2.bf16.msra.mxu0 0
        %1414 = vmatprep.subr.bf16.mxu0 0
        %1415 = vmatpush2.bf16.msra.mxu0 0
        %1416 = vmatprep.subr.bf16.mxu0 0
        %1417 = vmatpush2.bf16.msra.mxu0 0
        %1418 = vmatprep.mubr.bf16.mxu0 0
        %1419 = vmatmul.mubr.bf16.gmra.mxu0 %v1381
        %v1420 = vpop.f32.mrf.mxu0
        %v1421 = vadd.f32 0.0, %v1420
        %v1422 = vpop.f32.mrf.mxu0
        %v1423 = vpop.f32.mrf.mxu0
        %v1424 = vpop.f32.mrf.mxu0
        %1425 = vdwg.mxu0
        %v1427 = vsel %vm976, %v1327, 0
        %v1430 = vsel %vm1336, %v1331, 0
        %1432 = vmatprep.subr.bf16.mxu0 0
        %1433 = vmatpush1.bf16.msra.mxu0 0
        %1434 = vmatprep.subr.bf16.mxu0 0
        %1435 = vmatpush1.bf16.msra.mxu0 0
        %1436 = vmatprep.subr.bf16.mxu0 0
        %1437 = vmatpush1.bf16.msra.mxu0 0
        %1438 = vmatprep.subr.bf16.mxu0 0
        %1439 = vmatpush1.bf16.msra.mxu0 0
        %1440 = vmatprep.subr.bf16.mxu0 0
        %1441 = vmatpush1.bf16.msra.mxu0 0
        %1442 = vmatprep.subr.bf16.mxu0 0
        %1443 = vmatpush1.bf16.msra.mxu0 0
        %1444 = vmatprep.subr.bf16.mxu0 0
        %1445 = vmatpush1.bf16.msra.mxu0 0
        %1446 = vmatprep.subr.bf16.mxu0 0
        %1447 = vmatpush1.bf16.msra.mxu0 %v1430
        %1448 = vmatprep.subr.bf16.mxu0 0
        %1449 = vmatpush2.bf16.msra.mxu0 0
        %1450 = vmatprep.subr.bf16.mxu0 0
        %1451 = vmatpush2.bf16.msra.mxu0 0
        %1452 = vmatprep.subr.bf16.mxu0 0
        %1453 = vmatpush2.bf16.msra.mxu0 0
        %1454 = vmatprep.subr.bf16.mxu0 0
        %1455 = vmatpush2.bf16.msra.mxu0 0
        %1456 = vmatprep.subr.bf16.mxu0 0
        %1457 = vmatpush2.bf16.msra.mxu0 0
        %1458 = vmatprep.subr.bf16.mxu0 0
        %1459 = vmatpush2.bf16.msra.mxu0 0
        %1460 = vmatprep.subr.bf16.mxu0 0
        %1461 = vmatpush2.bf16.msra.mxu0 0
        %1462 = vmatprep.subr.bf16.mxu0 0
        %1463 = vmatpush2.bf16.msra.mxu0 0
        %1464 = vmatprep.mubr.bf16.mxu0 0
        %1465 = vmatmul.mubr.bf16.gmra.mxu0 %v1427
        %v1466 = vpop.f32.mrf.mxu0
        %v1467 = vadd.f32 0.0, %v1466
        %v1468 = vpop.f32.mrf.mxu0
        %v1469 = vpop.f32.mrf.mxu0
        %v1470 = vpop.f32.mrf.mxu0
        %1471 = vdwg.mxu0
        %v1473 = vsel %vm976, %v1328, 0
        %v1476 = vsel %vm1336, %v1332, 0
        %1478 = vmatprep.subr.bf16.mxu0 0
        %1479 = vmatpush1.bf16.msra.mxu0 0
        %1480 = vmatprep.subr.bf16.mxu0 0
        %1481 = vmatpush1.bf16.msra.mxu0 0
        %1482 = vmatprep.subr.bf16.mxu0 0
        %1483 = vmatpush1.bf16.msra.mxu0 0
        %1484 = vmatprep.subr.bf16.mxu0 0
        %1485 = vmatpush1.bf16.msra.mxu0 0
        %1486 = vmatprep.subr.bf16.mxu0 0
        %1487 = vmatpush1.bf16.msra.mxu0 0
        %1488 = vmatprep.subr.bf16.mxu0 0
        %1489 = vmatpush1.bf16.msra.mxu0 0
        %1490 = vmatprep.subr.bf16.mxu0 0
        %1491 = vmatpush1.bf16.msra.mxu0 0
        %1492 = vmatprep.subr.bf16.mxu0 0
        %1493 = vmatpush1.bf16.msra.mxu0 %v1476
        %1494 = vmatprep.subr.bf16.mxu0 0
        %1495 = vmatpush2.bf16.msra.mxu0 0
        %1496 = vmatprep.subr.bf16.mxu0 0
        %1497 = vmatpush2.bf16.msra.mxu0 0
        %1498 = vmatprep.subr.bf16.mxu0 0
        %1499 = vmatpush2.bf16.msra.mxu0 0
        %1500 = vmatprep.subr.bf16.mxu0 0
        %1501 = vmatpush2.bf16.msra.mxu0 0
        %1502 = vmatprep.subr.bf16.mxu0 0
        %1503 = vmatpush2.bf16.msra.mxu0 0
        %1504 = vmatprep.subr.bf16.mxu0 0
        %1505 = vmatpush2.bf16.msra.mxu0 0
        %1506 = vmatprep.subr.bf16.mxu0 0
        %1507 = vmatpush2.bf16.msra.mxu0 0
        %1508 = vmatprep.subr.bf16.mxu0 0
        %1509 = vmatpush2.bf16.msra.mxu0 0
        %1510 = vmatprep.mubr.bf16.mxu0 0
        %1511 = vmatmul.mubr.bf16.gmra.mxu0 %v1473
        %v1512 = vpop.f32.mrf.mxu0
        %v1513 = vadd.f32 0.0, %v1512
        %v1514 = vpop.f32.mrf.mxu0
        %v1515 = vpop.f32.mrf.mxu0
        %v1516 = vpop.f32.mrf.mxu0
        %1517 = vdwg.mxu0
        %v1518 = vcombine.low %v1375, %v1467
        %v1519 = vcombine.high %v1375, %v1467
        %v1521 = vunpack.c.l.s4 1983009808
        %v1522 = vunpack.c.0.s8 %v1521
        %v1523 = vlaneseq
        %v1524 = vshrl.u32 %v1523, 7
        %v1525 = vsub.s32 %v1522, %v1524
        %v1526 = vrot.slane %v1518, %v1525
        %v1528 = vunpack.c.l.s4 1983009808
        %v1529 = vunpack.c.0.s8 %v1528
        %v1530 = vlaneseq
        %v1531 = vshrl.u32 %v1530, 7
        %v1532 = vsub.s32 %v1529, %v1531
        %v1533 = vrot.slane %v1519, %v1532
        %v1534 = vcombine.low %v1421, %v1513
        %v1535 = vcombine.high %v1421, %v1513
        %v1537 = vunpack.c.l.s4 1983009808
        %v1538 = vunpack.c.0.s8 %v1537
        %v1539 = vlaneseq
        %v1540 = vshrl.u32 %v1539, 7
        %v1541 = vsub.s32 %v1538, %v1540
        %v1542 = vrot.slane %v1534, %v1541
        %v1544 = vunpack.c.l.s4 1983009808
        %v1545 = vunpack.c.0.s8 %v1544
        %v1546 = vlaneseq
        %v1547 = vshrl.u32 %v1546, 7
        %v1548 = vsub.s32 %v1545, %v1547
        %v1549 = vrot.slane %v1535, %v1548
        %v1550 = vcombine.low %v1526, %v1542
        %v1551 = vcombine.high %v1526, %v1542
        %v1553 = vunpack.c.l.s4 1934713408
        %v1554 = vunpack.c.0.s8 %v1553
        %v1555 = vlaneseq
        %v1556 = vshrl.u32 %v1555, 7
        %v1557 = vsub.s32 %v1554, %v1556
        %v1558 = vrot.slane %v1550, %v1557
        %v1560 = vunpack.c.l.s4 1934713408
        %v1561 = vunpack.c.0.s8 %v1560
        %v1562 = vlaneseq
        %v1563 = vshrl.u32 %v1562, 7
        %v1564 = vsub.s32 %v1561, %v1563
        %v1565 = vrot.slane %v1551, %v1564
        %v1566 = vcombine.low %v1533, %v1549
        %v1567 = vcombine.high %v1533, %v1549
        %v1569 = vunpack.c.l.s4 1934713408
        %v1570 = vunpack.c.0.s8 %v1569
        %v1571 = vlaneseq
        %v1572 = vshrl.u32 %v1571, 7
        %v1573 = vsub.s32 %v1570, %v1572
        %v1574 = vrot.slane %v1566, %v1573
        %v1576 = vunpack.c.l.s4 1934713408
        %v1577 = vunpack.c.0.s8 %v1576
        %v1578 = vlaneseq
        %v1579 = vshrl.u32 %v1578, 7
        %v1580 = vsub.s32 %v1577, %v1579
        %v1581 = vrot.slane %v1567, %v1580
        %v1582 = vcombine.high %v1558, 0.0
        %v1583 = vcombine.high %v1565, 0.0
        %v1584 = vcombine.high %v1574, 0.0
        %v1585 = vcombine.high %v1581, 0.0
        %v1586 = vcombine.low %v1558, %v1565
        %v1588 = vunpack.c.l.s4 1983009808
        %v1589 = vunpack.c.0.s8 %v1588
        %v1590 = vlaneseq
        %v1591 = vshrl.u32 %v1590, 7
        %v1592 = vsub.s32 %v1589, %v1591
        %v1593 = vrot.slane %v1586, %v1592
        %v1594 = vcombine.low %v1582, %v1583
        %v1596 = vunpack.c.l.s4 1983009808
        %v1597 = vunpack.c.0.s8 %v1596
        %v1598 = vlaneseq
        %v1599 = vshrl.u32 %v1598, 7
        %v1600 = vsub.s32 %v1597, %v1599
        %v1601 = vrot.slane %v1594, %v1600
        %v1602 = vcombine.low %v1574, %v1581
        %v1604 = vunpack.c.l.s4 1983009808
        %v1605 = vunpack.c.0.s8 %v1604
        %v1606 = vlaneseq
        %v1607 = vshrl.u32 %v1606, 7
        %v1608 = vsub.s32 %v1605, %v1607
        %v1609 = vrot.slane %v1602, %v1608
        %v1610 = vcombine.low %v1584, %v1585
        %v1612 = vunpack.c.l.s4 1983009808
        %v1613 = vunpack.c.0.s8 %v1612
        %v1614 = vlaneseq
        %v1615 = vshrl.u32 %v1614, 7
        %v1616 = vsub.s32 %v1613, %v1615
        %v1617 = vrot.slane %v1610, %v1616
        %v1618 = vcombine.low %v1593, %v1601
        %v1619 = vcombine.high %v1593, %v1601
        %v1621 = vunpack.c.l.s4 1934713408
        %v1622 = vunpack.c.0.s8 %v1621
        %v1623 = vlaneseq
        %v1624 = vshrl.u32 %v1623, 7
        %v1625 = vsub.s32 %v1622, %v1624
        %v1626 = vrot.slane %v1618, %v1625
        %v1628 = vunpack.c.l.s4 1934713408
        %v1629 = vunpack.c.0.s8 %v1628
        %v1630 = vlaneseq
        %v1631 = vshrl.u32 %v1630, 7
        %v1632 = vsub.s32 %v1629, %v1631
        %v1633 = vrot.slane %v1619, %v1632
        %v1634 = vcombine.low %v1609, %v1617
        %v1635 = vcombine.high %v1609, %v1617
        %v1637 = vunpack.c.l.s4 1934713408
        %v1638 = vunpack.c.0.s8 %v1637
        %v1639 = vlaneseq
        %v1640 = vshrl.u32 %v1639, 7
        %v1641 = vsub.s32 %v1638, %v1640
        %v1642 = vrot.slane %v1634, %v1641
        %v1644 = vunpack.c.l.s4 1934713408
        %v1645 = vunpack.c.0.s8 %v1644
        %v1646 = vlaneseq
        %v1647 = vshrl.u32 %v1646, 7
        %v1648 = vsub.s32 %v1645, %v1647
        %v1649 = vrot.slane %v1635, %v1648
        %v1650 = vcombine.low %v1626, %v1642
        %v1651 = vcombine.high %v1626, %v1642
        %v1652 = vcombine.low %v1633, %v1649
        %v1653 = vcombine.high %v1633, %v1649
        %1655 = vrot.lane.b32.xlu0 %v1651, 8
        %v1656 = vpop.permute.xlu0 %1655
        %1659 = vrot.lane.b32.xlu0 %v1652, 16
        %v1660 = vpop.permute.xlu0 %1659
        %1663 = vrot.lane.b32.xlu0 %v1653, 24
        %v1664 = vpop.permute.xlu0 %1663
        %v1666 = vsel %vm976, %v1650, %v1656
        %vm1667 = vcmask 130048
        %v1668 = vsel %vm1667, %v1666, %v1660
        %vm1669 = vcmask 195584
        %v1670 = vsel %vm1669, %v1668, %v1664
        %v1671 = vpack.c.bf16 %v1670, %v1670
        %v1672 = vld [vmem:[%s4] sm:$0xf]
        %v1673 = vld [vmem:[%s4 + $0x4] sm:$0xf]
        %v1674 = vld [vmem:[%s4 + $0x8] sm:$0xf]
        %v1675 = vld [vmem:[%s4 + $0xc] sm:$0xf]
        %v1676 = vld [vmem:[%s5] sm:$0x1]
        %v1678 = vlaneseq
        %v1679 = vshrl.u32 %v1678, 7
        %v1680 = vsub.s32 0, %v1679
        %v1681 = vrot.slane %v1676, %v1680
        %v1687 = vunpack.c.l.b16 %v1672
        %v1688 = vunpack.c.l.b16 %v1673
        %v1689 = vunpack.c.l.b16 %v1674
        %v1690 = vunpack.c.l.b16 %v1675
        %v1691 = vpack.c.b16 %v1688, %v1687
        %v1692 = vpack.c.b16 %v1690, %v1689
        %v1696 = vsel %vm490, %v1671, 0
        %1698 = vmatprep.subr.bf16.mxu0 0
        %1699 = vmatpush1.bf16.msra.mxu0 0
        %1700 = vmatprep.subr.bf16.mxu0 0
        %1701 = vmatpush1.bf16.msra.mxu0 0
        %1702 = vmatprep.subr.bf16.mxu0 0
        %1703 = vmatpush1.bf16.msra.mxu0 0
        %1704 = vmatprep.subr.bf16.mxu0 0
        %1705 = vmatpush1.bf16.msra.mxu0 0
        %1706 = vmatprep.subr.bf16.mxu0 0
        %1707 = vmatpush1.bf16.msra.mxu0 0
        %1708 = vmatprep.subr.bf16.mxu0 0
        %1709 = vmatpush1.bf16.msra.mxu0 0
        %1710 = vmatprep.subr.bf16.mxu0 0
        %1711 = vmatpush1.bf16.msra.mxu0 %v1692
        %1712 = vmatprep.subr.bf16.mxu0 0
        %1713 = vmatpush1.bf16.msra.mxu0 %v1691
        %1714 = vmatprep.subr.bf16.mxu0 0
        %1715 = vmatpush2.bf16.msra.mxu0 0
        %1716 = vmatprep.subr.bf16.mxu0 0
        %1717 = vmatpush2.bf16.msra.mxu0 0
        %1718 = vmatprep.subr.bf16.mxu0 0
        %1719 = vmatpush2.bf16.msra.mxu0 0
        %1720 = vmatprep.subr.bf16.mxu0 0
        %1721 = vmatpush2.bf16.msra.mxu0 0
        %1722 = vmatprep.subr.bf16.mxu0 0
        %1723 = vmatpush2.bf16.msra.mxu0 0
        %1724 = vmatprep.subr.bf16.mxu0 0
        %1725 = vmatpush2.bf16.msra.mxu0 0
        %1726 = vmatprep.subr.bf16.mxu0 0
        %1727 = vmatpush2.bf16.msra.mxu0 0
        %1728 = vmatprep.subr.bf16.mxu0 0
        %1729 = vmatpush2.bf16.msra.mxu0 0
        %1730 = vmatprep.mubr.bf16.mxu0 0
        %1731 = vmatmul.mubr.bf16.gmra.mxu0 %v1696
        %v1732 = vpop.f32.mrf.mxu0
        %v1733 = vadd.f32 %v1681, %v1732
        %v1734 = vpop.f32.mrf.mxu0
        %v1735 = vpop.f32.mrf.mxu0
        %v1736 = vpop.f32.mrf.mxu0
        %1737 = vdwg.mxu0
        %v1738 = vadd.f32 %v465, %v1733
        %v1739 = vld [vmem:[%s10] sm:$0x1]
        %v1740 = vld [vmem:[%s11] sm:$0x1]
        %v1741 = vsel %vm490, %v1738, 0.0
        %1742 = vadd.xlane.f32.xlu0 %v1741
        %v1743 = vpop.xlane.xlu0 %1742
        %v1744 = vrcp.pop 32.0
        %v1745 = vmul.f32 %v1743, %v1744
        %v1746 = vsub.f32 %v1738, %v1745
        %v1747 = vmul.f32 %v1746, %v1746
        %v1748 = vsel %vm490, %v1747, 0.0
        %1749 = vadd.xlane.f32.xlu0 %v1748
        %v1750 = vpop.xlane.xlu0 %1749
        %v1751 = vmul.f32 %v1750, %v1744
        %v1752 = vadd.f32 %v1751, 1e-05
        %v1753 = vrsqrt.pop %v1752
        %v1754 = vmul.f32 %v1746, %v1753
        %v1756 = vlaneseq
        %v1757 = vshrl.u32 %v1756, 7
        %v1758 = vsub.s32 0, %v1757
        %v1759 = vrot.slane %v1739, %v1758
        %v1761 = vmul.f32 %v1754, %v1759
        %v1763 = vlaneseq
        %v1764 = vshrl.u32 %v1763, 7
        %v1765 = vsub.s32 0, %v1764
        %v1766 = vrot.slane %v1740, %v1765
        %v1768 = vadd.f32 %v1761, %v1766
        %v1769 = vpack.c.bf16 %v1768, %v1768
        %v1770 = vld [vmem:[%s6] sm:$0xf]
        %v1771 = vld [vmem:[%s6 + $0x4] sm:$0xf]
        %v1772 = vld [vmem:[%s6 + $0x8] sm:$0xf]
        %v1773 = vld [vmem:[%s6 + $0xc] sm:$0xf]
        %v1774 = vld [vmem:[%s7] sm:$0x1]
        %v1776 = vlaneseq
        %v1777 = vshrl.u32 %v1776, 7
        %v1778 = vsub.s32 0, %v1777
        %v1779 = vrot.slane %v1774, %v1778
        %v1785 = vunpack.c.l.b16 %v1770
        %v1786 = vunpack.c.l.b16 %v1771
        %v1787 = vunpack.c.l.b16 %v1772
        %v1788 = vunpack.c.l.b16 %v1773
        %v1789 = vpack.c.b16 %v1786, %v1785
        %v1790 = vpack.c.b16 %v1788, %v1787
        %v1794 = vsel %vm490, %v1769, 0
        %1796 = vmatprep.subr.bf16.mxu0 0
        %1797 = vmatpush1.bf16.msra.mxu0 0
        %1798 = vmatprep.subr.bf16.mxu0 0
        %1799 = vmatpush1.bf16.msra.mxu0 0
        %1800 = vmatprep.subr.bf16.mxu0 0
        %1801 = vmatpush1.bf16.msra.mxu0 0
        %1802 = vmatprep.subr.bf16.mxu0 0
        %1803 = vmatpush1.bf16.msra.mxu0 0
        %1804 = vmatprep.subr.bf16.mxu0 0
        %1805 = vmatpush1.bf16.msra.mxu0 0
        %1806 = vmatprep.subr.bf16.mxu0 0
        %1807 = vmatpush1.bf16.msra.mxu0 0
        %1808 = vmatprep.subr.bf16.mxu0 0
        %1809 = vmatpush1.bf16.msra.mxu0 %v1790
        %1810 = vmatprep.subr.bf16.mxu0 0
        %1811 = vmatpush1.bf16.msra.mxu0 %v1789
        %1812 = vmatprep.subr.bf16.mxu0 0
        %1813 = vmatpush2.bf16.msra.mxu0 0
        %1814 = vmatprep.subr.bf16.mxu0 0
        %1815 = vmatpush2.bf16.msra.mxu0 0
        %1816 = vmatprep.subr.bf16.mxu0 0
        %1817 = vmatpush2.bf16.msra.mxu0 0
        %1818 = vmatprep.subr.bf16.mxu0 0
        %1819 = vmatpush2.bf16.msra.mxu0 0
        %1820 = vmatprep.subr.bf16.mxu0 0
        %1821 = vmatpush2.bf16.msra.mxu0 0
        %1822 = vmatprep.subr.bf16.mxu0 0
        %1823 = vmatpush2.bf16.msra.mxu0 0
        %1824 = vmatprep.subr.bf16.mxu0 0
        %1825 = vmatpush2.bf16.msra.mxu0 0
        %1826 = vmatprep.subr.bf16.mxu0 0
        %1827 = vmatpush2.bf16.msra.mxu0 0
        %1828 = vmatprep.mubr.bf16.mxu0 0
        %1829 = vmatmul.mubr.bf16.gmra.mxu0 %v1794
        %v1830 = vpop.f32.mrf.mxu0
        %v1831 = vadd.f32 %v1779, %v1830
        %v1832 = vpop.f32.mrf.mxu0
        %v1833 = vpop.f32.mrf.mxu0
        %v1834 = vpop.f32.mrf.mxu0
        %1835 = vdwg.mxu0
        %v1836 = vmax.f32 %v1831, 0.0
        %v1837 = vpack.c.bf16 %v1836, %v1836
        %v1838 = vld [vmem:[%s8] sm:$0xf]
        %v1839 = vld [vmem:[%s8 + $0x4] sm:$0xf]
        %v1840 = vld [vmem:[%s8 + $0x8] sm:$0xf]
        %v1841 = vld [vmem:[%s8 + $0xc] sm:$0xf]
        %v1842 = vld [vmem:[%s8 + $0x10] sm:$0xf]
        %v1843 = vld [vmem:[%s8 + $0x14] sm:$0xf]
        %v1844 = vld [vmem:[%s8 + $0x18] sm:$0xf]
        %v1845 = vld [vmem:[%s8 + $0x1c] sm:$0xf]
        %v1846 = vld [vmem:[%s9] sm:$0x1]
        %v1848 = vlaneseq
        %v1849 = vshrl.u32 %v1848, 7
        %v1850 = vsub.s32 0, %v1849
        %v1851 = vrot.slane %v1846, %v1850
        %v1861 = vunpack.c.l.b16 %v1838
        %v1862 = vunpack.c.l.b16 %v1839
        %v1863 = vunpack.c.l.b16 %v1840
        %v1864 = vunpack.c.l.b16 %v1841
        %v1865 = vunpack.c.l.b16 %v1842
        %v1866 = vunpack.c.l.b16 %v1843
        %v1867 = vunpack.c.l.b16 %v1844
        %v1868 = vunpack.c.l.b16 %v1845
        %v1869 = vpack.c.b16 %v1862, %v1861
        %v1870 = vpack.c.b16 %v1864, %v1863
        %v1871 = vpack.c.b16 %v1866, %v1865
        %v1872 = vpack.c.b16 %v1868, %v1867
        %vm1877 = vcmask 523264
        %v1879 = vsel %vm1877, %v1837, 0
        %1881 = vmatprep.subr.bf16.mxu0 0
        %1882 = vmatpush1.bf16.msra.mxu0 0
        %1883 = vmatprep.subr.bf16.mxu0 0
        %1884 = vmatpush1.bf16.msra.mxu0 0
        %1885 = vmatprep.subr.bf16.mxu0 0
        %1886 = vmatpush1.bf16.msra.mxu0 0
        %1887 = vmatprep.subr.bf16.mxu0 0
        %1888 = vmatpush1.bf16.msra.mxu0 0
        %1889 = vmatprep.subr.bf16.mxu0 0
        %1890 = vmatpush1.bf16.msra.mxu0 %v1872
        %1891 = vmatprep.subr.bf16.mxu0 0
        %1892 = vmatpush1.bf16.msra.mxu0 %v1871
        %1893 = vmatprep.subr.bf16.mxu0 0
        %1894 = vmatpush1.bf16.msra.mxu0 %v1870
        %1895 = vmatprep.subr.bf16.mxu0 0
        %1896 = vmatpush1.bf16.msra.mxu0 %v1869
        %1897 = vmatprep.subr.bf16.mxu0 0
        %1898 = vmatpush2.bf16.msra.mxu0 0
        %1899 = vmatprep.subr.bf16.mxu0 0
        %1900 = vmatpush2.bf16.msra.mxu0 0
        %1901 = vmatprep.subr.bf16.mxu0 0
        %1902 = vmatpush2.bf16.msra.mxu0 0
        %1903 = vmatprep.subr.bf16.mxu0 0
        %1904 = vmatpush2.bf16.msra.mxu0 0
        %1905 = vmatprep.subr.bf16.mxu0 0
        %1906 = vmatpush2.bf16.msra.mxu0 0
        %1907 = vmatprep.subr.bf16.mxu0 0
        %1908 = vmatpush2.bf16.msra.mxu0 0
        %1909 = vmatprep.subr.bf16.mxu0 0
        %1910 = vmatpush2.bf16.msra.mxu0 0
        %1911 = vmatprep.subr.bf16.mxu0 0
        %1912 = vmatpush2.bf16.msra.mxu0 0
        %1913 = vmatprep.mubr.bf16.mxu0 0
        %1914 = vmatmul.mubr.bf16.gmra.mxu0 %v1879
        %v1915 = vpop.f32.mrf.mxu0
        %v1916 = vadd.f32 %v1851, %v1915
        %v1917 = vpop.f32.mrf.mxu0
        %v1918 = vpop.f32.mrf.mxu0
        %v1919 = vpop.f32.mrf.mxu0
        %1920 = vdwg.mxu0
        %v1921 = vadd.f32 %v1768, %v1916
        %v1922 = vld [vmem:[%s12] sm:$0x1]
        %v1923 = vld [vmem:[%s13] sm:$0x1]
        %v1924 = vsel %vm490, %v1921, 0.0
        %1925 = vadd.xlane.f32.xlu0 %v1924
        %v1926 = vpop.xlane.xlu0 %1925
        %v1927 = vmul.f32 %v1926, %v1744
        %v1928 = vsub.f32 %v1921, %v1927
        %v1929 = vmul.f32 %v1928, %v1928
        %v1930 = vsel %vm490, %v1929, 0.0
        %1931 = vadd.xlane.f32.xlu0 %v1930
        %v1932 = vpop.xlane.xlu0 %1931
        %v1933 = vmul.f32 %v1932, %v1744
        %v1934 = vadd.f32 %v1933, 1e-05
        %v1935 = vrsqrt.pop %v1934
        %v1936 = vmul.f32 %v1928, %v1935
        %v1938 = vlaneseq
        %v1939 = vshrl.u32 %v1938, 7
        %v1940 = vsub.s32 0, %v1939
        %v1941 = vrot.slane %v1922, %v1940
        %v1943 = vmul.f32 %v1936, %v1941
        %v1945 = vlaneseq
        %v1946 = vshrl.u32 %v1945, 7
        %v1947 = vsub.s32 0, %v1946
        %v1948 = vrot.slane %v1923, %v1947
        %v1950 = vadd.f32 %v1943, %v1948
        %v1951 = vpack.c.bf16 %v1950, %v1950
        %s1952 = scalar_lea.vmem %s2, 16
        %v1953 = vld [vmem:[%s1952] sm:$0xf]
        %v1954 = vld [vmem:[%s1952 + $0x4] sm:$0xf]
        %v1955 = vld [vmem:[%s1952 + $0x8] sm:$0xf]
        %v1956 = vld [vmem:[%s1952 + $0xc] sm:$0xf]
        %s1957 = scalar_lea.vmem %s3, 1
        %v1958 = vld [vmem:[%s1957] sm:$0x1]
        %v1960 = vlaneseq
        %v1961 = vshrl.u32 %v1960, 7
        %v1962 = vsub.s32 0, %v1961
        %v1963 = vrot.slane %v1958, %v1962
        %v1969 = vunpack.c.l.b16 %v1953
        %v1970 = vunpack.c.l.b16 %v1954
        %v1971 = vunpack.c.l.b16 %v1955
        %v1972 = vunpack.c.l.b16 %v1956
        %v1973 = vpack.c.b16 %v1970, %v1969
        %v1974 = vpack.c.b16 %v1972, %v1971
        %v1978 = vsel %vm490, %v1951, 0
        %1980 = vmatprep.subr.bf16.mxu0 0
        %1981 = vmatpush1.bf16.msra.mxu0 0
        %1982 = vmatprep.subr.bf16.mxu0 0
        %1983 = vmatpush1.bf16.msra.mxu0 0
        %1984 = vmatprep.subr.bf16.mxu0 0
        %1985 = vmatpush1.bf16.msra.mxu0 0
        %1986 = vmatprep.subr.bf16.mxu0 0
        %1987 = vmatpush1.bf16.msra.mxu0 0
        %1988 = vmatprep.subr.bf16.mxu0 0
        %1989 = vmatpush1.bf16.msra.mxu0 0
        %1990 = vmatprep.subr.bf16.mxu0 0
        %1991 = vmatpush1.bf16.msra.mxu0 0
        %1992 = vmatprep.subr.bf16.mxu0 0
        %1993 = vmatpush1.bf16.msra.mxu0 %v1974
        %1994 = vmatprep.subr.bf16.mxu0 0
        %1995 = vmatpush1.bf16.msra.mxu0 %v1973
        %1996 = vmatprep.subr.bf16.mxu0 0
        %1997 = vmatpush2.bf16.msra.mxu0 0
        %1998 = vmatprep.subr.bf16.mxu0 0
        %1999 = vmatpush2.bf16.msra.mxu0 0
        %2000 = vmatprep.subr.bf16.mxu0 0
        %2001 = vmatpush2.bf16.msra.mxu0 0
        %2002 = vmatprep.subr.bf16.mxu0 0
        %2003 = vmatpush2.bf16.msra.mxu0 0
        %2004 = vmatprep.subr.bf16.mxu0 0
        %2005 = vmatpush2.bf16.msra.mxu0 0
        %2006 = vmatprep.subr.bf16.mxu0 0
        %2007 = vmatpush2.bf16.msra.mxu0 0
        %2008 = vmatprep.subr.bf16.mxu0 0
        %2009 = vmatpush2.bf16.msra.mxu0 0
        %2010 = vmatprep.subr.bf16.mxu0 0
        %2011 = vmatpush2.bf16.msra.mxu0 0
        %2012 = vmatprep.mubr.bf16.mxu0 0
        %2013 = vmatmul.mubr.bf16.gmra.mxu0 %v1978
        %v2014 = vpop.f32.mrf.mxu0
        %v2015 = vadd.f32 %v1963, %v2014
        %v2016 = vpop.f32.mrf.mxu0
        %v2017 = vpop.f32.mrf.mxu0
        %v2018 = vpop.f32.mrf.mxu0
        %2019 = vdwg.mxu0
        %2021 = vrot.lane.b32.xlu0 %v2015, 120
        %v2022 = vpop.permute.xlu0 %2021
        %2024 = vrot.lane.b32.xlu0 %v2015, 112
        %v2025 = vpop.permute.xlu0 %2024
        %2027 = vrot.lane.b32.xlu0 %v2015, 104
        %v2028 = vpop.permute.xlu0 %2027
        %v2030 = vcombine.low %v2015, %v2025
        %v2031 = vcombine.high %v2015, %v2025
        %v2033 = vunpack.c.l.s4 1983009808
        %v2034 = vunpack.c.0.s8 %v2033
        %v2035 = vlaneseq
        %v2036 = vshrl.u32 %v2035, 7
        %v2037 = vsub.s32 %v2034, %v2036
        %v2038 = vrot.slane %v2030, %v2037
        %v2040 = vunpack.c.l.s4 1983009808
        %v2041 = vunpack.c.0.s8 %v2040
        %v2042 = vlaneseq
        %v2043 = vshrl.u32 %v2042, 7
        %v2044 = vsub.s32 %v2041, %v2043
        %v2045 = vrot.slane %v2031, %v2044
        %v2046 = vcombine.low %v2022, %v2028
        %v2047 = vcombine.high %v2022, %v2028
        %v2049 = vunpack.c.l.s4 1983009808
        %v2050 = vunpack.c.0.s8 %v2049
        %v2051 = vlaneseq
        %v2052 = vshrl.u32 %v2051, 7
        %v2053 = vsub.s32 %v2050, %v2052
        %v2054 = vrot.slane %v2046, %v2053
        %v2056 = vunpack.c.l.s4 1983009808
        %v2057 = vunpack.c.0.s8 %v2056
        %v2058 = vlaneseq
        %v2059 = vshrl.u32 %v2058, 7
        %v2060 = vsub.s32 %v2057, %v2059
        %v2061 = vrot.slane %v2047, %v2060
        %v2062 = vcombine.low %v2038, %v2054
        %v2063 = vcombine.high %v2038, %v2054
        %v2065 = vunpack.c.l.s4 1934713408
        %v2066 = vunpack.c.0.s8 %v2065
        %v2067 = vlaneseq
        %v2068 = vshrl.u32 %v2067, 7
        %v2069 = vsub.s32 %v2066, %v2068
        %v2070 = vrot.slane %v2062, %v2069
        %v2072 = vunpack.c.l.s4 1934713408
        %v2073 = vunpack.c.0.s8 %v2072
        %v2074 = vlaneseq
        %v2075 = vshrl.u32 %v2074, 7
        %v2076 = vsub.s32 %v2073, %v2075
        %v2077 = vrot.slane %v2063, %v2076
        %v2078 = vcombine.low %v2045, %v2061
        %v2079 = vcombine.high %v2045, %v2061
        %v2081 = vunpack.c.l.s4 1934713408
        %v2082 = vunpack.c.0.s8 %v2081
        %v2083 = vlaneseq
        %v2084 = vshrl.u32 %v2083, 7
        %v2085 = vsub.s32 %v2082, %v2084
        %v2086 = vrot.slane %v2078, %v2085
        %v2088 = vunpack.c.l.s4 1934713408
        %v2089 = vunpack.c.0.s8 %v2088
        %v2090 = vlaneseq
        %v2091 = vshrl.u32 %v2090, 7
        %v2092 = vsub.s32 %v2089, %v2091
        %v2093 = vrot.slane %v2079, %v2092
        %v2094 = vcombine.high %v2070, 0.0
        %v2095 = vcombine.high %v2077, 0.0
        %v2096 = vcombine.high %v2086, 0.0
        %v2097 = vcombine.high %v2093, 0.0
        %v2098 = vcombine.low %v2070, %v2077
        %v2100 = vunpack.c.l.s4 1983009808
        %v2101 = vunpack.c.0.s8 %v2100
        %v2102 = vlaneseq
        %v2103 = vshrl.u32 %v2102, 7
        %v2104 = vsub.s32 %v2101, %v2103
        %v2105 = vrot.slane %v2098, %v2104
        %v2106 = vcombine.low %v2094, %v2095
        %v2108 = vunpack.c.l.s4 1983009808
        %v2109 = vunpack.c.0.s8 %v2108
        %v2110 = vlaneseq
        %v2111 = vshrl.u32 %v2110, 7
        %v2112 = vsub.s32 %v2109, %v2111
        %v2113 = vrot.slane %v2106, %v2112
        %v2114 = vcombine.low %v2086, %v2093
        %v2116 = vunpack.c.l.s4 1983009808
        %v2117 = vunpack.c.0.s8 %v2116
        %v2118 = vlaneseq
        %v2119 = vshrl.u32 %v2118, 7
        %v2120 = vsub.s32 %v2117, %v2119
        %v2121 = vrot.slane %v2114, %v2120
        %v2122 = vcombine.low %v2096, %v2097
        %v2124 = vunpack.c.l.s4 1983009808
        %v2125 = vunpack.c.0.s8 %v2124
        %v2126 = vlaneseq
        %v2127 = vshrl.u32 %v2126, 7
        %v2128 = vsub.s32 %v2125, %v2127
        %v2129 = vrot.slane %v2122, %v2128
        %v2130 = vcombine.low %v2105, %v2113
        %v2131 = vcombine.high %v2105, %v2113
        %v2133 = vunpack.c.l.s4 1934713408
        %v2134 = vunpack.c.0.s8 %v2133
        %v2135 = vlaneseq
        %v2136 = vshrl.u32 %v2135, 7
        %v2137 = vsub.s32 %v2134, %v2136
        %v2138 = vrot.slane %v2130, %v2137
        %v2140 = vunpack.c.l.s4 1934713408
        %v2141 = vunpack.c.0.s8 %v2140
        %v2142 = vlaneseq
        %v2143 = vshrl.u32 %v2142, 7
        %v2144 = vsub.s32 %v2141, %v2143
        %v2145 = vrot.slane %v2131, %v2144
        %v2146 = vcombine.low %v2121, %v2129
        %v2147 = vcombine.high %v2121, %v2129
        %v2149 = vunpack.c.l.s4 1934713408
        %v2150 = vunpack.c.0.s8 %v2149
        %v2151 = vlaneseq
        %v2152 = vshrl.u32 %v2151, 7
        %v2153 = vsub.s32 %v2150, %v2152
        %v2154 = vrot.slane %v2146, %v2153
        %v2156 = vunpack.c.l.s4 1934713408
        %v2157 = vunpack.c.0.s8 %v2156
        %v2158 = vlaneseq
        %v2159 = vshrl.u32 %v2158, 7
        %v2160 = vsub.s32 %v2157, %v2159
        %v2161 = vrot.slane %v2147, %v2160
        %v2162 = vcombine.low %v2138, %v2154
        %v2163 = vcombine.high %v2138, %v2154
        %v2164 = vcombine.low %v2145, %v2161
        %v2165 = vcombine.high %v2145, %v2161
        %2166 = vrot.lane.b32.xlu0 %v2015, 96
        %v2167 = vpop.permute.xlu0 %2166
        %2168 = vrot.lane.b32.xlu0 %v2022, 96
        %v2169 = vpop.permute.xlu0 %2168
        %2170 = vrot.lane.b32.xlu0 %v2025, 96
        %v2171 = vpop.permute.xlu0 %2170
        %2172 = vrot.lane.b32.xlu0 %v2028, 96
        %v2173 = vpop.permute.xlu0 %2172
        %v2178 = vcombine.low %v2167, %v2171
        %v2179 = vcombine.high %v2167, %v2171
        %v2181 = vunpack.c.l.s4 1983009808
        %v2182 = vunpack.c.0.s8 %v2181
        %v2183 = vlaneseq
        %v2184 = vshrl.u32 %v2183, 7
        %v2185 = vsub.s32 %v2182, %v2184
        %v2186 = vrot.slane %v2178, %v2185
        %v2188 = vunpack.c.l.s4 1983009808
        %v2189 = vunpack.c.0.s8 %v2188
        %v2190 = vlaneseq
        %v2191 = vshrl.u32 %v2190, 7
        %v2192 = vsub.s32 %v2189, %v2191
        %v2193 = vrot.slane %v2179, %v2192
        %v2194 = vcombine.low %v2169, %v2173
        %v2195 = vcombine.high %v2169, %v2173
        %v2197 = vunpack.c.l.s4 1983009808
        %v2198 = vunpack.c.0.s8 %v2197
        %v2199 = vlaneseq
        %v2200 = vshrl.u32 %v2199, 7
        %v2201 = vsub.s32 %v2198, %v2200
        %v2202 = vrot.slane %v2194, %v2201
        %v2204 = vunpack.c.l.s4 1983009808
        %v2205 = vunpack.c.0.s8 %v2204
        %v2206 = vlaneseq
        %v2207 = vshrl.u32 %v2206, 7
        %v2208 = vsub.s32 %v2205, %v2207
        %v2209 = vrot.slane %v2195, %v2208
        %v2210 = vcombine.low %v2186, %v2202
        %v2211 = vcombine.high %v2186, %v2202
        %v2213 = vunpack.c.l.s4 1934713408
        %v2214 = vunpack.c.0.s8 %v2213
        %v2215 = vlaneseq
        %v2216 = vshrl.u32 %v2215, 7
        %v2217 = vsub.s32 %v2214, %v2216
        %v2218 = vrot.slane %v2210, %v2217
        %v2220 = vunpack.c.l.s4 1934713408
        %v2221 = vunpack.c.0.s8 %v2220
        %v2222 = vlaneseq
        %v2223 = vshrl.u32 %v2222, 7
        %v2224 = vsub.s32 %v2221, %v2223
        %v2225 = vrot.slane %v2211, %v2224
        %v2226 = vcombine.low %v2193, %v2209
        %v2227 = vcombine.high %v2193, %v2209
        %v2229 = vunpack.c.l.s4 1934713408
        %v2230 = vunpack.c.0.s8 %v2229
        %v2231 = vlaneseq
        %v2232 = vshrl.u32 %v2231, 7
        %v2233 = vsub.s32 %v2230, %v2232
        %v2234 = vrot.slane %v2226, %v2233
        %v2236 = vunpack.c.l.s4 1934713408
        %v2237 = vunpack.c.0.s8 %v2236
        %v2238 = vlaneseq
        %v2239 = vshrl.u32 %v2238, 7
        %v2240 = vsub.s32 %v2237, %v2239
        %v2241 = vrot.slane %v2227, %v2240
        %v2242 = vcombine.high %v2218, 0.0
        %v2243 = vcombine.high %v2225, 0.0
        %v2244 = vcombine.high %v2234, 0.0
        %v2245 = vcombine.high %v2241, 0.0
        %v2246 = vcombine.low %v2218, %v2225
        %v2248 = vunpack.c.l.s4 1983009808
        %v2249 = vunpack.c.0.s8 %v2248
        %v2250 = vlaneseq
        %v2251 = vshrl.u32 %v2250, 7
        %v2252 = vsub.s32 %v2249, %v2251
        %v2253 = vrot.slane %v2246, %v2252
        %v2254 = vcombine.low %v2242, %v2243
        %v2256 = vunpack.c.l.s4 1983009808
        %v2257 = vunpack.c.0.s8 %v2256
        %v2258 = vlaneseq
        %v2259 = vshrl.u32 %v2258, 7
        %v2260 = vsub.s32 %v2257, %v2259
        %v2261 = vrot.slane %v2254, %v2260
        %v2262 = vcombine.low %v2234, %v2241
        %v2264 = vunpack.c.l.s4 1983009808
        %v2265 = vunpack.c.0.s8 %v2264
        %v2266 = vlaneseq
        %v2267 = vshrl.u32 %v2266, 7
        %v2268 = vsub.s32 %v2265, %v2267
        %v2269 = vrot.slane %v2262, %v2268
        %v2270 = vcombine.low %v2244, %v2245
        %v2272 = vunpack.c.l.s4 1983009808
        %v2273 = vunpack.c.0.s8 %v2272
        %v2274 = vlaneseq
        %v2275 = vshrl.u32 %v2274, 7
        %v2276 = vsub.s32 %v2273, %v2275
        %v2277 = vrot.slane %v2270, %v2276
        %v2278 = vcombine.low %v2253, %v2261
        %v2279 = vcombine.high %v2253, %v2261
        %v2281 = vunpack.c.l.s4 1934713408
        %v2282 = vunpack.c.0.s8 %v2281
        %v2283 = vlaneseq
        %v2284 = vshrl.u32 %v2283, 7
        %v2285 = vsub.s32 %v2282, %v2284
        %v2286 = vrot.slane %v2278, %v2285
        %v2288 = vunpack.c.l.s4 1934713408
        %v2289 = vunpack.c.0.s8 %v2288
        %v2290 = vlaneseq
        %v2291 = vshrl.u32 %v2290, 7
        %v2292 = vsub.s32 %v2289, %v2291
        %v2293 = vrot.slane %v2279, %v2292
        %v2294 = vcombine.low %v2269, %v2277
        %v2295 = vcombine.high %v2269, %v2277
        %v2297 = vunpack.c.l.s4 1934713408
        %v2298 = vunpack.c.0.s8 %v2297
        %v2299 = vlaneseq
        %v2300 = vshrl.u32 %v2299, 7
        %v2301 = vsub.s32 %v2298, %v2300
        %v2302 = vrot.slane %v2294, %v2301
        %v2304 = vunpack.c.l.s4 1934713408
        %v2305 = vunpack.c.0.s8 %v2304
        %v2306 = vlaneseq
        %v2307 = vshrl.u32 %v2306, 7
        %v2308 = vsub.s32 %v2305, %v2307
        %v2309 = vrot.slane %v2295, %v2308
        %v2310 = vcombine.low %v2286, %v2302
        %v2311 = vcombine.high %v2286, %v2302
        %v2312 = vcombine.low %v2293, %v2309
        %v2313 = vcombine.high %v2293, %v2309
        %2314 = vrot.lane.b32.xlu0 %v2015, 64
        %v2315 = vpop.permute.xlu0 %2314
        %2316 = vrot.lane.b32.xlu0 %v2022, 64
        %v2317 = vpop.permute.xlu0 %2316
        %2318 = vrot.lane.b32.xlu0 %v2025, 64
        %v2319 = vpop.permute.xlu0 %2318
        %2320 = vrot.lane.b32.xlu0 %v2028, 64
        %v2321 = vpop.permute.xlu0 %2320
        %v2326 = vcombine.low %v2315, %v2319
        %v2327 = vcombine.high %v2315, %v2319
        %v2329 = vunpack.c.l.s4 1983009808
        %v2330 = vunpack.c.0.s8 %v2329
        %v2331 = vlaneseq
        %v2332 = vshrl.u32 %v2331, 7
        %v2333 = vsub.s32 %v2330, %v2332
        %v2334 = vrot.slane %v2326, %v2333
        %v2336 = vunpack.c.l.s4 1983009808
        %v2337 = vunpack.c.0.s8 %v2336
        %v2338 = vlaneseq
        %v2339 = vshrl.u32 %v2338, 7
        %v2340 = vsub.s32 %v2337, %v2339
        %v2341 = vrot.slane %v2327, %v2340
        %v2342 = vcombine.low %v2317, %v2321
        %v2343 = vcombine.high %v2317, %v2321
        %v2345 = vunpack.c.l.s4 1983009808
        %v2346 = vunpack.c.0.s8 %v2345
        %v2347 = vlaneseq
        %v2348 = vshrl.u32 %v2347, 7
        %v2349 = vsub.s32 %v2346, %v2348
        %v2350 = vrot.slane %v2342, %v2349
        %v2352 = vunpack.c.l.s4 1983009808
        %v2353 = vunpack.c.0.s8 %v2352
        %v2354 = vlaneseq
        %v2355 = vshrl.u32 %v2354, 7
        %v2356 = vsub.s32 %v2353, %v2355
        %v2357 = vrot.slane %v2343, %v2356
        %v2358 = vcombine.low %v2334, %v2350
        %v2359 = vcombine.high %v2334, %v2350
        %v2361 = vunpack.c.l.s4 1934713408
        %v2362 = vunpack.c.0.s8 %v2361
        %v2363 = vlaneseq
        %v2364 = vshrl.u32 %v2363, 7
        %v2365 = vsub.s32 %v2362, %v2364
        %v2366 = vrot.slane %v2358, %v2365
        %v2368 = vunpack.c.l.s4 1934713408
        %v2369 = vunpack.c.0.s8 %v2368
        %v2370 = vlaneseq
        %v2371 = vshrl.u32 %v2370, 7
        %v2372 = vsub.s32 %v2369, %v2371
        %v2373 = vrot.slane %v2359, %v2372
        %v2374 = vcombine.low %v2341, %v2357
        %v2375 = vcombine.high %v2341, %v2357
        %v2377 = vunpack.c.l.s4 1934713408
        %v2378 = vunpack.c.0.s8 %v2377
        %v2379 = vlaneseq
        %v2380 = vshrl.u32 %v2379, 7
        %v2381 = vsub.s32 %v2378, %v2380
        %v2382 = vrot.slane %v2374, %v2381
        %v2384 = vunpack.c.l.s4 1934713408
        %v2385 = vunpack.c.0.s8 %v2384
        %v2386 = vlaneseq
        %v2387 = vshrl.u32 %v2386, 7
        %v2388 = vsub.s32 %v2385, %v2387
        %v2389 = vrot.slane %v2375, %v2388
        %v2390 = vcombine.high %v2366, 0.0
        %v2391 = vcombine.high %v2373, 0.0
        %v2392 = vcombine.high %v2382, 0.0
        %v2393 = vcombine.high %v2389, 0.0
        %v2394 = vcombine.low %v2366, %v2373
        %v2396 = vunpack.c.l.s4 1983009808
        %v2397 = vunpack.c.0.s8 %v2396
        %v2398 = vlaneseq
        %v2399 = vshrl.u32 %v2398, 7
        %v2400 = vsub.s32 %v2397, %v2399
        %v2401 = vrot.slane %v2394, %v2400
        %v2402 = vcombine.low %v2390, %v2391
        %v2404 = vunpack.c.l.s4 1983009808
        %v2405 = vunpack.c.0.s8 %v2404
        %v2406 = vlaneseq
        %v2407 = vshrl.u32 %v2406, 7
        %v2408 = vsub.s32 %v2405, %v2407
        %v2409 = vrot.slane %v2402, %v2408
        %v2410 = vcombine.low %v2382, %v2389
        %v2412 = vunpack.c.l.s4 1983009808
        %v2413 = vunpack.c.0.s8 %v2412
        %v2414 = vlaneseq
        %v2415 = vshrl.u32 %v2414, 7
        %v2416 = vsub.s32 %v2413, %v2415
        %v2417 = vrot.slane %v2410, %v2416
        %v2418 = vcombine.low %v2392, %v2393
        %v2420 = vunpack.c.l.s4 1983009808
        %v2421 = vunpack.c.0.s8 %v2420
        %v2422 = vlaneseq
        %v2423 = vshrl.u32 %v2422, 7
        %v2424 = vsub.s32 %v2421, %v2423
        %v2425 = vrot.slane %v2418, %v2424
        %v2426 = vcombine.low %v2401, %v2409
        %v2427 = vcombine.high %v2401, %v2409
        %v2429 = vunpack.c.l.s4 1934713408
        %v2430 = vunpack.c.0.s8 %v2429
        %v2431 = vlaneseq
        %v2432 = vshrl.u32 %v2431, 7
        %v2433 = vsub.s32 %v2430, %v2432
        %v2434 = vrot.slane %v2426, %v2433
        %v2436 = vunpack.c.l.s4 1934713408
        %v2437 = vunpack.c.0.s8 %v2436
        %v2438 = vlaneseq
        %v2439 = vshrl.u32 %v2438, 7
        %v2440 = vsub.s32 %v2437, %v2439
        %v2441 = vrot.slane %v2427, %v2440
        %v2442 = vcombine.low %v2417, %v2425
        %v2443 = vcombine.high %v2417, %v2425
        %v2445 = vunpack.c.l.s4 1934713408
        %v2446 = vunpack.c.0.s8 %v2445
        %v2447 = vlaneseq
        %v2448 = vshrl.u32 %v2447, 7
        %v2449 = vsub.s32 %v2446, %v2448
        %v2450 = vrot.slane %v2442, %v2449
        %v2452 = vunpack.c.l.s4 1934713408
        %v2453 = vunpack.c.0.s8 %v2452
        %v2454 = vlaneseq
        %v2455 = vshrl.u32 %v2454, 7
        %v2456 = vsub.s32 %v2453, %v2455
        %v2457 = vrot.slane %v2443, %v2456
        %v2458 = vcombine.low %v2434, %v2450
        %v2459 = vcombine.high %v2434, %v2450
        %v2460 = vcombine.low %v2441, %v2457
        %v2461 = vcombine.high %v2441, %v2457
        %v2463 = vsel %vm976, %v2162, 0
        %v2466 = vsel %vm976, %v2310, 0
        %2468 = vmatprep.subr.mxu0 0.0
        %2469 = vmatpush1.xpose.msra.mxu0 0.0
        %2470 = vmatprep.subr.mxu0 0.0
        %2471 = vmatpush1.xpose.msra.mxu0 0.0
        %2472 = vmatprep.subr.mxu0 0.0
        %2473 = vmatpush1.xpose.msra.mxu0 0.0
        %2474 = vmatprep.subr.mxu0 0.0
        %2475 = vmatpush1.xpose.msra.mxu0 0.0
        %2476 = vmatprep.subr.mxu0 0.0
        %2477 = vmatpush1.xpose.msra.mxu0 0.0
        %2478 = vmatprep.subr.mxu0 0.0
        %2479 = vmatpush1.xpose.msra.mxu0 0.0
        %2480 = vmatprep.subr.mxu0 0.0
        %2481 = vmatpush1.xpose.msra.mxu0 0.0
        %2482 = vmatprep.subr.mxu0 0.0
        %2483 = vmatpush1.xpose.msra.mxu0 0.0
        %2484 = vmatprep.subr.mxu0 0.0
        %2485 = vmatpush1.xpose.msra.mxu0 0.0
        %2486 = vmatprep.subr.mxu0 0.0
        %2487 = vmatpush1.xpose.msra.mxu0 0.0
        %2488 = vmatprep.subr.mxu0 0.0
        %2489 = vmatpush1.xpose.msra.mxu0 0.0
        %2490 = vmatprep.subr.mxu0 0.0
        %2491 = vmatpush1.xpose.msra.mxu0 0.0
        %2492 = vmatprep.subr.mxu0 0.0
        %2493 = vmatpush1.xpose.msra.mxu0 0.0
        %2494 = vmatprep.subr.mxu0 0.0
        %2495 = vmatpush1.xpose.msra.mxu0 0.0
        %2496 = vmatprep.subr.mxu0 0.0
        %2497 = vmatpush1.xpose.msra.mxu0 0.0
        %2498 = vmatprep.subr.mxu0 0.0
        %2499 = vmatpush1.xpose.msra.mxu0 %v2466
        %2500 = vmatprep.subr.mxu0 0.0
        %2501 = vmatpush2.xpose.msra.mxu0 0.0
        %2502 = vmatprep.subr.mxu0 0.0
        %2503 = vmatpush2.xpose.msra.mxu0 0.0
        %2504 = vmatprep.subr.mxu0 0.0
        %2505 = vmatpush2.xpose.msra.mxu0 0.0
        %2506 = vmatprep.subr.mxu0 0.0
        %2507 = vmatpush2.xpose.msra.mxu0 0.0
        %2508 = vmatprep.subr.mxu0 0.0
        %2509 = vmatpush2.xpose.msra.mxu0 0.0
        %2510 = vmatprep.subr.mxu0 0.0
        %2511 = vmatpush2.xpose.msra.mxu0 0.0
        %2512 = vmatprep.subr.mxu0 0.0
        %2513 = vmatpush2.xpose.msra.mxu0 0.0
        %2514 = vmatprep.subr.mxu0 0.0
        %2515 = vmatpush2.xpose.msra.mxu0 0.0
        %2516 = vmatprep.subr.mxu0 0.0
        %2517 = vmatpush2.xpose.msra.mxu0 0.0
        %2518 = vmatprep.subr.mxu0 0.0
        %2519 = vmatpush2.xpose.msra.mxu0 0.0
        %2520 = vmatprep.subr.mxu0 0.0
        %2521 = vmatpush2.xpose.msra.mxu0 0.0
        %2522 = vmatprep.subr.mxu0 0.0
        %2523 = vmatpush2.xpose.msra.mxu0 0.0
        %2524 = vmatprep.subr.mxu0 0.0
        %2525 = vmatpush2.xpose.msra.mxu0 0.0
        %2526 = vmatprep.subr.mxu0 0.0
        %2527 = vmatpush2.xpose.msra.mxu0 0.0
        %2528 = vmatprep.subr.mxu0 0.0
        %2529 = vmatpush2.xpose.msra.mxu0 0.0
        %2530 = vmatprep.subr.mxu0 0.0
        %2531 = vmatpush2.xpose.msra.mxu0 0.0
        %2532 = vmatprep.mubr.f32.mxu0 0.0
        %2533 = vmatmul.mubr.f32.gmra.mxu0 %v2463
        %v2534 = vpop.f32.mrf.mxu0
        %v2535 = vadd.f32 0.0, %v2534
        %v2536 = vpop.f32.mrf.mxu0
        %2537 = vdwg.mxu0
        %v2539 = vsel %vm976, %v2163, 0
        %v2542 = vsel %vm976, %v2311, 0
        %2544 = vmatprep.subr.mxu0 0.0
        %2545 = vmatpush1.xpose.msra.mxu0 0.0
        %2546 = vmatprep.subr.mxu0 0.0
        %2547 = vmatpush1.xpose.msra.mxu0 0.0
        %2548 = vmatprep.subr.mxu0 0.0
        %2549 = vmatpush1.xpose.msra.mxu0 0.0
        %2550 = vmatprep.subr.mxu0 0.0
        %2551 = vmatpush1.xpose.msra.mxu0 0.0
        %2552 = vmatprep.subr.mxu0 0.0
        %2553 = vmatpush1.xpose.msra.mxu0 0.0
        %2554 = vmatprep.subr.mxu0 0.0
        %2555 = vmatpush1.xpose.msra.mxu0 0.0
        %2556 = vmatprep.subr.mxu0 0.0
        %2557 = vmatpush1.xpose.msra.mxu0 0.0
        %2558 = vmatprep.subr.mxu0 0.0
        %2559 = vmatpush1.xpose.msra.mxu0 0.0
        %2560 = vmatprep.subr.mxu0 0.0
        %2561 = vmatpush1.xpose.msra.mxu0 0.0
        %2562 = vmatprep.subr.mxu0 0.0
        %2563 = vmatpush1.xpose.msra.mxu0 0.0
        %2564 = vmatprep.subr.mxu0 0.0
        %2565 = vmatpush1.xpose.msra.mxu0 0.0
        %2566 = vmatprep.subr.mxu0 0.0
        %2567 = vmatpush1.xpose.msra.mxu0 0.0
        %2568 = vmatprep.subr.mxu0 0.0
        %2569 = vmatpush1.xpose.msra.mxu0 0.0
        %2570 = vmatprep.subr.mxu0 0.0
        %2571 = vmatpush1.xpose.msra.mxu0 0.0
        %2572 = vmatprep.subr.mxu0 0.0
        %2573 = vmatpush1.xpose.msra.mxu0 0.0
        %2574 = vmatprep.subr.mxu0 0.0
        %2575 = vmatpush1.xpose.msra.mxu0 %v2542
        %2576 = vmatprep.subr.mxu0 0.0
        %2577 = vmatpush2.xpose.msra.mxu0 0.0
        %2578 = vmatprep.subr.mxu0 0.0
        %2579 = vmatpush2.xpose.msra.mxu0 0.0
        %2580 = vmatprep.subr.mxu0 0.0
        %2581 = vmatpush2.xpose.msra.mxu0 0.0
        %2582 = vmatprep.subr.mxu0 0.0
        %2583 = vmatpush2.xpose.msra.mxu0 0.0
        %2584 = vmatprep.subr.mxu0 0.0
        %2585 = vmatpush2.xpose.msra.mxu0 0.0
        %2586 = vmatprep.subr.mxu0 0.0
        %2587 = vmatpush2.xpose.msra.mxu0 0.0
        %2588 = vmatprep.subr.mxu0 0.0
        %2589 = vmatpush2.xpose.msra.mxu0 0.0
        %2590 = vmatprep.subr.mxu0 0.0
        %2591 = vmatpush2.xpose.msra.mxu0 0.0
        %2592 = vmatprep.subr.mxu0 0.0
        %2593 = vmatpush2.xpose.msra.mxu0 0.0
        %2594 = vmatprep.subr.mxu0 0.0
        %2595 = vmatpush2.xpose.msra.mxu0 0.0
        %2596 = vmatprep.subr.mxu0 0.0
        %2597 = vmatpush2.xpose.msra.mxu0 0.0
        %2598 = vmatprep.subr.mxu0 0.0
        %2599 = vmatpush2.xpose.msra.mxu0 0.0
        %2600 = vmatprep.subr.mxu0 0.0
        %2601 = vmatpush2.xpose.msra.mxu0 0.0
        %2602 = vmatprep.subr.mxu0 0.0
        %2603 = vmatpush2.xpose.msra.mxu0 0.0
        %2604 = vmatprep.subr.mxu0 0.0
        %2605 = vmatpush2.xpose.msra.mxu0 0.0
        %2606 = vmatprep.subr.mxu0 0.0
        %2607 = vmatpush2.xpose.msra.mxu0 0.0
        %2608 = vmatprep.mubr.f32.mxu0 0.0
        %2609 = vmatmul.mubr.f32.gmra.mxu0 %v2539
        %v2610 = vpop.f32.mrf.mxu0
        %v2611 = vadd.f32 0.0, %v2610
        %v2612 = vpop.f32.mrf.mxu0
        %2613 = vdwg.mxu0
        %v2615 = vsel %vm976, %v2164, 0
        %v2618 = vsel %vm976, %v2312, 0
        %2620 = vmatprep.subr.mxu0 0.0
        %2621 = vmatpush1.xpose.msra.mxu0 0.0
        %2622 = vmatprep.subr.mxu0 0.0
        %2623 = vmatpush1.xpose.msra.mxu0 0.0
        %2624 = vmatprep.subr.mxu0 0.0
        %2625 = vmatpush1.xpose.msra.mxu0 0.0
        %2626 = vmatprep.subr.mxu0 0.0
        %2627 = vmatpush1.xpose.msra.mxu0 0.0
        %2628 = vmatprep.subr.mxu0 0.0
        %2629 = vmatpush1.xpose.msra.mxu0 0.0
        %2630 = vmatprep.subr.mxu0 0.0
        %2631 = vmatpush1.xpose.msra.mxu0 0.0
        %2632 = vmatprep.subr.mxu0 0.0
        %2633 = vmatpush1.xpose.msra.mxu0 0.0
        %2634 = vmatprep.subr.mxu0 0.0
        %2635 = vmatpush1.xpose.msra.mxu0 0.0
        %2636 = vmatprep.subr.mxu0 0.0
        %2637 = vmatpush1.xpose.msra.mxu0 0.0
        %2638 = vmatprep.subr.mxu0 0.0
        %2639 = vmatpush1.xpose.msra.mxu0 0.0
        %2640 = vmatprep.subr.mxu0 0.0
        %2641 = vmatpush1.xpose.msra.mxu0 0.0
        %2642 = vmatprep.subr.mxu0 0.0
        %2643 = vmatpush1.xpose.msra.mxu0 0.0
        %2644 = vmatprep.subr.mxu0 0.0
        %2645 = vmatpush1.xpose.msra.mxu0 0.0
        %2646 = vmatprep.subr.mxu0 0.0
        %2647 = vmatpush1.xpose.msra.mxu0 0.0
        %2648 = vmatprep.subr.mxu0 0.0
        %2649 = vmatpush1.xpose.msra.mxu0 0.0
        %2650 = vmatprep.subr.mxu0 0.0
        %2651 = vmatpush1.xpose.msra.mxu0 %v2618
        %2652 = vmatprep.subr.mxu0 0.0
        %2653 = vmatpush2.xpose.msra.mxu0 0.0
        %2654 = vmatprep.subr.mxu0 0.0
        %2655 = vmatpush2.xpose.msra.mxu0 0.0
        %2656 = vmatprep.subr.mxu0 0.0
        %2657 = vmatpush2.xpose.msra.mxu0 0.0
        %2658 = vmatprep.subr.mxu0 0.0
        %2659 = vmatpush2.xpose.msra.mxu0 0.0
        %2660 = vmatprep.subr.mxu0 0.0
        %2661 = vmatpush2.xpose.msra.mxu0 0.0
        %2662 = vmatprep.subr.mxu0 0.0
        %2663 = vmatpush2.xpose.msra.mxu0 0.0
        %2664 = vmatprep.subr.mxu0 0.0
        %2665 = vmatpush2.xpose.msra.mxu0 0.0
        %2666 = vmatprep.subr.mxu0 0.0
        %2667 = vmatpush2.xpose.msra.mxu0 0.0
        %2668 = vmatprep.subr.mxu0 0.0
        %2669 = vmatpush2.xpose.msra.mxu0 0.0
        %2670 = vmatprep.subr.mxu0 0.0
        %2671 = vmatpush2.xpose.msra.mxu0 0.0
        %2672 = vmatprep.subr.mxu0 0.0
        %2673 = vmatpush2.xpose.msra.mxu0 0.0
        %2674 = vmatprep.subr.mxu0 0.0
        %2675 = vmatpush2.xpose.msra.mxu0 0.0
        %2676 = vmatprep.subr.mxu0 0.0
        %2677 = vmatpush2.xpose.msra.mxu0 0.0
        %2678 = vmatprep.subr.mxu0 0.0
        %2679 = vmatpush2.xpose.msra.mxu0 0.0
        %2680 = vmatprep.subr.mxu0 0.0
        %2681 = vmatpush2.xpose.msra.mxu0 0.0
        %2682 = vmatprep.subr.mxu0 0.0
        %2683 = vmatpush2.xpose.msra.mxu0 0.0
        %2684 = vmatprep.mubr.f32.mxu0 0.0
        %2685 = vmatmul.mubr.f32.gmra.mxu0 %v2615
        %v2686 = vpop.f32.mrf.mxu0
        %v2687 = vadd.f32 0.0, %v2686
        %v2688 = vpop.f32.mrf.mxu0
        %2689 = vdwg.mxu0
        %v2691 = vsel %vm976, %v2165, 0
        %v2694 = vsel %vm976, %v2313, 0
        %2696 = vmatprep.subr.mxu0 0.0
        %2697 = vmatpush1.xpose.msra.mxu0 0.0
        %2698 = vmatprep.subr.mxu0 0.0
        %2699 = vmatpush1.xpose.msra.mxu0 0.0
        %2700 = vmatprep.subr.mxu0 0.0
        %2701 = vmatpush1.xpose.msra.mxu0 0.0
        %2702 = vmatprep.subr.mxu0 0.0
        %2703 = vmatpush1.xpose.msra.mxu0 0.0
        %2704 = vmatprep.subr.mxu0 0.0
        %2705 = vmatpush1.xpose.msra.mxu0 0.0
        %2706 = vmatprep.subr.mxu0 0.0
        %2707 = vmatpush1.xpose.msra.mxu0 0.0
        %2708 = vmatprep.subr.mxu0 0.0
        %2709 = vmatpush1.xpose.msra.mxu0 0.0
        %2710 = vmatprep.subr.mxu0 0.0
        %2711 = vmatpush1.xpose.msra.mxu0 0.0
        %2712 = vmatprep.subr.mxu0 0.0
        %2713 = vmatpush1.xpose.msra.mxu0 0.0
        %2714 = vmatprep.subr.mxu0 0.0
        %2715 = vmatpush1.xpose.msra.mxu0 0.0
        %2716 = vmatprep.subr.mxu0 0.0
        %2717 = vmatpush1.xpose.msra.mxu0 0.0
        %2718 = vmatprep.subr.mxu0 0.0
        %2719 = vmatpush1.xpose.msra.mxu0 0.0
        %2720 = vmatprep.subr.mxu0 0.0
        %2721 = vmatpush1.xpose.msra.mxu0 0.0
        %2722 = vmatprep.subr.mxu0 0.0
        %2723 = vmatpush1.xpose.msra.mxu0 0.0
        %2724 = vmatprep.subr.mxu0 0.0
        %2725 = vmatpush1.xpose.msra.mxu0 0.0
        %2726 = vmatprep.subr.mxu0 0.0
        %2727 = vmatpush1.xpose.msra.mxu0 %v2694
        %2728 = vmatprep.subr.mxu0 0.0
        %2729 = vmatpush2.xpose.msra.mxu0 0.0
        %2730 = vmatprep.subr.mxu0 0.0
        %2731 = vmatpush2.xpose.msra.mxu0 0.0
        %2732 = vmatprep.subr.mxu0 0.0
        %2733 = vmatpush2.xpose.msra.mxu0 0.0
        %2734 = vmatprep.subr.mxu0 0.0
        %2735 = vmatpush2.xpose.msra.mxu0 0.0
        %2736 = vmatprep.subr.mxu0 0.0
        %2737 = vmatpush2.xpose.msra.mxu0 0.0
        %2738 = vmatprep.subr.mxu0 0.0
        %2739 = vmatpush2.xpose.msra.mxu0 0.0
        %2740 = vmatprep.subr.mxu0 0.0
        %2741 = vmatpush2.xpose.msra.mxu0 0.0
        %2742 = vmatprep.subr.mxu0 0.0
        %2743 = vmatpush2.xpose.msra.mxu0 0.0
        %2744 = vmatprep.subr.mxu0 0.0
        %2745 = vmatpush2.xpose.msra.mxu0 0.0
        %2746 = vmatprep.subr.mxu0 0.0
        %2747 = vmatpush2.xpose.msra.mxu0 0.0
        %2748 = vmatprep.subr.mxu0 0.0
        %2749 = vmatpush2.xpose.msra.mxu0 0.0
        %2750 = vmatprep.subr.mxu0 0.0
        %2751 = vmatpush2.xpose.msra.mxu0 0.0
        %2752 = vmatprep.subr.mxu0 0.0
        %2753 = vmatpush2.xpose.msra.mxu0 0.0
        %2754 = vmatprep.subr.mxu0 0.0
        %2755 = vmatpush2.xpose.msra.mxu0 0.0
        %2756 = vmatprep.subr.mxu0 0.0
        %2757 = vmatpush2.xpose.msra.mxu0 0.0
        %2758 = vmatprep.subr.mxu0 0.0
        %2759 = vmatpush2.xpose.msra.mxu0 0.0
        %2760 = vmatprep.mubr.f32.mxu0 0.0
        %2761 = vmatmul.mubr.f32.gmra.mxu0 %v2691
        %v2762 = vpop.f32.mrf.mxu0
        %v2763 = vadd.f32 0.0, %v2762
        %v2764 = vpop.f32.mrf.mxu0
        %2765 = vdwg.mxu0
        %v2766 = vsel %vm976, %v2535, -inf
        %2767 = vmax.xlane.f32.xlu0 %v2766
        %v2768 = vpop.xlane.xlu0 %2767
        %v2769 = vsel %vm976, %v2611, -inf
        %2770 = vmax.xlane.f32.xlu0 %v2769
        %v2771 = vpop.xlane.xlu0 %2770
        %v2772 = vsel %vm976, %v2687, -inf
        %2773 = vmax.xlane.f32.xlu0 %v2772
        %v2774 = vpop.xlane.xlu0 %2773
        %v2775 = vsel %vm976, %v2763, -inf
        %2776 = vmax.xlane.f32.xlu0 %v2775
        %v2777 = vpop.xlane.xlu0 %2776
        %v2778 = vsub.f32 %v2535, %v2768
        %v2779 = vsub.f32 %v2611, %v2771
        %v2780 = vsub.f32 %v2687, %v2774
        %v2781 = vsub.f32 %v2763, %v2777
        %v2782 = vmul.f32 %v2778, 1.442695
        %v2783 = vpow.pop %v2782
        %v2784 = vmul.f32 %v2779, 1.442695
        %v2785 = vpow.pop %v2784
        %v2786 = vmul.f32 %v2780, 1.442695
        %v2787 = vpow.pop %v2786
        %v2788 = vmul.f32 %v2781, 1.442695
        %v2789 = vpow.pop %v2788
        %v2790 = vsel %vm976, %v2783, 0.0
        %2791 = vadd.xlane.f32.xlu0 %v2790
        %v2792 = vpop.xlane.xlu0 %2791
        %v2793 = vsel %vm976, %v2785, 0.0
        %2794 = vadd.xlane.f32.xlu0 %v2793
        %v2795 = vpop.xlane.xlu0 %2794
        %v2796 = vsel %vm976, %v2787, 0.0
        %2797 = vadd.xlane.f32.xlu0 %v2796
        %v2798 = vpop.xlane.xlu0 %2797
        %v2799 = vsel %vm976, %v2789, 0.0
        %2800 = vadd.xlane.f32.xlu0 %v2799
        %v2801 = vpop.xlane.xlu0 %2800
        %v2802 = vrcp.pop %v2792
        %v2803 = vrcp.pop %v2795
        %v2804 = vrcp.pop %v2798
        %v2805 = vrcp.pop %v2801
        %v2806 = vmul.f32 %v2783, %v2802
        %v2807 = vmul.f32 %v2785, %v2803
        %v2808 = vmul.f32 %v2787, %v2804
        %v2809 = vmul.f32 %v2789, %v2805
        %v2810 = vpack.c.bf16 %v2806, %v2806
        %v2811 = vpack.c.bf16 %v2807, %v2807
        %v2812 = vpack.c.bf16 %v2808, %v2808
        %v2813 = vpack.c.bf16 %v2809, %v2809
        %v2814 = vpack.c.bf16 %v2458, %v2458
        %v2815 = vpack.c.bf16 %v2459, %v2459
        %v2816 = vpack.c.bf16 %v2460, %v2460
        %v2817 = vpack.c.bf16 %v2461, %v2461
        %v2819 = vsel %vm976, %v2810, 0
        %v2822 = vsel %vm1336, %v2814, 0
        %2824 = vmatprep.subr.bf16.mxu0 0
        %2825 = vmatpush1.bf16.msra.mxu0 0
        %2826 = vmatprep.subr.bf16.mxu0 0
        %2827 = vmatpush1.bf16.msra.mxu0 0
        %2828 = vmatprep.subr.bf16.mxu0 0
        %2829 = vmatpush1.bf16.msra.mxu0 0
        %2830 = vmatprep.subr.bf16.mxu0 0
        %2831 = vmatpush1.bf16.msra.mxu0 0
        %2832 = vmatprep.subr.bf16.mxu0 0
        %2833 = vmatpush1.bf16.msra.mxu0 0
        %2834 = vmatprep.subr.bf16.mxu0 0
        %2835 = vmatpush1.bf16.msra.mxu0 0
        %2836 = vmatprep.subr.bf16.mxu0 0
        %2837 = vmatpush1.bf16.msra.mxu0 0
        %2838 = vmatprep.subr.bf16.mxu0 0
        %2839 = vmatpush1.bf16.msra.mxu0 %v2822
        %2840 = vmatprep.subr.bf16.mxu0 0
        %2841 = vmatpush2.bf16.msra.mxu0 0
        %2842 = vmatprep.subr.bf16.mxu0 0
        %2843 = vmatpush2.bf16.msra.mxu0 0
        %2844 = vmatprep.subr.bf16.mxu0 0
        %2845 = vmatpush2.bf16.msra.mxu0 0
        %2846 = vmatprep.subr.bf16.mxu0 0
        %2847 = vmatpush2.bf16.msra.mxu0 0
        %2848 = vmatprep.subr.bf16.mxu0 0
        %2849 = vmatpush2.bf16.msra.mxu0 0
        %2850 = vmatprep.subr.bf16.mxu0 0
        %2851 = vmatpush2.bf16.msra.mxu0 0
        %2852 = vmatprep.subr.bf16.mxu0 0
        %2853 = vmatpush2.bf16.msra.mxu0 0
        %2854 = vmatprep.subr.bf16.mxu0 0
        %2855 = vmatpush2.bf16.msra.mxu0 0
        %2856 = vmatprep.mubr.bf16.mxu0 0
        %2857 = vmatmul.mubr.bf16.gmra.mxu0 %v2819
        %v2858 = vpop.f32.mrf.mxu0
        %v2859 = vadd.f32 0.0, %v2858
        %v2860 = vpop.f32.mrf.mxu0
        %v2861 = vpop.f32.mrf.mxu0
        %v2862 = vpop.f32.mrf.mxu0
        %2863 = vdwg.mxu0
        %v2865 = vsel %vm976, %v2811, 0
        %v2868 = vsel %vm1336, %v2815, 0
        %2870 = vmatprep.subr.bf16.mxu0 0
        %2871 = vmatpush1.bf16.msra.mxu0 0
        %2872 = vmatprep.subr.bf16.mxu0 0
        %2873 = vmatpush1.bf16.msra.mxu0 0
        %2874 = vmatprep.subr.bf16.mxu0 0
        %2875 = vmatpush1.bf16.msra.mxu0 0
        %2876 = vmatprep.subr.bf16.mxu0 0
        %2877 = vmatpush1.bf16.msra.mxu0 0
        %2878 = vmatprep.subr.bf16.mxu0 0
        %2879 = vmatpush1.bf16.msra.mxu0 0
        %2880 = vmatprep.subr.bf16.mxu0 0
        %2881 = vmatpush1.bf16.msra.mxu0 0
        %2882 = vmatprep.subr.bf16.mxu0 0
        %2883 = vmatpush1.bf16.msra.mxu0 0
        %2884 = vmatprep.subr.bf16.mxu0 0
        %2885 = vmatpush1.bf16.msra.mxu0 %v2868
        %2886 = vmatprep.subr.bf16.mxu0 0
        %2887 = vmatpush2.bf16.msra.mxu0 0
        %2888 = vmatprep.subr.bf16.mxu0 0
        %2889 = vmatpush2.bf16.msra.mxu0 0
        %2890 = vmatprep.subr.bf16.mxu0 0
        %2891 = vmatpush2.bf16.msra.mxu0 0
        %2892 = vmatprep.subr.bf16.mxu0 0
        %2893 = vmatpush2.bf16.msra.mxu0 0
        %2894 = vmatprep.subr.bf16.mxu0 0
        %2895 = vmatpush2.bf16.msra.mxu0 0
        %2896 = vmatprep.subr.bf16.mxu0 0
        %2897 = vmatpush2.bf16.msra.mxu0 0
        %2898 = vmatprep.subr.bf16.mxu0 0
        %2899 = vmatpush2.bf16.msra.mxu0 0
        %2900 = vmatprep.subr.bf16.mxu0 0
        %2901 = vmatpush2.bf16.msra.mxu0 0
        %2902 = vmatprep.mubr.bf16.mxu0 0
        %2903 = vmatmul.mubr.bf16.gmra.mxu0 %v2865
        %v2904 = vpop.f32.mrf.mxu0
        %v2905 = vadd.f32 0.0, %v2904
        %v2906 = vpop.f32.mrf.mxu0
        %v2907 = vpop.f32.mrf.mxu0
        %v2908 = vpop.f32.mrf.mxu0
        %2909 = vdwg.mxu0
        %v2911 = vsel %vm976, %v2812, 0
        %v2914 = vsel %vm1336, %v2816, 0
        %2916 = vmatprep.subr.bf16.mxu0 0
        %2917 = vmatpush1.bf16.msra.mxu0 0
        %2918 = vmatprep.subr.bf16.mxu0 0
        %2919 = vmatpush1.bf16.msra.mxu0 0
        %2920 = vmatprep.subr.bf16.mxu0 0
        %2921 = vmatpush1.bf16.msra.mxu0 0
        %2922 = vmatprep.subr.bf16.mxu0 0
        %2923 = vmatpush1.bf16.msra.mxu0 0
        %2924 = vmatprep.subr.bf16.mxu0 0
        %2925 = vmatpush1.bf16.msra.mxu0 0
        %2926 = vmatprep.subr.bf16.mxu0 0
        %2927 = vmatpush1.bf16.msra.mxu0 0
        %2928 = vmatprep.subr.bf16.mxu0 0
        %2929 = vmatpush1.bf16.msra.mxu0 0
        %2930 = vmatprep.subr.bf16.mxu0 0
        %2931 = vmatpush1.bf16.msra.mxu0 %v2914
        %2932 = vmatprep.subr.bf16.mxu0 0
        %2933 = vmatpush2.bf16.msra.mxu0 0
        %2934 = vmatprep.subr.bf16.mxu0 0
        %2935 = vmatpush2.bf16.msra.mxu0 0
        %2936 = vmatprep.subr.bf16.mxu0 0
        %2937 = vmatpush2.bf16.msra.mxu0 0
        %2938 = vmatprep.subr.bf16.mxu0 0
        %2939 = vmatpush2.bf16.msra.mxu0 0
        %2940 = vmatprep.subr.bf16.mxu0 0
        %2941 = vmatpush2.bf16.msra.mxu0 0
        %2942 = vmatprep.subr.bf16.mxu0 0
        %2943 = vmatpush2.bf16.msra.mxu0 0
        %2944 = vmatprep.subr.bf16.mxu0 0
        %2945 = vmatpush2.bf16.msra.mxu0 0
        %2946 = vmatprep.subr.bf16.mxu0 0
        %2947 = vmatpush2.bf16.msra.mxu0 0
        %2948 = vmatprep.mubr.bf16.mxu0 0
        %2949 = vmatmul.mubr.bf16.gmra.mxu0 %v2911
        %v2950 = vpop.f32.mrf.mxu0
        %v2951 = vadd.f32 0.0, %v2950
        %v2952 = vpop.f32.mrf.mxu0
        %v2953 = vpop.f32.mrf.mxu0
        %v2954 = vpop.f32.mrf.mxu0
        %2955 = vdwg.mxu0
        %v2957 = vsel %vm976, %v2813, 0
        %v2960 = vsel %vm1336, %v2817, 0
        %2962 = vmatprep.subr.bf16.mxu0 0
        %2963 = vmatpush1.bf16.msra.mxu0 0
        %2964 = vmatprep.subr.bf16.mxu0 0
        %2965 = vmatpush1.bf16.msra.mxu0 0
        %2966 = vmatprep.subr.bf16.mxu0 0
        %2967 = vmatpush1.bf16.msra.mxu0 0
        %2968 = vmatprep.subr.bf16.mxu0 0
        %2969 = vmatpush1.bf16.msra.mxu0 0
        %2970 = vmatprep.subr.bf16.mxu0 0
        %2971 = vmatpush1.bf16.msra.mxu0 0
        %2972 = vmatprep.subr.bf16.mxu0 0
        %2973 = vmatpush1.bf16.msra.mxu0 0
        %2974 = vmatprep.subr.bf16.mxu0 0
        %2975 = vmatpush1.bf16.msra.mxu0 0
        %2976 = vmatprep.subr.bf16.mxu0 0
        %2977 = vmatpush1.bf16.msra.mxu0 %v2960
        %2978 = vmatprep.subr.bf16.mxu0 0
        %2979 = vmatpush2.bf16.msra.mxu0 0
        %2980 = vmatprep.subr.bf16.mxu0 0
        %2981 = vmatpush2.bf16.msra.mxu0 0
        %2982 = vmatprep.subr.bf16.mxu0 0
        %2983 = vmatpush2.bf16.msra.mxu0 0
        %2984 = vmatprep.subr.bf16.mxu0 0
        %2985 = vmatpush2.bf16.msra.mxu0 0
        %2986 = vmatprep.subr.bf16.mxu0 0
        %2987 = vmatpush2.bf16.msra.mxu0 0
        %2988 = vmatprep.subr.bf16.mxu0 0
        %2989 = vmatpush2.bf16.msra.mxu0 0
        %2990 = vmatprep.subr.bf16.mxu0 0
        %2991 = vmatpush2.bf16.msra.mxu0 0
        %2992 = vmatprep.subr.bf16.mxu0 0
        %2993 = vmatpush2.bf16.msra.mxu0 0
        %2994 = vmatprep.mubr.bf16.mxu0 0
        %2995 = vmatmul.mubr.bf16.gmra.mxu0 %v2957
        %v2996 = vpop.f32.mrf.mxu0
        %v2997 = vadd.f32 0.0, %v2996
        %v2998 = vpop.f32.mrf.mxu0
        %v2999 = vpop.f32.mrf.mxu0
        %v3000 = vpop.f32.mrf.mxu0
        %3001 = vdwg.mxu0
        %v3002 = vcombine.low %v2859, %v2951
        %v3003 = vcombine.high %v2859, %v2951
        %v3005 = vunpack.c.l.s4 1983009808
        %v3006 = vunpack.c.0.s8 %v3005
        %v3007 = vlaneseq
        %v3008 = vshrl.u32 %v3007, 7
        %v3009 = vsub.s32 %v3006, %v3008
        %v3010 = vrot.slane %v3002, %v3009
        %v3012 = vunpack.c.l.s4 1983009808
        %v3013 = vunpack.c.0.s8 %v3012
        %v3014 = vlaneseq
        %v3015 = vshrl.u32 %v3014, 7
        %v3016 = vsub.s32 %v3013, %v3015
        %v3017 = vrot.slane %v3003, %v3016
        %v3018 = vcombine.low %v2905, %v2997
        %v3019 = vcombine.high %v2905, %v2997
        %v3021 = vunpack.c.l.s4 1983009808
        %v3022 = vunpack.c.0.s8 %v3021
        %v3023 = vlaneseq
        %v3024 = vshrl.u32 %v3023, 7
        %v3025 = vsub.s32 %v3022, %v3024
        %v3026 = vrot.slane %v3018, %v3025
        %v3028 = vunpack.c.l.s4 1983009808
        %v3029 = vunpack.c.0.s8 %v3028
        %v3030 = vlaneseq
        %v3031 = vshrl.u32 %v3030, 7
        %v3032 = vsub.s32 %v3029, %v3031
        %v3033 = vrot.slane %v3019, %v3032
        %v3034 = vcombine.low %v3010, %v3026
        %v3035 = vcombine.high %v3010, %v3026
        %v3037 = vunpack.c.l.s4 1934713408
        %v3038 = vunpack.c.0.s8 %v3037
        %v3039 = vlaneseq
        %v3040 = vshrl.u32 %v3039, 7
        %v3041 = vsub.s32 %v3038, %v3040
        %v3042 = vrot.slane %v3034, %v3041
        %v3044 = vunpack.c.l.s4 1934713408
        %v3045 = vunpack.c.0.s8 %v3044
        %v3046 = vlaneseq
        %v3047 = vshrl.u32 %v3046, 7
        %v3048 = vsub.s32 %v3045, %v3047
        %v3049 = vrot.slane %v3035, %v3048
        %v3050 = vcombine.low %v3017, %v3033
        %v3051 = vcombine.high %v3017, %v3033
        %v3053 = vunpack.c.l.s4 1934713408
        %v3054 = vunpack.c.0.s8 %v3053
        %v3055 = vlaneseq
        %v3056 = vshrl.u32 %v3055, 7
        %v3057 = vsub.s32 %v3054, %v3056
        %v3058 = vrot.slane %v3050, %v3057
        %v3060 = vunpack.c.l.s4 1934713408
        %v3061 = vunpack.c.0.s8 %v3060
        %v3062 = vlaneseq
        %v3063 = vshrl.u32 %v3062, 7
        %v3064 = vsub.s32 %v3061, %v3063
        %v3065 = vrot.slane %v3051, %v3064
        %v3066 = vcombine.high %v3042, 0.0
        %v3067 = vcombine.high %v3049, 0.0
        %v3068 = vcombine.high %v3058, 0.0
        %v3069 = vcombine.high %v3065, 0.0
        %v3070 = vcombine.low %v3042, %v3049
        %v3072 = vunpack.c.l.s4 1983009808
        %v3073 = vunpack.c.0.s8 %v3072
        %v3074 = vlaneseq
        %v3075 = vshrl.u32 %v3074, 7
        %v3076 = vsub.s32 %v3073, %v3075
        %v3077 = vrot.slane %v3070, %v3076
        %v3078 = vcombine.low %v3066, %v3067
        %v3080 = vunpack.c.l.s4 1983009808
        %v3081 = vunpack.c.0.s8 %v3080
        %v3082 = vlaneseq
        %v3083 = vshrl.u32 %v3082, 7
        %v3084 = vsub.s32 %v3081, %v3083
        %v3085 = vrot.slane %v3078, %v3084
        %v3086 = vcombine.low %v3058, %v3065
        %v3088 = vunpack.c.l.s4 1983009808
        %v3089 = vunpack.c.0.s8 %v3088
        %v3090 = vlaneseq
        %v3091 = vshrl.u32 %v3090, 7
        %v3092 = vsub.s32 %v3089, %v3091
        %v3093 = vrot.slane %v3086, %v3092
        %v3094 = vcombine.low %v3068, %v3069
        %v3096 = vunpack.c.l.s4 1983009808
        %v3097 = vunpack.c.0.s8 %v3096
        %v3098 = vlaneseq
        %v3099 = vshrl.u32 %v3098, 7
        %v3100 = vsub.s32 %v3097, %v3099
        %v3101 = vrot.slane %v3094, %v3100
        %v3102 = vcombine.low %v3077, %v3085
        %v3103 = vcombine.high %v3077, %v3085
        %v3105 = vunpack.c.l.s4 1934713408
        %v3106 = vunpack.c.0.s8 %v3105
        %v3107 = vlaneseq
        %v3108 = vshrl.u32 %v3107, 7
        %v3109 = vsub.s32 %v3106, %v3108
        %v3110 = vrot.slane %v3102, %v3109
        %v3112 = vunpack.c.l.s4 1934713408
        %v3113 = vunpack.c.0.s8 %v3112
        %v3114 = vlaneseq
        %v3115 = vshrl.u32 %v3114, 7
        %v3116 = vsub.s32 %v3113, %v3115
        %v3117 = vrot.slane %v3103, %v3116
        %v3118 = vcombine.low %v3093, %v3101
        %v3119 = vcombine.high %v3093, %v3101
        %v3121 = vunpack.c.l.s4 1934713408
        %v3122 = vunpack.c.0.s8 %v3121
        %v3123 = vlaneseq
        %v3124 = vshrl.u32 %v3123, 7
        %v3125 = vsub.s32 %v3122, %v3124
        %v3126 = vrot.slane %v3118, %v3125
        %v3128 = vunpack.c.l.s4 1934713408
        %v3129 = vunpack.c.0.s8 %v3128
        %v3130 = vlaneseq
        %v3131 = vshrl.u32 %v3130, 7
        %v3132 = vsub.s32 %v3129, %v3131
        %v3133 = vrot.slane %v3119, %v3132
        %v3134 = vcombine.low %v3110, %v3126
        %v3135 = vcombine.high %v3110, %v3126
        %v3136 = vcombine.low %v3117, %v3133
        %v3137 = vcombine.high %v3117, %v3133
        %3139 = vrot.lane.b32.xlu0 %v3135, 8
        %v3140 = vpop.permute.xlu0 %3139
        %3143 = vrot.lane.b32.xlu0 %v3136, 16
        %v3144 = vpop.permute.xlu0 %3143
        %3147 = vrot.lane.b32.xlu0 %v3137, 24
        %v3148 = vpop.permute.xlu0 %3147
        %v3150 = vsel %vm976, %v3134, %v3140
        %v3151 = vsel %vm1667, %v3150, %v3144
        %v3152 = vsel %vm1669, %v3151, %v3148
        %v3153 = vpack.c.bf16 %v3152, %v3152
        %s3154 = scalar_lea.vmem %s4, 16
        %v3155 = vld [vmem:[%s3154] sm:$0xf]
        %v3156 = vld [vmem:[%s3154 + $0x4] sm:$0xf]
        %v3157 = vld [vmem:[%s3154 + $0x8] sm:$0xf]
        %v3158 = vld [vmem:[%s3154 + $0xc] sm:$0xf]
        %s3159 = scalar_lea.vmem %s5, 1
        %v3160 = vld [vmem:[%s3159] sm:$0x1]
        %v3162 = vlaneseq
        %v3163 = vshrl.u32 %v3162, 7
        %v3164 = vsub.s32 0, %v3163
        %v3165 = vrot.slane %v3160, %v3164
        %v3171 = vunpack.c.l.b16 %v3155
        %v3172 = vunpack.c.l.b16 %v3156
        %v3173 = vunpack.c.l.b16 %v3157
        %v3174 = vunpack.c.l.b16 %v3158
        %v3175 = vpack.c.b16 %v3172, %v3171
        %v3176 = vpack.c.b16 %v3174, %v3173
        %v3180 = vsel %vm490, %v3153, 0
        %3182 = vmatprep.subr.bf16.mxu0 0
        %3183 = vmatpush1.bf16.msra.mxu0 0
        %3184 = vmatprep.subr.bf16.mxu0 0
        %3185 = vmatpush1.bf16.msra.mxu0 0
        %3186 = vmatprep.subr.bf16.mxu0 0
        %3187 = vmatpush1.bf16.msra.mxu0 0
        %3188 = vmatprep.subr.bf16.mxu0 0
        %3189 = vmatpush1.bf16.msra.mxu0 0
        %3190 = vmatprep.subr.bf16.mxu0 0
        %3191 = vmatpush1.bf16.msra.mxu0 0
        %3192 = vmatprep.subr.bf16.mxu0 0
        %3193 = vmatpush1.bf16.msra.mxu0 0
        %3194 = vmatprep.subr.bf16.mxu0 0
        %3195 = vmatpush1.bf16.msra.mxu0 %v3176
        %3196 = vmatprep.subr.bf16.mxu0 0
        %3197 = vmatpush1.bf16.msra.mxu0 %v3175
        %3198 = vmatprep.subr.bf16.mxu0 0
        %3199 = vmatpush2.bf16.msra.mxu0 0
        %3200 = vmatprep.subr.bf16.mxu0 0
        %3201 = vmatpush2.bf16.msra.mxu0 0
        %3202 = vmatprep.subr.bf16.mxu0 0
        %3203 = vmatpush2.bf16.msra.mxu0 0
        %3204 = vmatprep.subr.bf16.mxu0 0
        %3205 = vmatpush2.bf16.msra.mxu0 0
        %3206 = vmatprep.subr.bf16.mxu0 0
        %3207 = vmatpush2.bf16.msra.mxu0 0
        %3208 = vmatprep.subr.bf16.mxu0 0
        %3209 = vmatpush2.bf16.msra.mxu0 0
        %3210 = vmatprep.subr.bf16.mxu0 0
        %3211 = vmatpush2.bf16.msra.mxu0 0
        %3212 = vmatprep.subr.bf16.mxu0 0
        %3213 = vmatpush2.bf16.msra.mxu0 0
        %3214 = vmatprep.mubr.bf16.mxu0 0
        %3215 = vmatmul.mubr.bf16.gmra.mxu0 %v3180
        %v3216 = vpop.f32.mrf.mxu0
        %v3217 = vadd.f32 %v3165, %v3216
        %v3218 = vpop.f32.mrf.mxu0
        %v3219 = vpop.f32.mrf.mxu0
        %v3220 = vpop.f32.mrf.mxu0
        %3221 = vdwg.mxu0
        %v3222 = vadd.f32 %v1950, %v3217
        %s3223 = scalar_lea.vmem %s10, 1
        %v3224 = vld [vmem:[%s3223] sm:$0x1]
        %s3225 = scalar_lea.vmem %s11, 1
        %v3226 = vld [vmem:[%s3225] sm:$0x1]
        %v3227 = vsel %vm490, %v3222, 0.0
        %3228 = vadd.xlane.f32.xlu0 %v3227
        %v3229 = vpop.xlane.xlu0 %3228
        %v3230 = vmul.f32 %v3229, %v1744
        %v3231 = vsub.f32 %v3222, %v3230
        %v3232 = vmul.f32 %v3231, %v3231
        %v3233 = vsel %vm490, %v3232, 0.0
        %3234 = vadd.xlane.f32.xlu0 %v3233
        %v3235 = vpop.xlane.xlu0 %3234
        %v3236 = vmul.f32 %v3235, %v1744
        %v3237 = vadd.f32 %v3236, 1e-05
        %v3238 = vrsqrt.pop %v3237
        %v3239 = vmul.f32 %v3231, %v3238
        %v3241 = vlaneseq
        %v3242 = vshrl.u32 %v3241, 7
        %v3243 = vsub.s32 0, %v3242
        %v3244 = vrot.slane %v3224, %v3243
        %v3246 = vmul.f32 %v3239, %v3244
        %v3248 = vlaneseq
        %v3249 = vshrl.u32 %v3248, 7
        %v3250 = vsub.s32 0, %v3249
        %v3251 = vrot.slane %v3226, %v3250
        %v3253 = vadd.f32 %v3246, %v3251
        %v3254 = vpack.c.bf16 %v3253, %v3253
        %s3255 = scalar_lea.vmem %s6, 16
        %v3256 = vld [vmem:[%s3255] sm:$0xf]
        %v3257 = vld [vmem:[%s3255 + $0x4] sm:$0xf]
        %v3258 = vld [vmem:[%s3255 + $0x8] sm:$0xf]
        %v3259 = vld [vmem:[%s3255 + $0xc] sm:$0xf]
        %s3260 = scalar_lea.vmem %s7, 1
        %v3261 = vld [vmem:[%s3260] sm:$0x1]
        %v3263 = vlaneseq
        %v3264 = vshrl.u32 %v3263, 7
        %v3265 = vsub.s32 0, %v3264
        %v3266 = vrot.slane %v3261, %v3265
        %v3272 = vunpack.c.l.b16 %v3256
        %v3273 = vunpack.c.l.b16 %v3257
        %v3274 = vunpack.c.l.b16 %v3258
        %v3275 = vunpack.c.l.b16 %v3259
        %v3276 = vpack.c.b16 %v3273, %v3272
        %v3277 = vpack.c.b16 %v3275, %v3274
        %v3281 = vsel %vm490, %v3254, 0
        %3283 = vmatprep.subr.bf16.mxu0 0
        %3284 = vmatpush1.bf16.msra.mxu0 0
        %3285 = vmatprep.subr.bf16.mxu0 0
        %3286 = vmatpush1.bf16.msra.mxu0 0
        %3287 = vmatprep.subr.bf16.mxu0 0
        %3288 = vmatpush1.bf16.msra.mxu0 0
        %3289 = vmatprep.subr.bf16.mxu0 0
        %3290 = vmatpush1.bf16.msra.mxu0 0
        %3291 = vmatprep.subr.bf16.mxu0 0
        %3292 = vmatpush1.bf16.msra.mxu0 0
        %3293 = vmatprep.subr.bf16.mxu0 0
        %3294 = vmatpush1.bf16.msra.mxu0 0
        %3295 = vmatprep.subr.bf16.mxu0 0
        %3296 = vmatpush1.bf16.msra.mxu0 %v3277
        %3297 = vmatprep.subr.bf16.mxu0 0
        %3298 = vmatpush1.bf16.msra.mxu0 %v3276
        %3299 = vmatprep.subr.bf16.mxu0 0
        %3300 = vmatpush2.bf16.msra.mxu0 0
        %3301 = vmatprep.subr.bf16.mxu0 0
        %3302 = vmatpush2.bf16.msra.mxu0 0
        %3303 = vmatprep.subr.bf16.mxu0 0
        %3304 = vmatpush2.bf16.msra.mxu0 0
        %3305 = vmatprep.subr.bf16.mxu0 0
        %3306 = vmatpush2.bf16.msra.mxu0 0
        %3307 = vmatprep.subr.bf16.mxu0 0
        %3308 = vmatpush2.bf16.msra.mxu0 0
        %3309 = vmatprep.subr.bf16.mxu0 0
        %3310 = vmatpush2.bf16.msra.mxu0 0
        %3311 = vmatprep.subr.bf16.mxu0 0
        %3312 = vmatpush2.bf16.msra.mxu0 0
        %3313 = vmatprep.subr.bf16.mxu0 0
        %3314 = vmatpush2.bf16.msra.mxu0 0
        %3315 = vmatprep.mubr.bf16.mxu0 0
        %3316 = vmatmul.mubr.bf16.gmra.mxu0 %v3281
        %v3317 = vpop.f32.mrf.mxu0
        %v3318 = vadd.f32 %v3266, %v3317
        %v3319 = vpop.f32.mrf.mxu0
        %v3320 = vpop.f32.mrf.mxu0
        %v3321 = vpop.f32.mrf.mxu0
        %3322 = vdwg.mxu0
        %v3323 = vmax.f32 %v3318, 0.0
        %v3324 = vpack.c.bf16 %v3323, %v3323
        %s3325 = scalar_lea.vmem %s8, 32
        %v3326 = vld [vmem:[%s3325] sm:$0xf]
        %v3327 = vld [vmem:[%s3325 + $0x4] sm:$0xf]
        %v3328 = vld [vmem:[%s3325 + $0x8] sm:$0xf]
        %v3329 = vld [vmem:[%s3325 + $0xc] sm:$0xf]
        %v3330 = vld [vmem:[%s3325 + $0x10] sm:$0xf]
        %v3331 = vld [vmem:[%s3325 + $0x14] sm:$0xf]
        %v3332 = vld [vmem:[%s3325 + $0x18] sm:$0xf]
        %v3333 = vld [vmem:[%s3325 + $0x1c] sm:$0xf]
        %s3334 = scalar_lea.vmem %s9, 1
        %v3335 = vld [vmem:[%s3334] sm:$0x1]
        %v3337 = vlaneseq
        %v3338 = vshrl.u32 %v3337, 7
        %v3339 = vsub.s32 0, %v3338
        %v3340 = vrot.slane %v3335, %v3339
        %v3350 = vunpack.c.l.b16 %v3326
        %v3351 = vunpack.c.l.b16 %v3327
        %v3352 = vunpack.c.l.b16 %v3328
        %v3353 = vunpack.c.l.b16 %v3329
        %v3354 = vunpack.c.l.b16 %v3330
        %v3355 = vunpack.c.l.b16 %v3331
        %v3356 = vunpack.c.l.b16 %v3332
        %v3357 = vunpack.c.l.b16 %v3333
        %v3358 = vpack.c.b16 %v3351, %v3350
        %v3359 = vpack.c.b16 %v3353, %v3352
        %v3360 = vpack.c.b16 %v3355, %v3354
        %v3361 = vpack.c.b16 %v3357, %v3356
        %v3367 = vsel %vm1877, %v3324, 0
        %3369 = vmatprep.subr.bf16.mxu0 0
        %3370 = vmatpush1.bf16.msra.mxu0 0
        %3371 = vmatprep.subr.bf16.mxu0 0
        %3372 = vmatpush1.bf16.msra.mxu0 0
        %3373 = vmatprep.subr.bf16.mxu0 0
        %3374 = vmatpush1.bf16.msra.mxu0 0
        %3375 = vmatprep.subr.bf16.mxu0 0
        %3376 = vmatpush1.bf16.msra.mxu0 0
        %3377 = vmatprep.subr.bf16.mxu0 0
        %3378 = vmatpush1.bf16.msra.mxu0 %v3361
        %3379 = vmatprep.subr.bf16.mxu0 0
        %3380 = vmatpush1.bf16.msra.mxu0 %v3360
        %3381 = vmatprep.subr.bf16.mxu0 0
        %3382 = vmatpush1.bf16.msra.mxu0 %v3359
        %3383 = vmatprep.subr.bf16.mxu0 0
        %3384 = vmatpush1.bf16.msra.mxu0 %v3358
        %3385 = vmatprep.subr.bf16.mxu0 0
        %3386 = vmatpush2.bf16.msra.mxu0 0
        %3387 = vmatprep.subr.bf16.mxu0 0
        %3388 = vmatpush2.bf16.msra.mxu0 0
        %3389 = vmatprep.subr.bf16.mxu0 0
        %3390 = vmatpush2.bf16.msra.mxu0 0
        %3391 = vmatprep.subr.bf16.mxu0 0
        %3392 = vmatpush2.bf16.msra.mxu0 0
        %3393 = vmatprep.subr.bf16.mxu0 0
        %3394 = vmatpush2.bf16.msra.mxu0 0
        %3395 = vmatprep.subr.bf16.mxu0 0
        %3396 = vmatpush2.bf16.msra.mxu0 0
        %3397 = vmatprep.subr.bf16.mxu0 0
        %3398 = vmatpush2.bf16.msra.mxu0 0
        %3399 = vmatprep.subr.bf16.mxu0 0
        %3400 = vmatpush2.bf16.msra.mxu0 0
        %3401 = vmatprep.mubr.bf16.mxu0 0
        %3402 = vmatmul.mubr.bf16.gmra.mxu0 %v3367
        %v3403 = vpop.f32.mrf.mxu0
        %v3404 = vadd.f32 %v3340, %v3403
        %v3405 = vpop.f32.mrf.mxu0
        %v3406 = vpop.f32.mrf.mxu0
        %v3407 = vpop.f32.mrf.mxu0
        %3408 = vdwg.mxu0
        %v3409 = vadd.f32 %v3253, %v3404
        %s3410 = scalar_lea.vmem %s12, 1
        %v3411 = vld [vmem:[%s3410] sm:$0x1]
        %s3412 = scalar_lea.vmem %s13, 1
        %v3413 = vld [vmem:[%s3412] sm:$0x1]
        %v3414 = vsel %vm490, %v3409, 0.0
        %3415 = vadd.xlane.f32.xlu0 %v3414
        %v3416 = vpop.xlane.xlu0 %3415
        %v3417 = vmul.f32 %v3416, %v1744
        %v3418 = vsub.f32 %v3409, %v3417
        %v3419 = vmul.f32 %v3418, %v3418
        %v3420 = vsel %vm490, %v3419, 0.0
        %3421 = vadd.xlane.f32.xlu0 %v3420
        %v3422 = vpop.xlane.xlu0 %3421
        %v3423 = vmul.f32 %v3422, %v1744
        %v3424 = vadd.f32 %v3423, 1e-05
        %v3425 = vrsqrt.pop %v3424
        %v3426 = vmul.f32 %v3418, %v3425
        %v3428 = vlaneseq
        %v3429 = vshrl.u32 %v3428, 7
        %v3430 = vsub.s32 0, %v3429
        %v3431 = vrot.slane %v3411, %v3430
        %v3433 = vmul.f32 %v3426, %v3431
        %v3435 = vlaneseq
        %v3436 = vshrl.u32 %v3435, 7
        %v3437 = vsub.s32 0, %v3436
        %v3438 = vrot.slane %v3413, %v3437
        %v3440 = vadd.f32 %v3433, %v3438
        %v3441 = vsel %vm490, %v3440, -inf
        %v3442 = vrot.slane %v3441, 4
        %v3443 = vmax.f32 %v3441, %v3442
        %v3444 = vrot.slane %v3443, 2
        %v3445 = vmax.f32 %v3443, %v3444
        %v3446 = vrot.slane %v3445, 1
        %v3447 = vmax.f32 %v3445, %v3446
        %vm3448 = vcmask 253952
        %3449 = vst.msk [vmem:[%s457] sm:$0x1] %vm3448, %v3447
        %s3450 = sand.u32 %s335, 1
        %s3451 = scalar_lea.sflag [#allocation3], %s3450
        %s3452 = sand.u32 %s335, 1
        %s3453 = scalar_lea.vmem [#allocation2], %s3452
        // Predicated region
        $region77: #{transformer_model_feature.1} parent=75 // pred_check
          %p3454 = pneg %p345
        $region78: #{transformer_model_feature.1} parent=75 // pred_check_branch
          %3456 = sbr.rel (%p3454) target = $region80
        $region79: #{transformer_model_feature.1} parent=75 // pred_region
          %s3458 = ssub.s32 16, 16
          %3459 = vsyncadd %s3451, %s3458
          %s3460 = smul.addr %s28, 16
          %s3461 = scalar_lea.hbm %s14, %s3460
          %s3463 = sshll.u32 %s3453, 4
          %s3464 = int_to_ptr.vmem [resolvable:$true] %s3463
          %3466 = dma.vmem_to_hbm [thread:$0]  %s3464, 16, %s3461, %s3451
        $region80: #{transformer_model_feature.1} parent=75 // pred_fallthru
          _
      $region76: #{transformer_model_feature.1} parent=5 // pred_fallthru
        _
      %p3467 = scmp.le.s32.totalorder 2, %s23
      // Predicated region
      $region81: #{transformer_model_feature.1} parent=5 // pred_check
        %p3468 = pneg %p3467
      $region82: #{transformer_model_feature.1} parent=5 // pred_check_branch
        %3470 = sbr.rel (%p3468) target = $region84
      $region83: #{transformer_model_feature.1} parent=5 // pred_region
        %s3471 = ssub.s32 %s23, 2
        // Predicated region
        $region85: #{transformer_model_feature.1} parent=83 // pred_check
          %p3472 = pneg %p351
        $region86: #{transformer_model_feature.1} parent=83 // pred_check_branch
          %3474 = sbr.rel (%p3472) target = $region88
        $region87: #{transformer_model_feature.1} parent=83 // pred_region
          %s3475 = sand.u32 %s336, 1
          %s3476 = scalar_lea.sflag [#allocation3], %s3475
          %s3477 = sand.u32 %s336, 1
          %s3478 = scalar_lea.vmem [#allocation2], %s3477
          %3479 = dma.done %s3476, 16
        $region88: #{transformer_model_feature.1} parent=83 // pred_fallthru
          _
      $region84: #{transformer_model_feature.1} parent=5 // pred_fallthru
        _
    $region6: #{transformer_model_feature.1} parent=1 // loop_footer
      %s27 = sadd.s32 1, %s23
    $region7: #{transformer_model_feature.1} parent=1 // loop_footer_branch
      %22 = sbr.rel target = $region3
    $region8: #{transformer_model_feature.1} parent=1 // loop_exit
      _
    %3480 = vsyncpa [#allocation3], 1
    %s3481 = scalar_lea.sflag [#allocation3], 1
    %3482 = vsyncpa %s3481, 1

</llo_original>
